<compile_context>
chip_gen: v7x
topology: tpu7x:2x2x1
jax: 0.10.0
libtpu: 0.0.40
codegen_flags: <defaults>
</compile_context>

<pallas_src>
import jax
import jax.numpy as jnp
from jax.experimental import pallas as pl
from jax.experimental.pallas import tpu as pltpu

Z_DIM = 100
Z_PAD = 128                 # 100 padded to one full lane group
OUT_DIM = 28 * 28           # 784
OUT_PAD = 896               # 7 * 128, lane-dense output
MXU_M = 256                 # full MXU M fill on v6e/v7x; multiple of v5e's 128


def _round_up(x, m):
    return ((x + m - 1) // m) * m


# --------------------------------------------------------------------------
# Kernel: the whole 4-layer MLP on one (bt, *) batch tile, weights resident.
# --------------------------------------------------------------------------
def generator_kernel(z_ref,
                     w1_ref, b1_ref,
                     w2_ref, b2_ref,
                     w3_ref, b3_ref,
                     w4_ref, b4_ref,
                     o_ref):
    # Layer 1: Linear(128(pad of 100) -> 256) + ReLU
    h = jnp.dot(z_ref[...], w1_ref[...], preferred_element_type=jnp.float32)
    h = jnp.maximum(h + b1_ref[...], 0.0).astype(jnp.bfloat16)
    # Layer 2: Linear(256 -> 512) + ReLU
    h = jnp.dot(h, w2_ref[...], preferred_element_type=jnp.float32)
    h = jnp.maximum(h + b2_ref[...], 0.0).astype(jnp.bfloat16)
    # Layer 3: Linear(512 -> 1024) + ReLU
    h = jnp.dot(h, w3_ref[...], preferred_element_type=jnp.float32)
    h = jnp.maximum(h + b3_ref[...], 0.0).astype(jnp.bfloat16)
    # Layer 4: Linear(1024 -> 896(pad of 784)) + Tanh, stored as bf16
    h = jnp.dot(h, w4_ref[...], preferred_element_type=jnp.float32)
    o_ref[...] = jnp.tanh(h + b4_ref[...]).astype(jnp.bfloat16)


# --------------------------------------------------------------------------
# One-time parameter packing: pad to lane-dense shapes, cast weights to bf16.
# --------------------------------------------------------------------------
def pack_params(params):
    """params: [(w,b)]*4 in f32, w:(fan_in,fan_out), b:(1,fan_out).

    Returns the flat tuple passed to the kernel every call:
      (w1b, b1, w2b, b2, w3b, b3, w4b, b4p)
    with w1 padded 100->128 on K, w4/b4 padded 784->896 on N, weights bf16,
    biases f32 (added to the f32 accumulator in-kernel).
    """
    (w1, b1), (w2, b2), (w3, b3), (w4, b4) = params
    w1_b = jnp.pad(w1, ((0, Z_PAD - Z_DIM), (0, 0))).astype(jnp.bfloat16)
    w2_b = w2.astype(jnp.bfloat16)
    w3_b = w3.astype(jnp.bfloat16)
    w4_b = jnp.pad(w4, ((0, 0), (0, OUT_PAD - OUT_DIM))).astype(jnp.bfloat16)
    b4_p = jnp.pad(b4, ((0, 0), (0, OUT_PAD - OUT_DIM)))
    return (w1_b, b1, w2_b, b2, w3_b, b3, w4_b, b4_p)


# --------------------------------------------------------------------------
# Tiling heuristic.
# --------------------------------------------------------------------------
def _choose_tiling(B, batch_tile):
    """Pick (batch_tile, padded_batch, n_steps)."""
    batch_tile = max(8, _round_up(batch_tile, 8))
    b8 = _round_up(B, 8)
    if b8 <= batch_tile:
        # Small batch: a single grid step.  Splitting would duplicate the
        # resident-weight DMA on v7x megacore and only add a ~600-cycle grid
        # step on single-TC v5e/v6e.
        return b8, b8, 1
    # Large batch: tile at MXU-M granularity; for ragged batches fall back to
    # a 128-row tile when that keeps padded/real work <= ~1.1.
    cands = sorted({batch_tile, MXU_M, 128}, reverse=True)
    best_key, best = None, None
    for bt in cands:
        bt = _round_up(bt, 8)
        bp = _round_up(B, bt)
        key = (bp / B > 1.10, bp, -bt)   # low padding, then fewer padded rows, then bigger tile
        if best_key is None or key < best_key:
            best_key, best = key, (bt, bp)
    bt, bp = best
    return bt, bp, bp // bt


# --------------------------------------------------------------------------
# Wrapper: pad z, launch kernel, strip padding.  Intended to run under jit.
# --------------------------------------------------------------------------
def generator_forward(z, packed_params, *, batch_tile=256):
    """z: (B, 100) float32, packed_params from pack_params -> (B,1,28,28) f32."""
    w1_b, b1, w2_b, b2, w3_b, b3, w4_b, b4_p = packed_params
    B, zdim = z.shape
    assert zdim == Z_DIM

    bt, B_pad, n_steps = _choose_tiling(B, batch_tile)

    # Per-call input prep: single fused pad + bf16 cast of z only.
    z_p = jnp.pad(z, ((0, B_pad - B), (0, Z_PAD - Z_DIM))).astype(jnp.bfloat16)

    # Weights/biases: full block, constant index -> DMA'd once, VMEM resident.
    full = lambda shape: pl.BlockSpec(shape, lambda i: (0, 0))

    vmem_limit = (64 if bt >= 512 else 32) * 1024 * 1024

    out_flat = pl.pallas_call(
        generator_kernel,
        out_shape=jax.ShapeDtypeStruct((B_pad, OUT_PAD), jnp.bfloat16),
        grid_spec=pltpu.PrefetchScalarGridSpec(
            num_scalar_prefetch=0,
            grid=(n_steps,),
            in_specs=[
                pl.BlockSpec((bt, Z_PAD), lambda i: (i, 0)),   # z tile (streams)
                full(w1_b.shape), full(b1.shape),
                full(w2_b.shape), full(b2.shape),
                full(w3_b.shape), full(b3.shape),
                full(w4_b.shape), full(b4_p.shape),
            ],
            out_specs=pl.BlockSpec((bt, OUT_PAD), lambda i: (i, 0)),
        ),
        compiler_params=pltpu.CompilerParams(
            dimension_semantics=("parallel",),
            vmem_limit_bytes=vmem_limit,
        ),
    )(z_p, w1_b, b1, w2_b, b2, w3_b, b3, w4_b, b4_p)

    # Drop batch/lane padding, back to f32, NCHW view (torch .view(-1,1,28,28)).
    return out_flat[:B, :OUT_DIM].astype(jnp.float32).reshape(B, 1, 28, 28)


# --------------------------------------------------------------------------
# Init + references.
# --------------------------------------------------------------------------
def init_params(key):
    """Deterministic synthetic init for the 4 Linear layers (f32).

    Weights stored (in_features, out_features); biases (1, out_features) so
    they broadcast over the batch/sublane axis inside the kernel.
    """
    dims = [(100, 256), (256, 512), (512, 1024), (1024, 28 * 28)]
    params = []
    for (fan_in, fan_out) in dims:
        key, kw, kb = jax.random.split(key, 3)
        scale = 1.0 / jnp.sqrt(jnp.float32(fan_in))
        w = jax.random.normal(kw, (fan_in, fan_out), jnp.float32) * scale
        b = jax.random.normal(kb, (1, fan_out), jnp.float32) * scale
        params.append((w, b))
    return params


def reference_forward_f32(z, params):
    """Full-precision plain-JAX reference."""
    (w1, b1), (w2, b2), (w3, b3), (w4, b4) = params
    h = jnp.maximum(z @ w1 + b1, 0.0)
    h = jnp.maximum(h @ w2 + b2, 0.0)
    h = jnp.maximum(h @ w3 + b3, 0.0)
    h = jnp.tanh(h @ w4 + b4)
    return h.reshape(-1, 1, 28, 28)


def reference_forward_bf16(z, params):
    """Plain-JAX reference mirroring the kernel's bf16/f32 mixed precision,
    including the bf16 output store."""
    (w1, b1), (w2, b2), (w3, b3), (w4, b4) = params
    bf = jnp.bfloat16
    h = z.astype(bf)
    h = jnp.maximum(jnp.dot(h, w1.astype(bf), preferred_element_type=jnp.float32) + b1, 0.0).astype(bf)
    h = jnp.maximum(jnp.dot(h, w2.astype(bf), preferred_element_type=jnp.float32) + b2, 0.0).astype(bf)
    h = jnp.maximum(jnp.dot(h, w3.astype(bf), preferred_element_type=jnp.float32) + b3, 0.0).astype(bf)
    h = jnp.tanh(jnp.dot(h, w4.astype(bf), preferred_element_type=jnp.float32) + b4)
    h = h.astype(bf).astype(jnp.float32)
    return h.reshape(-1, 1, 28, 28)


if __name__ == "__main__":
    key = jax.random.PRNGKey(0)
    key, kz = jax.random.split(key)

    B = 16                                    # small batch -> single grid step
    z = jax.random.normal(kz, (B, 100), jnp.float32)
    params = init_params(key)
    packed = pack_params(params)              # one-time pad + bf16 cast

    fwd = jax.jit(generator_forward, static_argnames=("batch_tile",))
    out = jax.block_until_ready(fwd(z, packed))

    assert out.shape == (B, 1, 28, 28), out.shape

    # exact-path check vs a reference with the same bf16/f32 mixed precision
    ref_bf16 = reference_forward_bf16(z, params)
    assert jnp.allclose(out, ref_bf16, atol=5e-3, rtol=5e-3), "mismatch vs bf16 reference"

    # sanity check vs the full-f32 reference (loose: bf16 operand/output rounding)
    ref_f32 = reference_forward_f32(z, params)
    assert jnp.allclose(out, ref_f32, atol=5e-2, rtol=5e-2), "mismatch vs f32 reference"

    print("KERNEL_OK")
</pallas_src>

<mosaic_0001>
module attributes {stable_mosaic.version = 11 : i64} {
  func.func @generator_kernel(%arg0: i32, %arg1: memref<16x128xbf16, #tpu.memory_space<vmem>>, %arg2: memref<128x256xbf16, #tpu.memory_space<vmem>>, %arg3: memref<1x256xf32, #tpu.memory_space<vmem>>, %arg4: memref<256x512xbf16, #tpu.memory_space<vmem>>, %arg5: memref<1x512xf32, #tpu.memory_space<vmem>>, %arg6: memref<512x1024xbf16, #tpu.memory_space<vmem>>, %arg7: memref<1x1024xf32, #tpu.memory_space<vmem>>, %arg8: memref<1024x896xbf16, #tpu.memory_space<vmem>>, %arg9: memref<1x896xf32, #tpu.memory_space<vmem>>, %arg10: memref<16x896xbf16, #tpu.memory_space<vmem>>) attributes {dimension_semantics = [#tpu.dimension_semantics<parallel>], iteration_bounds = array<i64: 1>, scalar_prefetch = 0 : i64, scratch_operands = 0 : i64, tpu.core_type = #tpu.core_type<tc>, window_params = [{transform_indices = @transform_0, window_bounds = array<i64: 16, 128>}, {pipeline_mode = #tpu.pipeline_mode<synchronous>, transform_indices = @transform_1, window_bounds = array<i64: 128, 256>}, {pipeline_mode = #tpu.pipeline_mode<synchronous>, transform_indices = @transform_2, window_bounds = array<i64: 1, 256>}, {pipeline_mode = #tpu.pipeline_mode<synchronous>, transform_indices = @transform_3, window_bounds = array<i64: 256, 512>}, {pipeline_mode = #tpu.pipeline_mode<synchronous>, transform_indices = @transform_4, window_bounds = array<i64: 1, 512>}, {pipeline_mode = #tpu.pipeline_mode<synchronous>, transform_indices = @transform_5, window_bounds = array<i64: 512, 1024>}, {pipeline_mode = #tpu.pipeline_mode<synchronous>, transform_indices = @transform_6, window_bounds = array<i64: 1, 1024>}, {pipeline_mode = #tpu.pipeline_mode<synchronous>, transform_indices = @transform_7, window_bounds = array<i64: 1024, 896>}, {pipeline_mode = #tpu.pipeline_mode<synchronous>, transform_indices = @transform_8, window_bounds = array<i64: 1, 896>}, {transform_indices = @transform_9, window_bounds = array<i64: 16, 896>}]} {
    %c0 = arith.constant 0 : index
    %c0_0 = arith.constant 0 : index
    %0 = vector.load %arg1[%c0, %c0_0] : memref<16x128xbf16, #tpu.memory_space<vmem>>, vector<16x128xbf16>
    %c0_1 = arith.constant 0 : index
    %c0_2 = arith.constant 0 : index
    %1 = vector.load %arg2[%c0_1, %c0_2] : memref<128x256xbf16, #tpu.memory_space<vmem>>, vector<128x256xbf16>
    %cst = arith.constant dense<0.000000e+00> : vector<16x256xf32>
    %2 = tpu.matmul %0, %1, %cst {dimension_numbers = #tpu.dot_dimension_numbers<[1], [0], [0], [1], [0, 0, 1, 1], [], []>} : vector<16x128xbf16>, vector<128x256xbf16>, vector<16x256xf32> -> vector<16x256xf32>
    %c0_3 = arith.constant 0 : index
    %c0_4 = arith.constant 0 : index
    %3 = vector.load %arg3[%c0_3, %c0_4] : memref<1x256xf32, #tpu.memory_space<vmem>>, vector<1x256xf32>
    %4 = vector.broadcast %3 : vector<1x256xf32> to vector<16x256xf32>
    %5 = arith.addf %2, %4 : vector<16x256xf32>
    %cst_5 = arith.constant 0.000000e+00 : f32
    %6 = vector.broadcast %cst_5 : f32 to vector<16x256xf32>
    %7 = arith.maximumf %5, %6 : vector<16x256xf32>
    %8 = arith.truncf %7 : vector<16x256xf32> to vector<16x256xbf16>
    %c0_6 = arith.constant 0 : index
    %c0_7 = arith.constant 0 : index
    %9 = vector.load %arg4[%c0_6, %c0_7] : memref<256x512xbf16, #tpu.memory_space<vmem>>, vector<256x512xbf16>
    %cst_8 = arith.constant dense<0.000000e+00> : vector<16x512xf32>
    %10 = tpu.matmul %8, %9, %cst_8 {dimension_numbers = #tpu.dot_dimension_numbers<[1], [0], [0], [1], [0, 0, 1, 1], [], []>} : vector<16x256xbf16>, vector<256x512xbf16>, vector<16x512xf32> -> vector<16x512xf32>
    %c0_9 = arith.constant 0 : index
    %c0_10 = arith.constant 0 : index
    %11 = vector.load %arg5[%c0_9, %c0_10] : memref<1x512xf32, #tpu.memory_space<vmem>>, vector<1x512xf32>
    %12 = vector.broadcast %11 : vector<1x512xf32> to vector<16x512xf32>
    %13 = arith.addf %10, %12 : vector<16x512xf32>
    %cst_11 = arith.constant 0.000000e+00 : f32
    %14 = vector.broadcast %cst_11 : f32 to vector<16x512xf32>
    %15 = arith.maximumf %13, %14 : vector<16x512xf32>
    %16 = arith.truncf %15 : vector<16x512xf32> to vector<16x512xbf16>
    %c0_12 = arith.constant 0 : index
    %c0_13 = arith.constant 0 : index
    %17 = vector.load %arg6[%c0_12, %c0_13] : memref<512x1024xbf16, #tpu.memory_space<vmem>>, vector<512x1024xbf16>
    %cst_14 = arith.constant dense<0.000000e+00> : vector<16x1024xf32>
    %18 = tpu.matmul %16, %17, %cst_14 {dimension_numbers = #tpu.dot_dimension_numbers<[1], [0], [0], [1], [0, 0, 1, 1], [], []>} : vector<16x512xbf16>, vector<512x1024xbf16>, vector<16x1024xf32> -> vector<16x1024xf32>
    %c0_15 = arith.constant 0 : index
    %c0_16 = arith.constant 0 : index
    %19 = vector.load %arg7[%c0_15, %c0_16] : memref<1x1024xf32, #tpu.memory_space<vmem>>, vector<1x1024xf32>
    %20 = vector.broadcast %19 : vector<1x1024xf32> to vector<16x1024xf32>
    %21 = arith.addf %18, %20 : vector<16x1024xf32>
    %cst_17 = arith.constant 0.000000e+00 : f32
    %22 = vector.broadcast %cst_17 : f32 to vector<16x1024xf32>
    %23 = arith.maximumf %21, %22 : vector<16x1024xf32>
    %24 = arith.truncf %23 : vector<16x1024xf32> to vector<16x1024xbf16>
    %c0_18 = arith.constant 0 : index
    %c0_19 = arith.constant 0 : index
    %25 = vector.load %arg8[%c0_18, %c0_19] : memref<1024x896xbf16, #tpu.memory_space<vmem>>, vector<1024x896xbf16>
    %cst_20 = arith.constant dense<0.000000e+00> : vector<16x896xf32>
    %26 = tpu.matmul %24, %25, %cst_20 {dimension_numbers = #tpu.dot_dimension_numbers<[1], [0], [0], [1], [0, 0, 1, 1], [], []>} : vector<16x1024xbf16>, vector<1024x896xbf16>, vector<16x896xf32> -> vector<16x896xf32>
    %c0_21 = arith.constant 0 : index
    %c0_22 = arith.constant 0 : index
    %27 = vector.load %arg9[%c0_21, %c0_22] : memref<1x896xf32, #tpu.memory_space<vmem>>, vector<1x896xf32>
    %28 = vector.broadcast %27 : vector<1x896xf32> to vector<16x896xf32>
    %29 = arith.addf %26, %28 : vector<16x896xf32>
    %30 = math.tanh %29 : vector<16x896xf32>
    %31 = arith.truncf %30 : vector<16x896xf32> to vector<16x896xbf16>
    %c0_23 = arith.constant 0 : index
    %c0_24 = arith.constant 0 : index
    %32 = vector.load %arg10[%c0_23, %c0_24] : memref<16x896xbf16, #tpu.memory_space<vmem>>, vector<16x896xbf16>
    tpu.vector_store %arg10[%c0_23, %c0_24], %31 {strides = array<i32>} : memref<16x896xbf16, #tpu.memory_space<vmem>>, vector<16x896xbf16>,
    return
  }
  func.func @transform_0(%arg0: i32) -> (i32, i32) {
    %c0_i32 = arith.constant 0 : i32
    %c0_i32_0 = arith.constant 0 : i32
    return %arg0, %c0_i32 : i32, i32
  }
  func.func @transform_1(%arg0: i32) -> (i32, i32) {
    %c0_i32 = arith.constant 0 : i32
    %c0_i32_0 = arith.constant 0 : i32
    %c0_i32_1 = arith.constant 0 : i32
    return %c0_i32, %c0_i32_0 : i32, i32
  }
  func.func @transform_2(%arg0: i32) -> (i32, i32) {
    %c0_i32 = arith.constant 0 : i32
    %c0_i32_0 = arith.constant 0 : i32
    %c0_i32_1 = arith.constant 0 : i32
    return %c0_i32, %c0_i32_0 : i32, i32
  }
  func.func @transform_3(%arg0: i32) -> (i32, i32) {
    %c0_i32 = arith.constant 0 : i32
    %c0_i32_0 = arith.constant 0 : i32
    %c0_i32_1 = arith.constant 0 : i32
    return %c0_i32, %c0_i32_0 : i32, i32
  }
  func.func @transform_4(%arg0: i32) -> (i32, i32) {
    %c0_i32 = arith.constant 0 : i32
    %c0_i32_0 = arith.constant 0 : i32
    %c0_i32_1 = arith.constant 0 : i32
    return %c0_i32, %c0_i32_0 : i32, i32
  }
  func.func @transform_5(%arg0: i32) -> (i32, i32) {
    %c0_i32 = arith.constant 0 : i32
    %c0_i32_0 = arith.constant 0 : i32
    %c0_i32_1 = arith.constant 0 : i32
    return %c0_i32, %c0_i32_0 : i32, i32
  }
  func.func @transform_6(%arg0: i32) -> (i32, i32) {
    %c0_i32 = arith.constant 0 : i32
    %c0_i32_0 = arith.constant 0 : i32
    %c0_i32_1 = arith.constant 0 : i32
    return %c0_i32, %c0_i32_0 : i32, i32
  }
  func.func @transform_7(%arg0: i32) -> (i32, i32) {
    %c0_i32 = arith.constant 0 : i32
    %c0_i32_0 = arith.constant 0 : i32
    %c0_i32_1 = arith.constant 0 : i32
    return %c0_i32, %c0_i32_0 : i32, i32
  }
  func.func @transform_8(%arg0: i32) -> (i32, i32) {
    %c0_i32 = arith.constant 0 : i32
    %c0_i32_0 = arith.constant 0 : i32
    %c0_i32_1 = arith.constant 0 : i32
    return %c0_i32, %c0_i32_0 : i32, i32
  }
  func.func @transform_9(%arg0: i32) -> (i32, i32) {
    %c0_i32 = arith.constant 0 : i32
    %c0_i32_0 = arith.constant 0 : i32
    return %arg0, %c0_i32 : i32, i32
  }
}

</mosaic_0001>

<llo_original>
// kernel: generator_forward.1
$region0: #{generator_forward.1}
  #allocation0 [shape = 'u32[]', space=smem, size = 0x4, offset = 0x4, fixed_abs, tag = 'smem constant byte address 0x4 - core index']
  #allocation1 [shape = 'u32[144,128]{1,0:T(1,128)}', space=vmem, size = 0x12000, scoped, tag = 'internal scratch']
  %s0 = inlined_call_operand.vmem [shape: bf16[16,128], index: 0, kind: input, shape index: {}]
  %s1 = inlined_call_operand.hbm [shape: bf16[128,256], index: 1, kind: input, shape index: {}]
  %s2 = inlined_call_operand.hbm [shape: f32[1,256], index: 2, kind: input, shape index: {}]
  %s3 = inlined_call_operand.hbm [shape: bf16[256,512], index: 3, kind: input, shape index: {}]
  %s4 = inlined_call_operand.hbm [shape: f32[1,512], index: 4, kind: input, shape index: {}]
  %s5 = inlined_call_operand.hbm [shape: bf16[512,1024], index: 5, kind: input, shape index: {}]
  %s6 = inlined_call_operand.hbm [shape: f32[1,1024], index: 6, kind: input, shape index: {}]
  %s7 = inlined_call_operand.hbm [shape: bf16[1024,896], index: 7, kind: input, shape index: {}]
  %s8 = inlined_call_operand.hbm [shape: f32[1,896], index: 8, kind: input, shape index: {}]
  %s9 = inlined_call_operand.vmem [shape: bf16[16,896], index: 9, kind: output, shape index: {}]
  %s10 = sld [smem:[#allocation0]]
  $region78: #{generator_forward.1} parent=0
    _
  %s12 = ssub.s32 1, %s10
  %s13 = scalar_select 0, %s12, %s10
  $region1: #{generator_forward.1} parent=0
    #allocation2 [shape = 'u8[65536]{0}', space=vmem, size = 0x10000, scoped, tag = 'input window, operand 1, single buffered']
    #allocation3 [shape = 's32[1]{0}', space=sflag, size = 0x4, scoped, tag = 'scoped memory for generator_forward.1']
    #allocation4 [shape = 'u8[1024]{0}', space=vmem, size = 0x400, scoped, tag = 'input window, operand 2, single buffered']
    #allocation5 [shape = 's32[1]{0}', space=sflag, size = 0x4, scoped, tag = 'scoped memory for generator_forward.1']
    #allocation6 [shape = 'u8[262144]{0}', space=vmem, size = 0x40000, scoped, tag = 'input window, operand 3, single buffered']
    #allocation7 [shape = 'u8[2048]{0}', space=vmem, size = 0x800, scoped, tag = 'input window, operand 4, single buffered']
    #allocation8 [shape = 's32[1]{0}', space=sflag, size = 0x4, scoped, tag = 'scoped memory for generator_forward.1']
    #allocation9 [shape = 'u8[1048576]{0}', space=vmem, size = 0x100000, scoped, tag = 'input window, operand 5, single buffered']
    #allocation10 [shape = 'u8[4096]{0}', space=vmem, size = 0x1000, scoped, tag = 'input window, operand 6, single buffered']
    #allocation11 [shape = 's32[1]{0}', space=sflag, size = 0x4, scoped, tag = 'scoped memory for generator_forward.1']
    #allocation12 [shape = 'u8[1835008]{0}', space=vmem, size = 0x1c0000, scoped, tag = 'input window, operand 7, single buffered']
    #allocation13 [shape = 'u8[3584]{0}', space=vmem, size = 0x1000, scoped, tag = 'input window, operand 8, single buffered']
    #allocation14 [shape = 's32[1]{0}', space=sflag, size = 0x4, scoped, tag = 'scoped memory for generator_forward.1']
    %14 = vsyncpa [#allocation3], 0
    %15 = vsyncpa [#allocation5], 0
    %16 = vsyncpa [#allocation8], 0
    %17 = vsyncpa [#allocation11], 0
    %18 = vsyncpa [#allocation14], 0
    // Predicated region
    $region2: #{generator_forward.1} parent=1 // pred_check
      _
    $region3: #{generator_forward.1} parent=1 // pred_check_branch
      %20 = sbr.rel (0) target = $region5
    $region4: #{generator_forward.1} parent=1 // pred_region
      _
    $region5: #{generator_forward.1} parent=1 // pred_fallthru
      _
    // Predicated region
    $region6: #{generator_forward.1} parent=1 // pred_check
      _
    $region7: #{generator_forward.1} parent=1 // pred_check_branch
      %22 = sbr.rel (0) target = $region9
    $region8: #{generator_forward.1} parent=1 // pred_region
      %s24 = ssub.s32 2048, 2048
      %25 = vsyncadd [#allocation3], %s24
      %s26 = sshll.u32 [#allocation2], 4
      %s27 = int_to_ptr.vmem [resolvable:$true] %s26
      %32 = dma.hbm_to_vmem [thread:$0]  %s1, 2048, %s27, [#allocation3], 128, 128, 8
    $region9: #{generator_forward.1} parent=1 // pred_fallthru
      _
    // Predicated region
    $region10: #{generator_forward.1} parent=1 // pred_check
      _
    $region11: #{generator_forward.1} parent=1 // pred_check_branch
      %34 = sbr.rel (0) target = $region13
    $region12: #{generator_forward.1} parent=1 // pred_region
      %s36 = ssub.s32 32, 32
      %37 = vsyncadd [#allocation5], %s36
      %s39 = sshll.u32 [#allocation4], 4
      %s40 = int_to_ptr.vmem [resolvable:$true] %s39
      %42 = dma.hbm_to_vmem [thread:$0]  %s2, 32, %s40, [#allocation5]
    $region13: #{generator_forward.1} parent=1 // pred_fallthru
      _
    // Predicated region
    $region14: #{generator_forward.1} parent=1 // pred_check
      _
    $region15: #{generator_forward.1} parent=1 // pred_check_branch
      %44 = sbr.rel (0) target = $region17
    $region16: #{generator_forward.1} parent=1 // pred_region
      %s46 = ssub.s32 8192, 8192
      %47 = vsyncadd [#allocation5], %s46
      %s48 = sshll.u32 [#allocation6], 4
      %s49 = int_to_ptr.vmem [resolvable:$true] %s48
      %54 = dma.hbm_to_vmem [thread:$0]  %s3, 8192, %s49, [#allocation5], 256, 256, 16
    $region17: #{generator_forward.1} parent=1 // pred_fallthru
      _
    // Predicated region
    $region18: #{generator_forward.1} parent=1 // pred_check
      _
    $region19: #{generator_forward.1} parent=1 // pred_check_branch
      %56 = sbr.rel (0) target = $region21
    $region20: #{generator_forward.1} parent=1 // pred_region
      %s58 = ssub.s32 64, 64
      %59 = vsyncadd [#allocation8], %s58
      %s61 = sshll.u32 [#allocation7], 4
      %s62 = int_to_ptr.vmem [resolvable:$true] %s61
      %64 = dma.hbm_to_vmem [thread:$0]  %s4, 64, %s62, [#allocation8]
    $region21: #{generator_forward.1} parent=1 // pred_fallthru
      _
    // Predicated region
    $region22: #{generator_forward.1} parent=1 // pred_check
      _
    $region23: #{generator_forward.1} parent=1 // pred_check_branch
      %66 = sbr.rel (0) target = $region25
    $region24: #{generator_forward.1} parent=1 // pred_region
      %s68 = ssub.s32 32768, 32768
      %69 = vsyncadd [#allocation8], %s68
      %s70 = sshll.u32 [#allocation9], 4
      %s71 = int_to_ptr.vmem [resolvable:$true] %s70
      %76 = dma.hbm_to_vmem [thread:$0]  %s5, 32768, %s71, [#allocation8], 512, 512, 32
    $region25: #{generator_forward.1} parent=1 // pred_fallthru
      _
    // Predicated region
    $region26: #{generator_forward.1} parent=1 // pred_check
      _
    $region27: #{generator_forward.1} parent=1 // pred_check_branch
      %78 = sbr.rel (0) target = $region29
    $region28: #{generator_forward.1} parent=1 // pred_region
      %s80 = ssub.s32 128, 128
      %81 = vsyncadd [#allocation11], %s80
      %s83 = sshll.u32 [#allocation10], 4
      %s84 = int_to_ptr.vmem [resolvable:$true] %s83
      %86 = dma.hbm_to_vmem [thread:$0]  %s6, 128, %s84, [#allocation11]
    $region29: #{generator_forward.1} parent=1 // pred_fallthru
      _
    // Predicated region
    $region30: #{generator_forward.1} parent=1 // pred_check
      _
    $region31: #{generator_forward.1} parent=1 // pred_check_branch
      %88 = sbr.rel (0) target = $region33
    $region32: #{generator_forward.1} parent=1 // pred_region
      %s90 = ssub.s32 57344, 57344
      %91 = vsyncadd [#allocation11], %s90
      %s92 = sshll.u32 [#allocation12], 4
      %s93 = int_to_ptr.vmem [resolvable:$true] %s92
      %98 = dma.hbm_to_vmem [thread:$0]  %s7, 57344, %s93, [#allocation11], 448, 448, 28
    $region33: #{generator_forward.1} parent=1 // pred_fallthru
      _
    // Predicated region
    $region34: #{generator_forward.1} parent=1 // pred_check
      _
    $region35: #{generator_forward.1} parent=1 // pred_check_branch
      %100 = sbr.rel (0) target = $region37
    $region36: #{generator_forward.1} parent=1 // pred_region
      %s102 = ssub.s32 112, 112
      %103 = vsyncadd [#allocation14], %s102
      %s105 = sshll.u32 [#allocation13], 4
      %s106 = int_to_ptr.vmem [resolvable:$true] %s105
      %108 = dma.hbm_to_vmem [thread:$0]  %s8, 112, %s106, [#allocation14]
    $region37: #{generator_forward.1} parent=1 // pred_fallthru
      _
    // Predicated region
    $region38: #{generator_forward.1} parent=1 // pred_check
      _
    $region39: #{generator_forward.1} parent=1 // pred_check_branch
      %110 = sbr.rel (0) target = $region41
    $region40: #{generator_forward.1} parent=1 // pred_region
      %111 = dma.done [#allocation3], 2048
    $region41: #{generator_forward.1} parent=1 // pred_fallthru
      _
    // Predicated region
    $region42: #{generator_forward.1} parent=1 // pred_check
      _
    $region43: #{generator_forward.1} parent=1 // pred_check_branch
      %113 = sbr.rel (0) target = $region45
    $region44: #{generator_forward.1} parent=1 // pred_region
      %114 = dma.done [#allocation5], 32
    $region45: #{generator_forward.1} parent=1 // pred_fallthru
      _
    // Predicated region
    $region46: #{generator_forward.1} parent=1 // pred_check
      _
    $region47: #{generator_forward.1} parent=1 // pred_check_branch
      %116 = sbr.rel (0) target = $region49
    $region48: #{generator_forward.1} parent=1 // pred_region
      %117 = dma.done [#allocation5], 8192
    $region49: #{generator_forward.1} parent=1 // pred_fallthru
      _
    // Predicated region
    $region50: #{generator_forward.1} parent=1 // pred_check
      _
    $region51: #{generator_forward.1} parent=1 // pred_check_branch
      %119 = sbr.rel (0) target = $region53
    $region52: #{generator_forward.1} parent=1 // pred_region
      %120 = dma.done [#allocation8], 64
    $region53: #{generator_forward.1} parent=1 // pred_fallthru
      _
    // Predicated region
    $region54: #{generator_forward.1} parent=1 // pred_check
      _
    $region55: #{generator_forward.1} parent=1 // pred_check_branch
      %122 = sbr.rel (0) target = $region57
    $region56: #{generator_forward.1} parent=1 // pred_region
      %123 = dma.done [#allocation8], 32768
    $region57: #{generator_forward.1} parent=1 // pred_fallthru
      _
    // Predicated region
    $region58: #{generator_forward.1} parent=1 // pred_check
      _
    $region59: #{generator_forward.1} parent=1 // pred_check_branch
      %125 = sbr.rel (0) target = $region61
    $region60: #{generator_forward.1} parent=1 // pred_region
      %126 = dma.done [#allocation11], 128
    $region61: #{generator_forward.1} parent=1 // pred_fallthru
      _
    // Predicated region
    $region62: #{generator_forward.1} parent=1 // pred_check
      _
    $region63: #{generator_forward.1} parent=1 // pred_check_branch
      %128 = sbr.rel (0) target = $region65
    $region64: #{generator_forward.1} parent=1 // pred_region
      %129 = dma.done [#allocation11], 57344
    $region65: #{generator_forward.1} parent=1 // pred_fallthru
      _
    // Predicated region
    $region66: #{generator_forward.1} parent=1 // pred_check
      _
    $region67: #{generator_forward.1} parent=1 // pred_check_branch
      %131 = sbr.rel (0) target = $region69
    $region68: #{generator_forward.1} parent=1 // pred_region
      %132 = dma.done [#allocation14], 112
    $region69: #{generator_forward.1} parent=1 // pred_fallthru
      _
    %v134 = vld [vmem:[%s0] sm:$0xf]
    %v135 = vld [vmem:[%s0 + $0x4] sm:$0xf]
    %v136 = vld [vmem:[#allocation2] sm:$0xff]
    %v137 = vld [vmem:[#allocation2 + $0x8] sm:$0xff]
    %v138 = vld [vmem:[#allocation2 + $0x10] sm:$0xff]
    %v139 = vld [vmem:[#allocation2 + $0x18] sm:$0xff]
    %v140 = vld [vmem:[#allocation2 + $0x20] sm:$0xff]
    %v141 = vld [vmem:[#allocation2 + $0x28] sm:$0xff]
    %v142 = vld [vmem:[#allocation2 + $0x30] sm:$0xff]
    %v143 = vld [vmem:[#allocation2 + $0x38] sm:$0xff]
    %v144 = vld [vmem:[#allocation2 + $0x40] sm:$0xff]
    %v145 = vld [vmem:[#allocation2 + $0x48] sm:$0xff]
    %v146 = vld [vmem:[#allocation2 + $0x50] sm:$0xff]
    %v147 = vld [vmem:[#allocation2 + $0x58] sm:$0xff]
    %v148 = vld [vmem:[#allocation2 + $0x60] sm:$0xff]
    %v149 = vld [vmem:[#allocation2 + $0x68] sm:$0xff]
    %v150 = vld [vmem:[#allocation2 + $0x70] sm:$0xff]
    %v151 = vld [vmem:[#allocation2 + $0x78] sm:$0xff]
    %v152 = vld [vmem:[#allocation4] sm:$0x3]
    %v154 = vlaneseq
    %v155 = vshrl.u32 %v154, 7
    %v156 = vsub.s32 0, %v155
    %v157 = vrot.slane %v152, %v156
    %v158 = vlaneseq
    %v159 = vshrl.u32 %v158, 7
    %v160 = vsub.s32 1, %v159
    %v161 = vrot.slane %v152, %v160
    %v166 = vunpack.c.l.b16 %v134
    %v167 = vunpack.c.l.b16 %v135
    %v168 = vpack.c.b16 %v167, %v166
    %v186 = vunpack.c.l.b16 %v136
    %v187 = vunpack.c.h.b16 %v136
    %v188 = vunpack.c.l.b16 %v137
    %v189 = vunpack.c.h.b16 %v137
    %v190 = vunpack.c.l.b16 %v138
    %v191 = vunpack.c.h.b16 %v138
    %v192 = vunpack.c.l.b16 %v139
    %v193 = vunpack.c.h.b16 %v139
    %v194 = vunpack.c.l.b16 %v140
    %v195 = vunpack.c.h.b16 %v140
    %v196 = vunpack.c.l.b16 %v141
    %v197 = vunpack.c.h.b16 %v141
    %v198 = vunpack.c.l.b16 %v142
    %v199 = vunpack.c.h.b16 %v142
    %v200 = vunpack.c.l.b16 %v143
    %v201 = vunpack.c.h.b16 %v143
    %v202 = vunpack.c.l.b16 %v144
    %v203 = vunpack.c.h.b16 %v144
    %v204 = vunpack.c.l.b16 %v145
    %v205 = vunpack.c.h.b16 %v145
    %v206 = vunpack.c.l.b16 %v146
    %v207 = vunpack.c.h.b16 %v146
    %v208 = vunpack.c.l.b16 %v147
    %v209 = vunpack.c.h.b16 %v147
    %v210 = vunpack.c.l.b16 %v148
    %v211 = vunpack.c.h.b16 %v148
    %v212 = vunpack.c.l.b16 %v149
    %v213 = vunpack.c.h.b16 %v149
    %v214 = vunpack.c.l.b16 %v150
    %v215 = vunpack.c.h.b16 %v150
    %v216 = vunpack.c.l.b16 %v151
    %v217 = vunpack.c.h.b16 %v151
    %v218 = vpack.c.b16 %v188, %v186
    %v219 = vpack.c.b16 %v189, %v187
    %v220 = vpack.c.b16 %v192, %v190
    %v221 = vpack.c.b16 %v193, %v191
    %v222 = vpack.c.b16 %v196, %v194
    %v223 = vpack.c.b16 %v197, %v195
    %v224 = vpack.c.b16 %v200, %v198
    %v225 = vpack.c.b16 %v201, %v199
    %v226 = vpack.c.b16 %v204, %v202
    %v227 = vpack.c.b16 %v205, %v203
    %v228 = vpack.c.b16 %v208, %v206
    %v229 = vpack.c.b16 %v209, %v207
    %v230 = vpack.c.b16 %v212, %v210
    %v231 = vpack.c.b16 %v213, %v211
    %v232 = vpack.c.b16 %v216, %v214
    %v233 = vpack.c.b16 %v217, %v215
    %250 = vmatprep.subr.bf16.mxu0 %v219
    %251 = vmatpush1.bf16.msra.mxu0 %v218
    %252 = vmatprep.subr.bf16.mxu0 %v221
    %253 = vmatpush1.bf16.msra.mxu0 %v220
    %254 = vmatprep.subr.bf16.mxu0 %v223
    %255 = vmatpush1.bf16.msra.mxu0 %v222
    %256 = vmatprep.subr.bf16.mxu0 %v225
    %257 = vmatpush1.bf16.msra.mxu0 %v224
    %258 = vmatprep.subr.bf16.mxu0 %v227
    %259 = vmatpush1.bf16.msra.mxu0 %v226
    %260 = vmatprep.subr.bf16.mxu0 %v229
    %261 = vmatpush1.bf16.msra.mxu0 %v228
    %262 = vmatprep.subr.bf16.mxu0 %v231
    %263 = vmatpush1.bf16.msra.mxu0 %v230
    %264 = vmatprep.subr.bf16.mxu0 %v233
    %265 = vmatpush1.bf16.msra.mxu0 %v232
    %266 = vmatprep.subr.bf16.mxu0 0
    %267 = vmatpush1.bf16.msra.mxu0 0
    %268 = vmatprep.subr.bf16.mxu0 0
    %269 = vmatpush1.bf16.msra.mxu0 0
    %270 = vmatprep.subr.bf16.mxu0 0
    %271 = vmatpush1.bf16.msra.mxu0 0
    %272 = vmatprep.subr.bf16.mxu0 0
    %273 = vmatpush1.bf16.msra.mxu0 0
    %274 = vmatprep.subr.bf16.mxu0 0
    %275 = vmatpush1.bf16.msra.mxu0 0
    %276 = vmatprep.subr.bf16.mxu0 0
    %277 = vmatpush1.bf16.msra.mxu0 0
    %278 = vmatprep.subr.bf16.mxu0 0
    %279 = vmatpush1.bf16.msra.mxu0 0
    %280 = vmatprep.subr.bf16.mxu0 0
    %281 = vmatpush1.bf16.msra.mxu0 0
    %282 = vmatprep.mubr.bf16.mxu0 0
    %283 = vmatmul.mubr.bf16.gmra.mrb[0].mxu0 %v168
    %v284 = vpop.f32.mrb[0].mxu0
    %v285 = vadd.f32 %v157, %v284
    %v286 = vpop.f32.mrb[0].mxu0
    %v287 = vadd.f32 %v161, %v286
    %v288 = vpop.f32.mrb[0].mxu0
    %v289 = vadd.f32 %v157, %v288
    %v290 = vpop.f32.mrb[0].mxu0
    %v291 = vadd.f32 %v161, %v290
    %292 = vdwg.mxu0
    %v293 = vmax.f32 %v285, 0.0
    %v294 = vmax.f32 %v287, 0.0
    %v295 = vmax.f32 %v289, 0.0
    %v296 = vmax.f32 %v291, 0.0
    %v297 = vpack.c.bf16 %v295, %v293
    %v298 = vpack.c.bf16 %v296, %v294
    %v299 = vld [vmem:[#allocation6] sm:$0xff]
    %v300 = vld [vmem:[#allocation6 + $0x8] sm:$0xff]
    %v301 = vld [vmem:[#allocation6 + $0x10] sm:$0xff]
    %v302 = vld [vmem:[#allocation6 + $0x18] sm:$0xff]
    %v303 = vld [vmem:[#allocation6 + $0x20] sm:$0xff]
    %v304 = vld [vmem:[#allocation6 + $0x28] sm:$0xff]
    %v305 = vld [vmem:[#allocation6 + $0x30] sm:$0xff]
    %v306 = vld [vmem:[#allocation6 + $0x38] sm:$0xff]
    %v307 = vld [vmem:[#allocation6 + $0x40] sm:$0xff]
    %v308 = vld [vmem:[#allocation6 + $0x48] sm:$0xff]
    %v309 = vld [vmem:[#allocation6 + $0x50] sm:$0xff]
    %v310 = vld [vmem:[#allocation6 + $0x58] sm:$0xff]
    %v311 = vld [vmem:[#allocation6 + $0x60] sm:$0xff]
    %v312 = vld [vmem:[#allocation6 + $0x68] sm:$0xff]
    %v313 = vld [vmem:[#allocation6 + $0x70] sm:$0xff]
    %v314 = vld [vmem:[#allocation6 + $0x78] sm:$0xff]
    %v315 = vld [vmem:[#allocation6 + $0x80] sm:$0xff]
    %v316 = vld [vmem:[#allocation6 + $0x88] sm:$0xff]
    %v317 = vld [vmem:[#allocation6 + $0x90] sm:$0xff]
    %v318 = vld [vmem:[#allocation6 + $0x98] sm:$0xff]
    %v319 = vld [vmem:[#allocation6 + $0xa0] sm:$0xff]
    %v320 = vld [vmem:[#allocation6 + $0xa8] sm:$0xff]
    %v321 = vld [vmem:[#allocation6 + $0xb0] sm:$0xff]
    %v322 = vld [vmem:[#allocation6 + $0xb8] sm:$0xff]
    %v323 = vld [vmem:[#allocation6 + $0xc0] sm:$0xff]
    %v324 = vld [vmem:[#allocation6 + $0xc8] sm:$0xff]
    %v325 = vld [vmem:[#allocation6 + $0xd0] sm:$0xff]
    %v326 = vld [vmem:[#allocation6 + $0xd8] sm:$0xff]
    %v327 = vld [vmem:[#allocation6 + $0xe0] sm:$0xff]
    %v328 = vld [vmem:[#allocation6 + $0xe8] sm:$0xff]
    %v329 = vld [vmem:[#allocation6 + $0xf0] sm:$0xff]
    %v330 = vld [vmem:[#allocation6 + $0xf8] sm:$0xff]
    %v331 = vld [vmem:[#allocation6 + $0x100] sm:$0xff]
    %v332 = vld [vmem:[#allocation6 + $0x108] sm:$0xff]
    %v333 = vld [vmem:[#allocation6 + $0x110] sm:$0xff]
    %v334 = vld [vmem:[#allocation6 + $0x118] sm:$0xff]
    %v335 = vld [vmem:[#allocation6 + $0x120] sm:$0xff]
    %v336 = vld [vmem:[#allocation6 + $0x128] sm:$0xff]
    %v337 = vld [vmem:[#allocation6 + $0x130] sm:$0xff]
    %v338 = vld [vmem:[#allocation6 + $0x138] sm:$0xff]
    %v339 = vld [vmem:[#allocation6 + $0x140] sm:$0xff]
    %v340 = vld [vmem:[#allocation6 + $0x148] sm:$0xff]
    %v341 = vld [vmem:[#allocation6 + $0x150] sm:$0xff]
    %v342 = vld [vmem:[#allocation6 + $0x158] sm:$0xff]
    %v343 = vld [vmem:[#allocation6 + $0x160] sm:$0xff]
    %v344 = vld [vmem:[#allocation6 + $0x168] sm:$0xff]
    %v345 = vld [vmem:[#allocation6 + $0x170] sm:$0xff]
    %v346 = vld [vmem:[#allocation6 + $0x178] sm:$0xff]
    %v347 = vld [vmem:[#allocation6 + $0x180] sm:$0xff]
    %v348 = vld [vmem:[#allocation6 + $0x188] sm:$0xff]
    %v349 = vld [vmem:[#allocation6 + $0x190] sm:$0xff]
    %v350 = vld [vmem:[#allocation6 + $0x198] sm:$0xff]
    %v351 = vld [vmem:[#allocation6 + $0x1a0] sm:$0xff]
    %v352 = vld [vmem:[#allocation6 + $0x1a8] sm:$0xff]
    %v353 = vld [vmem:[#allocation6 + $0x1b0] sm:$0xff]
    %v354 = vld [vmem:[#allocation6 + $0x1b8] sm:$0xff]
    %v355 = vld [vmem:[#allocation6 + $0x1c0] sm:$0xff]
    %v356 = vld [vmem:[#allocation6 + $0x1c8] sm:$0xff]
    %v357 = vld [vmem:[#allocation6 + $0x1d0] sm:$0xff]
    %v358 = vld [vmem:[#allocation6 + $0x1d8] sm:$0xff]
    %v359 = vld [vmem:[#allocation6 + $0x1e0] sm:$0xff]
    %v360 = vld [vmem:[#allocation6 + $0x1e8] sm:$0xff]
    %v361 = vld [vmem:[#allocation6 + $0x1f0] sm:$0xff]
    %v362 = vld [vmem:[#allocation6 + $0x1f8] sm:$0xff]
    %v363 = vld [vmem:[#allocation7] sm:$0xf]
    %v365 = vlaneseq
    %v366 = vshrl.u32 %v365, 7
    %v367 = vsub.s32 0, %v366
    %v368 = vrot.slane %v363, %v367
    %v369 = vlaneseq
    %v370 = vshrl.u32 %v369, 7
    %v371 = vsub.s32 1, %v370
    %v372 = vrot.slane %v363, %v371
    %v373 = vlaneseq
    %v374 = vshrl.u32 %v373, 7
    %v375 = vsub.s32 2, %v374
    %v376 = vrot.slane %v363, %v375
    %v377 = vlaneseq
    %v378 = vshrl.u32 %v377, 7
    %v379 = vsub.s32 3, %v378
    %v380 = vrot.slane %v363, %v379
    %v449 = vunpack.c.l.b16 %v299
    %v450 = vunpack.c.h.b16 %v299
    %v451 = vunpack.c.l.b16 %v300
    %v452 = vunpack.c.h.b16 %v300
    %v453 = vunpack.c.l.b16 %v301
    %v454 = vunpack.c.h.b16 %v301
    %v455 = vunpack.c.l.b16 %v302
    %v456 = vunpack.c.h.b16 %v302
    %v457 = vunpack.c.l.b16 %v303
    %v458 = vunpack.c.h.b16 %v303
    %v459 = vunpack.c.l.b16 %v304
    %v460 = vunpack.c.h.b16 %v304
    %v461 = vunpack.c.l.b16 %v305
    %v462 = vunpack.c.h.b16 %v305
    %v463 = vunpack.c.l.b16 %v306
    %v464 = vunpack.c.h.b16 %v306
    %v465 = vunpack.c.l.b16 %v307
    %v466 = vunpack.c.h.b16 %v307
    %v467 = vunpack.c.l.b16 %v308
    %v468 = vunpack.c.h.b16 %v308
    %v469 = vunpack.c.l.b16 %v309
    %v470 = vunpack.c.h.b16 %v309
    %v471 = vunpack.c.l.b16 %v310
    %v472 = vunpack.c.h.b16 %v310
    %v473 = vunpack.c.l.b16 %v311
    %v474 = vunpack.c.h.b16 %v311
    %v475 = vunpack.c.l.b16 %v312
    %v476 = vunpack.c.h.b16 %v312
    %v477 = vunpack.c.l.b16 %v313
    %v478 = vunpack.c.h.b16 %v313
    %v479 = vunpack.c.l.b16 %v314
    %v480 = vunpack.c.h.b16 %v314
    %v481 = vunpack.c.l.b16 %v315
    %v482 = vunpack.c.h.b16 %v315
    %v483 = vunpack.c.l.b16 %v316
    %v484 = vunpack.c.h.b16 %v316
    %v485 = vunpack.c.l.b16 %v317
    %v486 = vunpack.c.h.b16 %v317
    %v487 = vunpack.c.l.b16 %v318
    %v488 = vunpack.c.h.b16 %v318
    %v489 = vunpack.c.l.b16 %v319
    %v490 = vunpack.c.h.b16 %v319
    %v491 = vunpack.c.l.b16 %v320
    %v492 = vunpack.c.h.b16 %v320
    %v493 = vunpack.c.l.b16 %v321
    %v494 = vunpack.c.h.b16 %v321
    %v495 = vunpack.c.l.b16 %v322
    %v496 = vunpack.c.h.b16 %v322
    %v497 = vunpack.c.l.b16 %v323
    %v498 = vunpack.c.h.b16 %v323
    %v499 = vunpack.c.l.b16 %v324
    %v500 = vunpack.c.h.b16 %v324
    %v501 = vunpack.c.l.b16 %v325
    %v502 = vunpack.c.h.b16 %v325
    %v503 = vunpack.c.l.b16 %v326
    %v504 = vunpack.c.h.b16 %v326
    %v505 = vunpack.c.l.b16 %v327
    %v506 = vunpack.c.h.b16 %v327
    %v507 = vunpack.c.l.b16 %v328
    %v508 = vunpack.c.h.b16 %v328
    %v509 = vunpack.c.l.b16 %v329
    %v510 = vunpack.c.h.b16 %v329
    %v511 = vunpack.c.l.b16 %v330
    %v512 = vunpack.c.h.b16 %v330
    %v513 = vunpack.c.l.b16 %v331
    %v514 = vunpack.c.h.b16 %v331
    %v515 = vunpack.c.l.b16 %v332
    %v516 = vunpack.c.h.b16 %v332
    %v517 = vunpack.c.l.b16 %v333
    %v518 = vunpack.c.h.b16 %v333
    %v519 = vunpack.c.l.b16 %v334
    %v520 = vunpack.c.h.b16 %v334
    %v521 = vunpack.c.l.b16 %v335
    %v522 = vunpack.c.h.b16 %v335
    %v523 = vunpack.c.l.b16 %v336
    %v524 = vunpack.c.h.b16 %v336
    %v525 = vunpack.c.l.b16 %v337
    %v526 = vunpack.c.h.b16 %v337
    %v527 = vunpack.c.l.b16 %v338
    %v528 = vunpack.c.h.b16 %v338
    %v529 = vunpack.c.l.b16 %v339
    %v530 = vunpack.c.h.b16 %v339
    %v531 = vunpack.c.l.b16 %v340
    %v532 = vunpack.c.h.b16 %v340
    %v533 = vunpack.c.l.b16 %v341
    %v534 = vunpack.c.h.b16 %v341
    %v535 = vunpack.c.l.b16 %v342
    %v536 = vunpack.c.h.b16 %v342
    %v537 = vunpack.c.l.b16 %v343
    %v538 = vunpack.c.h.b16 %v343
    %v539 = vunpack.c.l.b16 %v344
    %v540 = vunpack.c.h.b16 %v344
    %v541 = vunpack.c.l.b16 %v345
    %v542 = vunpack.c.h.b16 %v345
    %v543 = vunpack.c.l.b16 %v346
    %v544 = vunpack.c.h.b16 %v346
    %v545 = vunpack.c.l.b16 %v347
    %v546 = vunpack.c.h.b16 %v347
    %v547 = vunpack.c.l.b16 %v348
    %v548 = vunpack.c.h.b16 %v348
    %v549 = vunpack.c.l.b16 %v349
    %v550 = vunpack.c.h.b16 %v349
    %v551 = vunpack.c.l.b16 %v350
    %v552 = vunpack.c.h.b16 %v350
    %v553 = vunpack.c.l.b16 %v351
    %v554 = vunpack.c.h.b16 %v351
    %v555 = vunpack.c.l.b16 %v352
    %v556 = vunpack.c.h.b16 %v352
    %v557 = vunpack.c.l.b16 %v353
    %v558 = vunpack.c.h.b16 %v353
    %v559 = vunpack.c.l.b16 %v354
    %v560 = vunpack.c.h.b16 %v354
    %v561 = vunpack.c.l.b16 %v355
    %v562 = vunpack.c.h.b16 %v355
    %v563 = vunpack.c.l.b16 %v356
    %v564 = vunpack.c.h.b16 %v356
    %v565 = vunpack.c.l.b16 %v357
    %v566 = vunpack.c.h.b16 %v357
    %v567 = vunpack.c.l.b16 %v358
    %v568 = vunpack.c.h.b16 %v358
    %v569 = vunpack.c.l.b16 %v359
    %v570 = vunpack.c.h.b16 %v359
    %v571 = vunpack.c.l.b16 %v360
    %v572 = vunpack.c.h.b16 %v360
    %v573 = vunpack.c.l.b16 %v361
    %v574 = vunpack.c.h.b16 %v361
    %v575 = vunpack.c.l.b16 %v362
    %v576 = vunpack.c.h.b16 %v362
    %v577 = vpack.c.b16 %v453, %v449
    %v578 = vpack.c.b16 %v454, %v450
    %v579 = vpack.c.b16 %v455, %v451
    %v580 = vpack.c.b16 %v456, %v452
    %v581 = vpack.c.b16 %v461, %v457
    %v582 = vpack.c.b16 %v462, %v458
    %v583 = vpack.c.b16 %v463, %v459
    %v584 = vpack.c.b16 %v464, %v460
    %v585 = vpack.c.b16 %v469, %v465
    %v586 = vpack.c.b16 %v470, %v466
    %v587 = vpack.c.b16 %v471, %v467
    %v588 = vpack.c.b16 %v472, %v468
    %v589 = vpack.c.b16 %v477, %v473
    %v590 = vpack.c.b16 %v478, %v474
    %v591 = vpack.c.b16 %v479, %v475
    %v592 = vpack.c.b16 %v480, %v476
    %v593 = vpack.c.b16 %v485, %v481
    %v594 = vpack.c.b16 %v486, %v482
    %v595 = vpack.c.b16 %v487, %v483
    %v596 = vpack.c.b16 %v488, %v484
    %v597 = vpack.c.b16 %v493, %v489
    %v598 = vpack.c.b16 %v494, %v490
    %v599 = vpack.c.b16 %v495, %v491
    %v600 = vpack.c.b16 %v496, %v492
    %v601 = vpack.c.b16 %v501, %v497
    %v602 = vpack.c.b16 %v502, %v498
    %v603 = vpack.c.b16 %v503, %v499
    %v604 = vpack.c.b16 %v504, %v500
    %v605 = vpack.c.b16 %v509, %v505
    %v606 = vpack.c.b16 %v510, %v506
    %v607 = vpack.c.b16 %v511, %v507
    %v608 = vpack.c.b16 %v512, %v508
    %v609 = vpack.c.b16 %v517, %v513
    %v610 = vpack.c.b16 %v518, %v514
    %v611 = vpack.c.b16 %v519, %v515
    %v612 = vpack.c.b16 %v520, %v516
    %v613 = vpack.c.b16 %v525, %v521
    %v614 = vpack.c.b16 %v526, %v522
    %v615 = vpack.c.b16 %v527, %v523
    %v616 = vpack.c.b16 %v528, %v524
    %v617 = vpack.c.b16 %v533, %v529
    %v618 = vpack.c.b16 %v534, %v530
    %v619 = vpack.c.b16 %v535, %v531
    %v620 = vpack.c.b16 %v536, %v532
    %v621 = vpack.c.b16 %v541, %v537
    %v622 = vpack.c.b16 %v542, %v538
    %v623 = vpack.c.b16 %v543, %v539
    %v624 = vpack.c.b16 %v544, %v540
    %v625 = vpack.c.b16 %v549, %v545
    %v626 = vpack.c.b16 %v550, %v546
    %v627 = vpack.c.b16 %v551, %v547
    %v628 = vpack.c.b16 %v552, %v548
    %v629 = vpack.c.b16 %v557, %v553
    %v630 = vpack.c.b16 %v558, %v554
    %v631 = vpack.c.b16 %v559, %v555
    %v632 = vpack.c.b16 %v560, %v556
    %v633 = vpack.c.b16 %v565, %v561
    %v634 = vpack.c.b16 %v566, %v562
    %v635 = vpack.c.b16 %v567, %v563
    %v636 = vpack.c.b16 %v568, %v564
    %v637 = vpack.c.b16 %v573, %v569
    %v638 = vpack.c.b16 %v574, %v570
    %v639 = vpack.c.b16 %v575, %v571
    %v640 = vpack.c.b16 %v576, %v572
    %705 = vmatprep.subr.bf16.mxu0 %v578
    %706 = vmatpush1.bf16.msra.mxu0 %v577
    %707 = vmatprep.subr.bf16.mxu0 %v582
    %708 = vmatpush1.bf16.msra.mxu0 %v581
    %709 = vmatprep.subr.bf16.mxu0 %v586
    %710 = vmatpush1.bf16.msra.mxu0 %v585
    %711 = vmatprep.subr.bf16.mxu0 %v590
    %712 = vmatpush1.bf16.msra.mxu0 %v589
    %713 = vmatprep.subr.bf16.mxu0 %v594
    %714 = vmatpush1.bf16.msra.mxu0 %v593
    %715 = vmatprep.subr.bf16.mxu0 %v598
    %716 = vmatpush1.bf16.msra.mxu0 %v597
    %717 = vmatprep.subr.bf16.mxu0 %v602
    %718 = vmatpush1.bf16.msra.mxu0 %v601
    %719 = vmatprep.subr.bf16.mxu0 %v606
    %720 = vmatpush1.bf16.msra.mxu0 %v605
    %721 = vmatprep.subr.bf16.mxu0 %v610
    %722 = vmatpush1.bf16.msra.mxu0 %v609
    %723 = vmatprep.subr.bf16.mxu0 %v614
    %724 = vmatpush1.bf16.msra.mxu0 %v613
    %725 = vmatprep.subr.bf16.mxu0 %v618
    %726 = vmatpush1.bf16.msra.mxu0 %v617
    %727 = vmatprep.subr.bf16.mxu0 %v622
    %728 = vmatpush1.bf16.msra.mxu0 %v621
    %729 = vmatprep.subr.bf16.mxu0 %v626
    %730 = vmatpush1.bf16.msra.mxu0 %v625
    %731 = vmatprep.subr.bf16.mxu0 %v630
    %732 = vmatpush1.bf16.msra.mxu0 %v629
    %733 = vmatprep.subr.bf16.mxu0 %v634
    %734 = vmatpush1.bf16.msra.mxu0 %v633
    %735 = vmatprep.subr.bf16.mxu0 %v638
    %736 = vmatpush1.bf16.msra.mxu0 %v637
    %737 = vmatprep.mubr.bf16.mxu0 %v298
    %738 = vmatmul.mubr.bf16.gmra.mrb[0].mxu0 %v297
    %v739 = vpop.f32.mrb[0].mxu0
    %v740 = vadd.f32 %v368, %v739
    %v741 = vpop.f32.mrb[0].mxu0
    %v742 = vadd.f32 %v372, %v741
    %v743 = vpop.f32.mrb[0].mxu0
    %v744 = vadd.f32 %v368, %v743
    %v745 = vpop.f32.mrb[0].mxu0
    %v746 = vadd.f32 %v372, %v745
    %747 = vdwg.mxu0
    %748 = vmatprep.subr.bf16.mxu0 %v580
    %749 = vmatpush1.bf16.msra.mxu0 %v579
    %750 = vmatprep.subr.bf16.mxu0 %v584
    %751 = vmatpush1.bf16.msra.mxu0 %v583
    %752 = vmatprep.subr.bf16.mxu0 %v588
    %753 = vmatpush1.bf16.msra.mxu0 %v587
    %754 = vmatprep.subr.bf16.mxu0 %v592
    %755 = vmatpush1.bf16.msra.mxu0 %v591
    %756 = vmatprep.subr.bf16.mxu0 %v596
    %757 = vmatpush1.bf16.msra.mxu0 %v595
    %758 = vmatprep.subr.bf16.mxu0 %v600
    %759 = vmatpush1.bf16.msra.mxu0 %v599
    %760 = vmatprep.subr.bf16.mxu0 %v604
    %761 = vmatpush1.bf16.msra.mxu0 %v603
    %762 = vmatprep.subr.bf16.mxu0 %v608
    %763 = vmatpush1.bf16.msra.mxu0 %v607
    %764 = vmatprep.subr.bf16.mxu0 %v612
    %765 = vmatpush1.bf16.msra.mxu0 %v611
    %766 = vmatprep.subr.bf16.mxu0 %v616
    %767 = vmatpush1.bf16.msra.mxu0 %v615
    %768 = vmatprep.subr.bf16.mxu0 %v620
    %769 = vmatpush1.bf16.msra.mxu0 %v619
    %770 = vmatprep.subr.bf16.mxu0 %v624
    %771 = vmatpush1.bf16.msra.mxu0 %v623
    %772 = vmatprep.subr.bf16.mxu0 %v628
    %773 = vmatpush1.bf16.msra.mxu0 %v627
    %774 = vmatprep.subr.bf16.mxu0 %v632
    %775 = vmatpush1.bf16.msra.mxu0 %v631
    %776 = vmatprep.subr.bf16.mxu0 %v636
    %777 = vmatpush1.bf16.msra.mxu0 %v635
    %778 = vmatprep.subr.bf16.mxu0 %v640
    %779 = vmatpush1.bf16.msra.mxu0 %v639
    %780 = vmatprep.mubr.bf16.mxu0 %v298
    %781 = vmatmul.mubr.bf16.gmra.mrb[0].mxu0 %v297
    %v782 = vpop.f32.mrb[0].mxu0
    %v783 = vadd.f32 %v376, %v782
    %v784 = vpop.f32.mrb[0].mxu0
    %v785 = vadd.f32 %v380, %v784
    %v786 = vpop.f32.mrb[0].mxu0
    %v787 = vadd.f32 %v376, %v786
    %v788 = vpop.f32.mrb[0].mxu0
    %v789 = vadd.f32 %v380, %v788
    %790 = vdwg.mxu0
    %v791 = vmax.f32 %v740, 0.0
    %v792 = vmax.f32 %v742, 0.0
    %v793 = vmax.f32 %v783, 0.0
    %v794 = vmax.f32 %v785, 0.0
    %v795 = vmax.f32 %v744, 0.0
    %v796 = vmax.f32 %v746, 0.0
    %v797 = vmax.f32 %v787, 0.0
    %v798 = vmax.f32 %v789, 0.0
    %v799 = vpack.c.bf16 %v795, %v791
    %v800 = vpack.c.bf16 %v796, %v792
    %v801 = vpack.c.bf16 %v797, %v793
    %v802 = vpack.c.bf16 %v798, %v794
    %v803 = vld [vmem:[#allocation9] sm:$0xff]
    %v804 = vld [vmem:[#allocation9 + $0x8] sm:$0xff]
    %v805 = vld [vmem:[#allocation9 + $0x10] sm:$0xff]
    %v806 = vld [vmem:[#allocation9 + $0x18] sm:$0xff]
    %v807 = vld [vmem:[#allocation9 + $0x20] sm:$0xff]
    %v808 = vld [vmem:[#allocation9 + $0x28] sm:$0xff]
    %v809 = vld [vmem:[#allocation9 + $0x30] sm:$0xff]
    %v810 = vld [vmem:[#allocation9 + $0x38] sm:$0xff]
    %v811 = vld [vmem:[#allocation9 + $0x40] sm:$0xff]
    %v812 = vld [vmem:[#allocation9 + $0x48] sm:$0xff]
    %v813 = vld [vmem:[#allocation9 + $0x50] sm:$0xff]
    %v814 = vld [vmem:[#allocation9 + $0x58] sm:$0xff]
    %v815 = vld [vmem:[#allocation9 + $0x60] sm:$0xff]
    %v816 = vld [vmem:[#allocation9 + $0x68] sm:$0xff]
    %v817 = vld [vmem:[#allocation9 + $0x70] sm:$0xff]
    %v818 = vld [vmem:[#allocation9 + $0x78] sm:$0xff]
    %v819 = vld [vmem:[#allocation9 + $0x80] sm:$0xff]
    %v820 = vld [vmem:[#allocation9 + $0x88] sm:$0xff]
    %v821 = vld [vmem:[#allocation9 + $0x90] sm:$0xff]
    %v822 = vld [vmem:[#allocation9 + $0x98] sm:$0xff]
    %v823 = vld [vmem:[#allocation9 + $0xa0] sm:$0xff]
    %v824 = vld [vmem:[#allocation9 + $0xa8] sm:$0xff]
    %v825 = vld [vmem:[#allocation9 + $0xb0] sm:$0xff]
    %v826 = vld [vmem:[#allocation9 + $0xb8] sm:$0xff]
    %v827 = vld [vmem:[#allocation9 + $0xc0] sm:$0xff]
    %v828 = vld [vmem:[#allocation9 + $0xc8] sm:$0xff]
    %v829 = vld [vmem:[#allocation9 + $0xd0] sm:$0xff]
    %v830 = vld [vmem:[#allocation9 + $0xd8] sm:$0xff]
    %v831 = vld [vmem:[#allocation9 + $0xe0] sm:$0xff]
    %v832 = vld [vmem:[#allocation9 + $0xe8] sm:$0xff]
    %v833 = vld [vmem:[#allocation9 + $0xf0] sm:$0xff]
    %v834 = vld [vmem:[#allocation9 + $0xf8] sm:$0xff]
    %v835 = vld [vmem:[#allocation9 + $0x100] sm:$0xff]
    %v836 = vld [vmem:[#allocation9 + $0x108] sm:$0xff]
    %v837 = vld [vmem:[#allocation9 + $0x110] sm:$0xff]
    %v838 = vld [vmem:[#allocation9 + $0x118] sm:$0xff]
    %v839 = vld [vmem:[#allocation9 + $0x120] sm:$0xff]
    %v840 = vld [vmem:[#allocation9 + $0x128] sm:$0xff]
    %v841 = vld [vmem:[#allocation9 + $0x130] sm:$0xff]
    %v842 = vld [vmem:[#allocation9 + $0x138] sm:$0xff]
    %v843 = vld [vmem:[#allocation9 + $0x140] sm:$0xff]
    %v844 = vld [vmem:[#allocation9 + $0x148] sm:$0xff]
    %v845 = vld [vmem:[#allocation9 + $0x150] sm:$0xff]
    %v846 = vld [vmem:[#allocation9 + $0x158] sm:$0xff]
    %v847 = vld [vmem:[#allocation9 + $0x160] sm:$0xff]
    %v848 = vld [vmem:[#allocation9 + $0x168] sm:$0xff]
    %v849 = vld [vmem:[#allocation9 + $0x170] sm:$0xff]
    %v850 = vld [vmem:[#allocation9 + $0x178] sm:$0xff]
    %v851 = vld [vmem:[#allocation9 + $0x180] sm:$0xff]
    %v852 = vld [vmem:[#allocation9 + $0x188] sm:$0xff]
    %v853 = vld [vmem:[#allocation9 + $0x190] sm:$0xff]
    %v854 = vld [vmem:[#allocation9 + $0x198] sm:$0xff]
    %v855 = vld [vmem:[#allocation9 + $0x1a0] sm:$0xff]
    %v856 = vld [vmem:[#allocation9 + $0x1a8] sm:$0xff]
    %v857 = vld [vmem:[#allocation9 + $0x1b0] sm:$0xff]
    %v858 = vld [vmem:[#allocation9 + $0x1b8] sm:$0xff]
    %v859 = vld [vmem:[#allocation9 + $0x1c0] sm:$0xff]
    %v860 = vld [vmem:[#allocation9 + $0x1c8] sm:$0xff]
    %v861 = vld [vmem:[#allocation9 + $0x1d0] sm:$0xff]
    %v862 = vld [vmem:[#allocation9 + $0x1d8] sm:$0xff]
    %v863 = vld [vmem:[#allocation9 + $0x1e0] sm:$0xff]
    %v864 = vld [vmem:[#allocation9 + $0x1e8] sm:$0xff]
    %v865 = vld [vmem:[#allocation9 + $0x1f0] sm:$0xff]
    %v866 = vld [vmem:[#allocation9 + $0x1f8] sm:$0xff]
    %v867 = vld [vmem:[#allocation9 + $0x200] sm:$0xff]
    %v868 = vld [vmem:[#allocation9 + $0x208] sm:$0xff]
    %v869 = vld [vmem:[#allocation9 + $0x210] sm:$0xff]
    %v870 = vld [vmem:[#allocation9 + $0x218] sm:$0xff]
    %v871 = vld [vmem:[#allocation9 + $0x220] sm:$0xff]
    %v872 = vld [vmem:[#allocation9 + $0x228] sm:$0xff]
    %v873 = vld [vmem:[#allocation9 + $0x230] sm:$0xff]
    %v874 = vld [vmem:[#allocation9 + $0x238] sm:$0xff]
    %v875 = vld [vmem:[#allocation9 + $0x240] sm:$0xff]
    %v876 = vld [vmem:[#allocation9 + $0x248] sm:$0xff]
    %v877 = vld [vmem:[#allocation9 + $0x250] sm:$0xff]
    %v878 = vld [vmem:[#allocation9 + $0x258] sm:$0xff]
    %v879 = vld [vmem:[#allocation9 + $0x260] sm:$0xff]
    %v880 = vld [vmem:[#allocation9 + $0x268] sm:$0xff]
    %v881 = vld [vmem:[#allocation9 + $0x270] sm:$0xff]
    %v882 = vld [vmem:[#allocation9 + $0x278] sm:$0xff]
    %v883 = vld [vmem:[#allocation9 + $0x280] sm:$0xff]
    %v884 = vld [vmem:[#allocation9 + $0x288] sm:$0xff]
    %v885 = vld [vmem:[#allocation9 + $0x290] sm:$0xff]
    %v886 = vld [vmem:[#allocation9 + $0x298] sm:$0xff]
    %v887 = vld [vmem:[#allocation9 + $0x2a0] sm:$0xff]
    %v888 = vld [vmem:[#allocation9 + $0x2a8] sm:$0xff]
    %v889 = vld [vmem:[#allocation9 + $0x2b0] sm:$0xff]
    %v890 = vld [vmem:[#allocation9 + $0x2b8] sm:$0xff]
    %v891 = vld [vmem:[#allocation9 + $0x2c0] sm:$0xff]
    %v892 = vld [vmem:[#allocation9 + $0x2c8] sm:$0xff]
    %v893 = vld [vmem:[#allocation9 + $0x2d0] sm:$0xff]
    %v894 = vld [vmem:[#allocation9 + $0x2d8] sm:$0xff]
    %v895 = vld [vmem:[#allocation9 + $0x2e0] sm:$0xff]
    %v896 = vld [vmem:[#allocation9 + $0x2e8] sm:$0xff]
    %v897 = vld [vmem:[#allocation9 + $0x2f0] sm:$0xff]
    %v898 = vld [vmem:[#allocation9 + $0x2f8] sm:$0xff]
    %v899 = vld [vmem:[#allocation9 + $0x300] sm:$0xff]
    %v900 = vld [vmem:[#allocation9 + $0x308] sm:$0xff]
    %v901 = vld [vmem:[#allocation9 + $0x310] sm:$0xff]
    %v902 = vld [vmem:[#allocation9 + $0x318] sm:$0xff]
    %v903 = vld [vmem:[#allocation9 + $0x320] sm:$0xff]
    %v904 = vld [vmem:[#allocation9 + $0x328] sm:$0xff]
    %v905 = vld [vmem:[#allocation9 + $0x330] sm:$0xff]
    %v906 = vld [vmem:[#allocation9 + $0x338] sm:$0xff]
    %v907 = vld [vmem:[#allocation9 + $0x340] sm:$0xff]
    %v908 = vld [vmem:[#allocation9 + $0x348] sm:$0xff]
    %v909 = vld [vmem:[#allocation9 + $0x350] sm:$0xff]
    %v910 = vld [vmem:[#allocation9 + $0x358] sm:$0xff]
    %v911 = vld [vmem:[#allocation9 + $0x360] sm:$0xff]
    %v912 = vld [vmem:[#allocation9 + $0x368] sm:$0xff]
    %v913 = vld [vmem:[#allocation9 + $0x370] sm:$0xff]
    %v914 = vld [vmem:[#allocation9 + $0x378] sm:$0xff]
    %v915 = vld [vmem:[#allocation9 + $0x380] sm:$0xff]
    %v916 = vld [vmem:[#allocation9 + $0x388] sm:$0xff]
    %v917 = vld [vmem:[#allocation9 + $0x390] sm:$0xff]
    %v918 = vld [vmem:[#allocation9 + $0x398] sm:$0xff]
    %v919 = vld [vmem:[#allocation9 + $0x3a0] sm:$0xff]
    %v920 = vld [vmem:[#allocation9 + $0x3a8] sm:$0xff]
    %v921 = vld [vmem:[#allocation9 + $0x3b0] sm:$0xff]
    %v922 = vld [vmem:[#allocation9 + $0x3b8] sm:$0xff]
    %v923 = vld [vmem:[#allocation9 + $0x3c0] sm:$0xff]
    %v924 = vld [vmem:[#allocation9 + $0x3c8] sm:$0xff]
    %v925 = vld [vmem:[#allocation9 + $0x3d0] sm:$0xff]
    %v926 = vld [vmem:[#allocation9 + $0x3d8] sm:$0xff]
    %v927 = vld [vmem:[#allocation9 + $0x3e0] sm:$0xff]
    %v928 = vld [vmem:[#allocation9 + $0x3e8] sm:$0xff]
    %v929 = vld [vmem:[#allocation9 + $0x3f0] sm:$0xff]
    %v930 = vld [vmem:[#allocation9 + $0x3f8] sm:$0xff]
    %v931 = vld [vmem:[#allocation9 + $0x400] sm:$0xff]
    %v932 = vld [vmem:[#allocation9 + $0x408] sm:$0xff]
    %v933 = vld [vmem:[#allocation9 + $0x410] sm:$0xff]
    %v934 = vld [vmem:[#allocation9 + $0x418] sm:$0xff]
    %v935 = vld [vmem:[#allocation9 + $0x420] sm:$0xff]
    %v936 = vld [vmem:[#allocation9 + $0x428] sm:$0xff]
    %v937 = vld [vmem:[#allocation9 + $0x430] sm:$0xff]
    %v938 = vld [vmem:[#allocation9 + $0x438] sm:$0xff]
    %v939 = vld [vmem:[#allocation9 + $0x440] sm:$0xff]
    %v940 = vld [vmem:[#allocation9 + $0x448] sm:$0xff]
    %v941 = vld [vmem:[#allocation9 + $0x450] sm:$0xff]
    %v942 = vld [vmem:[#allocation9 + $0x458] sm:$0xff]
    %v943 = vld [vmem:[#allocation9 + $0x460] sm:$0xff]
    %v944 = vld [vmem:[#allocation9 + $0x468] sm:$0xff]
    %v945 = vld [vmem:[#allocation9 + $0x470] sm:$0xff]
    %v946 = vld [vmem:[#allocation9 + $0x478] sm:$0xff]
    %v947 = vld [vmem:[#allocation9 + $0x480] sm:$0xff]
    %v948 = vld [vmem:[#allocation9 + $0x488] sm:$0xff]
    %v949 = vld [vmem:[#allocation9 + $0x490] sm:$0xff]
    %v950 = vld [vmem:[#allocation9 + $0x498] sm:$0xff]
    %v951 = vld [vmem:[#allocation9 + $0x4a0] sm:$0xff]
    %v952 = vld [vmem:[#allocation9 + $0x4a8] sm:$0xff]
    %v953 = vld [vmem:[#allocation9 + $0x4b0] sm:$0xff]
    %v954 = vld [vmem:[#allocation9 + $0x4b8] sm:$0xff]
    %v955 = vld [vmem:[#allocation9 + $0x4c0] sm:$0xff]
    %v956 = vld [vmem:[#allocation9 + $0x4c8] sm:$0xff]
    %v957 = vld [vmem:[#allocation9 + $0x4d0] sm:$0xff]
    %v958 = vld [vmem:[#allocation9 + $0x4d8] sm:$0xff]
    %v959 = vld [vmem:[#allocation9 + $0x4e0] sm:$0xff]
    %v960 = vld [vmem:[#allocation9 + $0x4e8] sm:$0xff]
    %v961 = vld [vmem:[#allocation9 + $0x4f0] sm:$0xff]
    %v962 = vld [vmem:[#allocation9 + $0x4f8] sm:$0xff]
    %v963 = vld [vmem:[#allocation9 + $0x500] sm:$0xff]
    %v964 = vld [vmem:[#allocation9 + $0x508] sm:$0xff]
    %v965 = vld [vmem:[#allocation9 + $0x510] sm:$0xff]
    %v966 = vld [vmem:[#allocation9 + $0x518] sm:$0xff]
    %v967 = vld [vmem:[#allocation9 + $0x520] sm:$0xff]
    %v968 = vld [vmem:[#allocation9 + $0x528] sm:$0xff]
    %v969 = vld [vmem:[#allocation9 + $0x530] sm:$0xff]
    %v970 = vld [vmem:[#allocation9 + $0x538] sm:$0xff]
    %v971 = vld [vmem:[#allocation9 + $0x540] sm:$0xff]
    %v972 = vld [vmem:[#allocation9 + $0x548] sm:$0xff]
    %v973 = vld [vmem:[#allocation9 + $0x550] sm:$0xff]
    %v974 = vld [vmem:[#allocation9 + $0x558] sm:$0xff]
    %v975 = vld [vmem:[#allocation9 + $0x560] sm:$0xff]
    %v976 = vld [vmem:[#allocation9 + $0x568] sm:$0xff]
    %v977 = vld [vmem:[#allocation9 + $0x570] sm:$0xff]
    %v978 = vld [vmem:[#allocation9 + $0x578] sm:$0xff]
    %v979 = vld [vmem:[#allocation9 + $0x580] sm:$0xff]
    %v980 = vld [vmem:[#allocation9 + $0x588] sm:$0xff]
    %v981 = vld [vmem:[#allocation9 + $0x590] sm:$0xff]
    %v982 = vld [vmem:[#allocation9 + $0x598] sm:$0xff]
    %v983 = vld [vmem:[#allocation9 + $0x5a0] sm:$0xff]
    %v984 = vld [vmem:[#allocation9 + $0x5a8] sm:$0xff]
    %v985 = vld [vmem:[#allocation9 + $0x5b0] sm:$0xff]
    %v986 = vld [vmem:[#allocation9 + $0x5b8] sm:$0xff]
    %v987 = vld [vmem:[#allocation9 + $0x5c0] sm:$0xff]
    %v988 = vld [vmem:[#allocation9 + $0x5c8] sm:$0xff]
    %v989 = vld [vmem:[#allocation9 + $0x5d0] sm:$0xff]
    %v990 = vld [vmem:[#allocation9 + $0x5d8] sm:$0xff]
    %v991 = vld [vmem:[#allocation9 + $0x5e0] sm:$0xff]
    %v992 = vld [vmem:[#allocation9 + $0x5e8] sm:$0xff]
    %v993 = vld [vmem:[#allocation9 + $0x5f0] sm:$0xff]
    %v994 = vld [vmem:[#allocation9 + $0x5f8] sm:$0xff]
    %v995 = vld [vmem:[#allocation9 + $0x600] sm:$0xff]
    %v996 = vld [vmem:[#allocation9 + $0x608] sm:$0xff]
    %v997 = vld [vmem:[#allocation9 + $0x610] sm:$0xff]
    %v998 = vld [vmem:[#allocation9 + $0x618] sm:$0xff]
    %v999 = vld [vmem:[#allocation9 + $0x620] sm:$0xff]
    %v1000 = vld [vmem:[#allocation9 + $0x628] sm:$0xff]
    %v1001 = vld [vmem:[#allocation9 + $0x630] sm:$0xff]
    %v1002 = vld [vmem:[#allocation9 + $0x638] sm:$0xff]
    %v1003 = vld [vmem:[#allocation9 + $0x640] sm:$0xff]
    %v1004 = vld [vmem:[#allocation9 + $0x648] sm:$0xff]
    %v1005 = vld [vmem:[#allocation9 + $0x650] sm:$0xff]
    %v1006 = vld [vmem:[#allocation9 + $0x658] sm:$0xff]
    %v1007 = vld [vmem:[#allocation9 + $0x660] sm:$0xff]
    %v1008 = vld [vmem:[#allocation9 + $0x668] sm:$0xff]
    %v1009 = vld [vmem:[#allocation9 + $0x670] sm:$0xff]
    %v1010 = vld [vmem:[#allocation9 + $0x678] sm:$0xff]
    %v1011 = vld [vmem:[#allocation9 + $0x680] sm:$0xff]
    %v1012 = vld [vmem:[#allocation9 + $0x688] sm:$0xff]
    %v1013 = vld [vmem:[#allocation9 + $0x690] sm:$0xff]
    %v1014 = vld [vmem:[#allocation9 + $0x698] sm:$0xff]
    %v1015 = vld [vmem:[#allocation9 + $0x6a0] sm:$0xff]
    %v1016 = vld [vmem:[#allocation9 + $0x6a8] sm:$0xff]
    %v1017 = vld [vmem:[#allocation9 + $0x6b0] sm:$0xff]
    %v1018 = vld [vmem:[#allocation9 + $0x6b8] sm:$0xff]
    %v1019 = vld [vmem:[#allocation9 + $0x6c0] sm:$0xff]
    %v1020 = vld [vmem:[#allocation9 + $0x6c8] sm:$0xff]
    %v1021 = vld [vmem:[#allocation9 + $0x6d0] sm:$0xff]
    %v1022 = vld [vmem:[#allocation9 + $0x6d8] sm:$0xff]
    %v1023 = vld [vmem:[#allocation9 + $0x6e0] sm:$0xff]
    %v1024 = vld [vmem:[#allocation9 + $0x6e8] sm:$0xff]
    %v1025 = vld [vmem:[#allocation9 + $0x6f0] sm:$0xff]
    %v1026 = vld [vmem:[#allocation9 + $0x6f8] sm:$0xff]
    %v1027 = vld [vmem:[#allocation9 + $0x700] sm:$0xff]
    %v1028 = vld [vmem:[#allocation9 + $0x708] sm:$0xff]
    %v1029 = vld [vmem:[#allocation9 + $0x710] sm:$0xff]
    %v1030 = vld [vmem:[#allocation9 + $0x718] sm:$0xff]
    %v1031 = vld [vmem:[#allocation9 + $0x720] sm:$0xff]
    %v1032 = vld [vmem:[#allocation9 + $0x728] sm:$0xff]
    %v1033 = vld [vmem:[#allocation9 + $0x730] sm:$0xff]
    %v1034 = vld [vmem:[#allocation9 + $0x738] sm:$0xff]
    %v1035 = vld [vmem:[#allocation9 + $0x740] sm:$0xff]
    %v1036 = vld [vmem:[#allocation9 + $0x748] sm:$0xff]
    %v1037 = vld [vmem:[#allocation9 + $0x750] sm:$0xff]
    %v1038 = vld [vmem:[#allocation9 + $0x758] sm:$0xff]
    %v1039 = vld [vmem:[#allocation9 + $0x760] sm:$0xff]
    %v1040 = vld [vmem:[#allocation9 + $0x768] sm:$0xff]
    %v1041 = vld [vmem:[#allocation9 + $0x770] sm:$0xff]
    %v1042 = vld [vmem:[#allocation9 + $0x778] sm:$0xff]
    %v1043 = vld [vmem:[#allocation9 + $0x780] sm:$0xff]
    %v1044 = vld [vmem:[#allocation9 + $0x788] sm:$0xff]
    %v1045 = vld [vmem:[#allocation9 + $0x790] sm:$0xff]
    %v1046 = vld [vmem:[#allocation9 + $0x798] sm:$0xff]
    %v1047 = vld [vmem:[#allocation9 + $0x7a0] sm:$0xff]
    %v1048 = vld [vmem:[#allocation9 + $0x7a8] sm:$0xff]
    %v1049 = vld [vmem:[#allocation9 + $0x7b0] sm:$0xff]
    %v1050 = vld [vmem:[#allocation9 + $0x7b8] sm:$0xff]
    %v1051 = vld [vmem:[#allocation9 + $0x7c0] sm:$0xff]
    %v1052 = vld [vmem:[#allocation9 + $0x7c8] sm:$0xff]
    %v1053 = vld [vmem:[#allocation9 + $0x7d0] sm:$0xff]
    %v1054 = vld [vmem:[#allocation9 + $0x7d8] sm:$0xff]
    %v1055 = vld [vmem:[#allocation9 + $0x7e0] sm:$0xff]
    %v1056 = vld [vmem:[#allocation9 + $0x7e8] sm:$0xff]
    %v1057 = vld [vmem:[#allocation9 + $0x7f0] sm:$0xff]
    %v1058 = vld [vmem:[#allocation9 + $0x7f8] sm:$0xff]
    %v1059 = vld [vmem:[#allocation10] sm:$0xff]
    %v1061 = vlaneseq
    %v1062 = vshrl.u32 %v1061, 7
    %v1063 = vsub.s32 0, %v1062
    %v1064 = vrot.slane %v1059, %v1063
    %v1065 = vlaneseq
    %v1066 = vshrl.u32 %v1065, 7
    %v1067 = vsub.s32 1, %v1066
    %v1068 = vrot.slane %v1059, %v1067
    %v1069 = vlaneseq
    %v1070 = vshrl.u32 %v1069, 7
    %v1071 = vsub.s32 2, %v1070
    %v1072 = vrot.slane %v1059, %v1071
    %v1073 = vlaneseq
    %v1074 = vshrl.u32 %v1073, 7
    %v1075 = vsub.s32 3, %v1074
    %v1076 = vrot.slane %v1059, %v1075
    %v1077 = vlaneseq
    %v1078 = vshrl.u32 %v1077, 7
    %v1079 = vsub.s32 4, %v1078
    %v1080 = vrot.slane %v1059, %v1079
    %v1081 = vlaneseq
    %v1082 = vshrl.u32 %v1081, 7
    %v1083 = vsub.s32 5, %v1082
    %v1084 = vrot.slane %v1059, %v1083
    %v1085 = vlaneseq
    %v1086 = vshrl.u32 %v1085, 7
    %v1087 = vsub.s32 6, %v1086
    %v1088 = vrot.slane %v1059, %v1087
    %v1089 = vlaneseq
    %v1090 = vshrl.u32 %v1089, 7
    %v1091 = vsub.s32 7, %v1090
    %v1092 = vrot.slane %v1059, %v1091
    %v1357 = vunpack.c.l.b16 %v803
    %v1358 = vunpack.c.h.b16 %v803
    %v1359 = vunpack.c.l.b16 %v804
    %v1360 = vunpack.c.h.b16 %v804
    %v1361 = vunpack.c.l.b16 %v805
    %v1362 = vunpack.c.h.b16 %v805
    %v1363 = vunpack.c.l.b16 %v806
    %v1364 = vunpack.c.h.b16 %v806
    %v1365 = vunpack.c.l.b16 %v807
    %v1366 = vunpack.c.h.b16 %v807
    %v1367 = vunpack.c.l.b16 %v808
    %v1368 = vunpack.c.h.b16 %v808
    %v1369 = vunpack.c.l.b16 %v809
    %v1370 = vunpack.c.h.b16 %v809
    %v1371 = vunpack.c.l.b16 %v810
    %v1372 = vunpack.c.h.b16 %v810
    %v1373 = vunpack.c.l.b16 %v811
    %v1374 = vunpack.c.h.b16 %v811
    %v1375 = vunpack.c.l.b16 %v812
    %v1376 = vunpack.c.h.b16 %v812
    %v1377 = vunpack.c.l.b16 %v813
    %v1378 = vunpack.c.h.b16 %v813
    %v1379 = vunpack.c.l.b16 %v814
    %v1380 = vunpack.c.h.b16 %v814
    %v1381 = vunpack.c.l.b16 %v815
    %v1382 = vunpack.c.h.b16 %v815
    %v1383 = vunpack.c.l.b16 %v816
    %v1384 = vunpack.c.h.b16 %v816
    %v1385 = vunpack.c.l.b16 %v817
    %v1386 = vunpack.c.h.b16 %v817
    %v1387 = vunpack.c.l.b16 %v818
    %v1388 = vunpack.c.h.b16 %v818
    %v1389 = vunpack.c.l.b16 %v819
    %v1390 = vunpack.c.h.b16 %v819
    %v1391 = vunpack.c.l.b16 %v820
    %v1392 = vunpack.c.h.b16 %v820
    %v1393 = vunpack.c.l.b16 %v821
    %v1394 = vunpack.c.h.b16 %v821
    %v1395 = vunpack.c.l.b16 %v822
    %v1396 = vunpack.c.h.b16 %v822
    %v1397 = vunpack.c.l.b16 %v823
    %v1398 = vunpack.c.h.b16 %v823
    %v1399 = vunpack.c.l.b16 %v824
    %v1400 = vunpack.c.h.b16 %v824
    %v1401 = vunpack.c.l.b16 %v825
    %v1402 = vunpack.c.h.b16 %v825
    %v1403 = vunpack.c.l.b16 %v826
    %v1404 = vunpack.c.h.b16 %v826
    %v1405 = vunpack.c.l.b16 %v827
    %v1406 = vunpack.c.h.b16 %v827
    %v1407 = vunpack.c.l.b16 %v828
    %v1408 = vunpack.c.h.b16 %v828
    %v1409 = vunpack.c.l.b16 %v829
    %v1410 = vunpack.c.h.b16 %v829
    %v1411 = vunpack.c.l.b16 %v830
    %v1412 = vunpack.c.h.b16 %v830
    %v1413 = vunpack.c.l.b16 %v831
    %v1414 = vunpack.c.h.b16 %v831
    %v1415 = vunpack.c.l.b16 %v832
    %v1416 = vunpack.c.h.b16 %v832
    %v1417 = vunpack.c.l.b16 %v833
    %v1418 = vunpack.c.h.b16 %v833
    %v1419 = vunpack.c.l.b16 %v834
    %v1420 = vunpack.c.h.b16 %v834
    %v1421 = vunpack.c.l.b16 %v835
    %v1422 = vunpack.c.h.b16 %v835
    %v1423 = vunpack.c.l.b16 %v836
    %v1424 = vunpack.c.h.b16 %v836
    %v1425 = vunpack.c.l.b16 %v837
    %v1426 = vunpack.c.h.b16 %v837
    %v1427 = vunpack.c.l.b16 %v838
    %v1428 = vunpack.c.h.b16 %v838
    %v1429 = vunpack.c.l.b16 %v839
    %v1430 = vunpack.c.h.b16 %v839
    %v1431 = vunpack.c.l.b16 %v840
    %v1432 = vunpack.c.h.b16 %v840
    %v1433 = vunpack.c.l.b16 %v841
    %v1434 = vunpack.c.h.b16 %v841
    %v1435 = vunpack.c.l.b16 %v842
    %v1436 = vunpack.c.h.b16 %v842
    %v1437 = vunpack.c.l.b16 %v843
    %v1438 = vunpack.c.h.b16 %v843
    %v1439 = vunpack.c.l.b16 %v844
    %v1440 = vunpack.c.h.b16 %v844
    %v1441 = vunpack.c.l.b16 %v845
    %v1442 = vunpack.c.h.b16 %v845
    %v1443 = vunpack.c.l.b16 %v846
    %v1444 = vunpack.c.h.b16 %v846
    %v1445 = vunpack.c.l.b16 %v847
    %v1446 = vunpack.c.h.b16 %v847
    %v1447 = vunpack.c.l.b16 %v848
    %v1448 = vunpack.c.h.b16 %v848
    %v1449 = vunpack.c.l.b16 %v849
    %v1450 = vunpack.c.h.b16 %v849
    %v1451 = vunpack.c.l.b16 %v850
    %v1452 = vunpack.c.h.b16 %v850
    %v1453 = vunpack.c.l.b16 %v851
    %v1454 = vunpack.c.h.b16 %v851
    %v1455 = vunpack.c.l.b16 %v852
    %v1456 = vunpack.c.h.b16 %v852
    %v1457 = vunpack.c.l.b16 %v853
    %v1458 = vunpack.c.h.b16 %v853
    %v1459 = vunpack.c.l.b16 %v854
    %v1460 = vunpack.c.h.b16 %v854
    %v1461 = vunpack.c.l.b16 %v855
    %v1462 = vunpack.c.h.b16 %v855
    %v1463 = vunpack.c.l.b16 %v856
    %v1464 = vunpack.c.h.b16 %v856
    %v1465 = vunpack.c.l.b16 %v857
    %v1466 = vunpack.c.h.b16 %v857
    %v1467 = vunpack.c.l.b16 %v858
    %v1468 = vunpack.c.h.b16 %v858
    %v1469 = vunpack.c.l.b16 %v859
    %v1470 = vunpack.c.h.b16 %v859
    %v1471 = vunpack.c.l.b16 %v860
    %v1472 = vunpack.c.h.b16 %v860
    %v1473 = vunpack.c.l.b16 %v861
    %v1474 = vunpack.c.h.b16 %v861
    %v1475 = vunpack.c.l.b16 %v862
    %v1476 = vunpack.c.h.b16 %v862
    %v1477 = vunpack.c.l.b16 %v863
    %v1478 = vunpack.c.h.b16 %v863
    %v1479 = vunpack.c.l.b16 %v864
    %v1480 = vunpack.c.h.b16 %v864
    %v1481 = vunpack.c.l.b16 %v865
    %v1482 = vunpack.c.h.b16 %v865
    %v1483 = vunpack.c.l.b16 %v866
    %v1484 = vunpack.c.h.b16 %v866
    %v1485 = vunpack.c.l.b16 %v867
    %v1486 = vunpack.c.h.b16 %v867
    %v1487 = vunpack.c.l.b16 %v868
    %v1488 = vunpack.c.h.b16 %v868
    %v1489 = vunpack.c.l.b16 %v869
    %v1490 = vunpack.c.h.b16 %v869
    %v1491 = vunpack.c.l.b16 %v870
    %v1492 = vunpack.c.h.b16 %v870
    %v1493 = vunpack.c.l.b16 %v871
    %v1494 = vunpack.c.h.b16 %v871
    %v1495 = vunpack.c.l.b16 %v872
    %v1496 = vunpack.c.h.b16 %v872
    %v1497 = vunpack.c.l.b16 %v873
    %v1498 = vunpack.c.h.b16 %v873
    %v1499 = vunpack.c.l.b16 %v874
    %v1500 = vunpack.c.h.b16 %v874
    %v1501 = vunpack.c.l.b16 %v875
    %v1502 = vunpack.c.h.b16 %v875
    %v1503 = vunpack.c.l.b16 %v876
    %v1504 = vunpack.c.h.b16 %v876
    %v1505 = vunpack.c.l.b16 %v877
    %v1506 = vunpack.c.h.b16 %v877
    %v1507 = vunpack.c.l.b16 %v878
    %v1508 = vunpack.c.h.b16 %v878
    %v1509 = vunpack.c.l.b16 %v879
    %v1510 = vunpack.c.h.b16 %v879
    %v1511 = vunpack.c.l.b16 %v880
    %v1512 = vunpack.c.h.b16 %v880
    %v1513 = vunpack.c.l.b16 %v881
    %v1514 = vunpack.c.h.b16 %v881
    %v1515 = vunpack.c.l.b16 %v882
    %v1516 = vunpack.c.h.b16 %v882
    %v1517 = vunpack.c.l.b16 %v883
    %v1518 = vunpack.c.h.b16 %v883
    %v1519 = vunpack.c.l.b16 %v884
    %v1520 = vunpack.c.h.b16 %v884
    %v1521 = vunpack.c.l.b16 %v885
    %v1522 = vunpack.c.h.b16 %v885
    %v1523 = vunpack.c.l.b16 %v886
    %v1524 = vunpack.c.h.b16 %v886
    %v1525 = vunpack.c.l.b16 %v887
    %v1526 = vunpack.c.h.b16 %v887
    %v1527 = vunpack.c.l.b16 %v888
    %v1528 = vunpack.c.h.b16 %v888
    %v1529 = vunpack.c.l.b16 %v889
    %v1530 = vunpack.c.h.b16 %v889
    %v1531 = vunpack.c.l.b16 %v890
    %v1532 = vunpack.c.h.b16 %v890
    %v1533 = vunpack.c.l.b16 %v891
    %v1534 = vunpack.c.h.b16 %v891
    %v1535 = vunpack.c.l.b16 %v892
    %v1536 = vunpack.c.h.b16 %v892
    %v1537 = vunpack.c.l.b16 %v893
    %v1538 = vunpack.c.h.b16 %v893
    %v1539 = vunpack.c.l.b16 %v894
    %v1540 = vunpack.c.h.b16 %v894
    %v1541 = vunpack.c.l.b16 %v895
    %v1542 = vunpack.c.h.b16 %v895
    %v1543 = vunpack.c.l.b16 %v896
    %v1544 = vunpack.c.h.b16 %v896
    %v1545 = vunpack.c.l.b16 %v897
    %v1546 = vunpack.c.h.b16 %v897
    %v1547 = vunpack.c.l.b16 %v898
    %v1548 = vunpack.c.h.b16 %v898
    %v1549 = vunpack.c.l.b16 %v899
    %v1550 = vunpack.c.h.b16 %v899
    %v1551 = vunpack.c.l.b16 %v900
    %v1552 = vunpack.c.h.b16 %v900
    %v1553 = vunpack.c.l.b16 %v901
    %v1554 = vunpack.c.h.b16 %v901
    %v1555 = vunpack.c.l.b16 %v902
    %v1556 = vunpack.c.h.b16 %v902
    %v1557 = vunpack.c.l.b16 %v903
    %v1558 = vunpack.c.h.b16 %v903
    %v1559 = vunpack.c.l.b16 %v904
    %v1560 = vunpack.c.h.b16 %v904
    %v1561 = vunpack.c.l.b16 %v905
    %v1562 = vunpack.c.h.b16 %v905
    %v1563 = vunpack.c.l.b16 %v906
    %v1564 = vunpack.c.h.b16 %v906
    %v1565 = vunpack.c.l.b16 %v907
    %v1566 = vunpack.c.h.b16 %v907
    %v1567 = vunpack.c.l.b16 %v908
    %v1568 = vunpack.c.h.b16 %v908
    %v1569 = vunpack.c.l.b16 %v909
    %v1570 = vunpack.c.h.b16 %v909
    %v1571 = vunpack.c.l.b16 %v910
    %v1572 = vunpack.c.h.b16 %v910
    %v1573 = vunpack.c.l.b16 %v911
    %v1574 = vunpack.c.h.b16 %v911
    %v1575 = vunpack.c.l.b16 %v912
    %v1576 = vunpack.c.h.b16 %v912
    %v1577 = vunpack.c.l.b16 %v913
    %v1578 = vunpack.c.h.b16 %v913
    %v1579 = vunpack.c.l.b16 %v914
    %v1580 = vunpack.c.h.b16 %v914
    %v1581 = vunpack.c.l.b16 %v915
    %v1582 = vunpack.c.h.b16 %v915
    %v1583 = vunpack.c.l.b16 %v916
    %v1584 = vunpack.c.h.b16 %v916
    %v1585 = vunpack.c.l.b16 %v917
    %v1586 = vunpack.c.h.b16 %v917
    %v1587 = vunpack.c.l.b16 %v918
    %v1588 = vunpack.c.h.b16 %v918
    %v1589 = vunpack.c.l.b16 %v919
    %v1590 = vunpack.c.h.b16 %v919
    %v1591 = vunpack.c.l.b16 %v920
    %v1592 = vunpack.c.h.b16 %v920
    %v1593 = vunpack.c.l.b16 %v921
    %v1594 = vunpack.c.h.b16 %v921
    %v1595 = vunpack.c.l.b16 %v922
    %v1596 = vunpack.c.h.b16 %v922
    %v1597 = vunpack.c.l.b16 %v923
    %v1598 = vunpack.c.h.b16 %v923
    %v1599 = vunpack.c.l.b16 %v924
    %v1600 = vunpack.c.h.b16 %v924
    %v1601 = vunpack.c.l.b16 %v925
    %v1602 = vunpack.c.h.b16 %v925
    %v1603 = vunpack.c.l.b16 %v926
    %v1604 = vunpack.c.h.b16 %v926
    %v1605 = vunpack.c.l.b16 %v927
    %v1606 = vunpack.c.h.b16 %v927
    %v1607 = vunpack.c.l.b16 %v928
    %v1608 = vunpack.c.h.b16 %v928
    %v1609 = vunpack.c.l.b16 %v929
    %v1610 = vunpack.c.h.b16 %v929
    %v1611 = vunpack.c.l.b16 %v930
    %v1612 = vunpack.c.h.b16 %v930
    %v1613 = vunpack.c.l.b16 %v931
    %v1614 = vunpack.c.h.b16 %v931
    %v1615 = vunpack.c.l.b16 %v932
    %v1616 = vunpack.c.h.b16 %v932
    %v1617 = vunpack.c.l.b16 %v933
    %v1618 = vunpack.c.h.b16 %v933
    %v1619 = vunpack.c.l.b16 %v934
    %v1620 = vunpack.c.h.b16 %v934
    %v1621 = vunpack.c.l.b16 %v935
    %v1622 = vunpack.c.h.b16 %v935
    %v1623 = vunpack.c.l.b16 %v936
    %v1624 = vunpack.c.h.b16 %v936
    %v1625 = vunpack.c.l.b16 %v937
    %v1626 = vunpack.c.h.b16 %v937
    %v1627 = vunpack.c.l.b16 %v938
    %v1628 = vunpack.c.h.b16 %v938
    %v1629 = vunpack.c.l.b16 %v939
    %v1630 = vunpack.c.h.b16 %v939
    %v1631 = vunpack.c.l.b16 %v940
    %v1632 = vunpack.c.h.b16 %v940
    %v1633 = vunpack.c.l.b16 %v941
    %v1634 = vunpack.c.h.b16 %v941
    %v1635 = vunpack.c.l.b16 %v942
    %v1636 = vunpack.c.h.b16 %v942
    %v1637 = vunpack.c.l.b16 %v943
    %v1638 = vunpack.c.h.b16 %v943
    %v1639 = vunpack.c.l.b16 %v944
    %v1640 = vunpack.c.h.b16 %v944
    %v1641 = vunpack.c.l.b16 %v945
    %v1642 = vunpack.c.h.b16 %v945
    %v1643 = vunpack.c.l.b16 %v946
    %v1644 = vunpack.c.h.b16 %v946
    %v1645 = vunpack.c.l.b16 %v947
    %v1646 = vunpack.c.h.b16 %v947
    %v1647 = vunpack.c.l.b16 %v948
    %v1648 = vunpack.c.h.b16 %v948
    %v1649 = vunpack.c.l.b16 %v949
    %v1650 = vunpack.c.h.b16 %v949
    %v1651 = vunpack.c.l.b16 %v950
    %v1652 = vunpack.c.h.b16 %v950
    %v1653 = vunpack.c.l.b16 %v951
    %v1654 = vunpack.c.h.b16 %v951
    %v1655 = vunpack.c.l.b16 %v952
    %v1656 = vunpack.c.h.b16 %v952
    %v1657 = vunpack.c.l.b16 %v953
    %v1658 = vunpack.c.h.b16 %v953
    %v1659 = vunpack.c.l.b16 %v954
    %v1660 = vunpack.c.h.b16 %v954
    %v1661 = vunpack.c.l.b16 %v955
    %v1662 = vunpack.c.h.b16 %v955
    %v1663 = vunpack.c.l.b16 %v956
    %v1664 = vunpack.c.h.b16 %v956
    %v1665 = vunpack.c.l.b16 %v957
    %v1666 = vunpack.c.h.b16 %v957
    %v1667 = vunpack.c.l.b16 %v958
    %v1668 = vunpack.c.h.b16 %v958
    %v1669 = vunpack.c.l.b16 %v959
    %v1670 = vunpack.c.h.b16 %v959
    %v1671 = vunpack.c.l.b16 %v960
    %v1672 = vunpack.c.h.b16 %v960
    %v1673 = vunpack.c.l.b16 %v961
    %v1674 = vunpack.c.h.b16 %v961
    %v1675 = vunpack.c.l.b16 %v962
    %v1676 = vunpack.c.h.b16 %v962
    %v1677 = vunpack.c.l.b16 %v963
    %v1678 = vunpack.c.h.b16 %v963
    %v1679 = vunpack.c.l.b16 %v964
    %v1680 = vunpack.c.h.b16 %v964
    %v1681 = vunpack.c.l.b16 %v965
    %v1682 = vunpack.c.h.b16 %v965
    %v1683 = vunpack.c.l.b16 %v966
    %v1684 = vunpack.c.h.b16 %v966
    %v1685 = vunpack.c.l.b16 %v967
    %v1686 = vunpack.c.h.b16 %v967
    %v1687 = vunpack.c.l.b16 %v968
    %v1688 = vunpack.c.h.b16 %v968
    %v1689 = vunpack.c.l.b16 %v969
    %v1690 = vunpack.c.h.b16 %v969
    %v1691 = vunpack.c.l.b16 %v970
    %v1692 = vunpack.c.h.b16 %v970
    %v1693 = vunpack.c.l.b16 %v971
    %v1694 = vunpack.c.h.b16 %v971
    %v1695 = vunpack.c.l.b16 %v972
    %v1696 = vunpack.c.h.b16 %v972
    %v1697 = vunpack.c.l.b16 %v973
    %v1698 = vunpack.c.h.b16 %v973
    %v1699 = vunpack.c.l.b16 %v974
    %v1700 = vunpack.c.h.b16 %v974
    %v1701 = vunpack.c.l.b16 %v975
    %v1702 = vunpack.c.h.b16 %v975
    %v1703 = vunpack.c.l.b16 %v976
    %v1704 = vunpack.c.h.b16 %v976
    %v1705 = vunpack.c.l.b16 %v977
    %v1706 = vunpack.c.h.b16 %v977
    %v1707 = vunpack.c.l.b16 %v978
    %v1708 = vunpack.c.h.b16 %v978
    %v1709 = vunpack.c.l.b16 %v979
    %v1710 = vunpack.c.h.b16 %v979
    %v1711 = vunpack.c.l.b16 %v980
    %v1712 = vunpack.c.h.b16 %v980
    %v1713 = vunpack.c.l.b16 %v981
    %v1714 = vunpack.c.h.b16 %v981
    %v1715 = vunpack.c.l.b16 %v982
    %v1716 = vunpack.c.h.b16 %v982
    %v1717 = vunpack.c.l.b16 %v983
    %v1718 = vunpack.c.h.b16 %v983
    %v1719 = vunpack.c.l.b16 %v984
    %v1720 = vunpack.c.h.b16 %v984
    %v1721 = vunpack.c.l.b16 %v985
    %v1722 = vunpack.c.h.b16 %v985
    %v1723 = vunpack.c.l.b16 %v986
    %v1724 = vunpack.c.h.b16 %v986
    %v1725 = vunpack.c.l.b16 %v987
    %v1726 = vunpack.c.h.b16 %v987
    %v1727 = vunpack.c.l.b16 %v988
    %v1728 = vunpack.c.h.b16 %v988
    %v1729 = vunpack.c.l.b16 %v989
    %v1730 = vunpack.c.h.b16 %v989
    %v1731 = vunpack.c.l.b16 %v990
    %v1732 = vunpack.c.h.b16 %v990
    %v1733 = vunpack.c.l.b16 %v991
    %v1734 = vunpack.c.h.b16 %v991
    %v1735 = vunpack.c.l.b16 %v992
    %v1736 = vunpack.c.h.b16 %v992
    %v1737 = vunpack.c.l.b16 %v993
    %v1738 = vunpack.c.h.b16 %v993
    %v1739 = vunpack.c.l.b16 %v994
    %v1740 = vunpack.c.h.b16 %v994
    %v1741 = vunpack.c.l.b16 %v995
    %v1742 = vunpack.c.h.b16 %v995
    %v1743 = vunpack.c.l.b16 %v996
    %v1744 = vunpack.c.h.b16 %v996
    %v1745 = vunpack.c.l.b16 %v997
    %v1746 = vunpack.c.h.b16 %v997
    %v1747 = vunpack.c.l.b16 %v998
    %v1748 = vunpack.c.h.b16 %v998
    %v1749 = vunpack.c.l.b16 %v999
    %v1750 = vunpack.c.h.b16 %v999
    %v1751 = vunpack.c.l.b16 %v1000
    %v1752 = vunpack.c.h.b16 %v1000
    %v1753 = vunpack.c.l.b16 %v1001
    %v1754 = vunpack.c.h.b16 %v1001
    %v1755 = vunpack.c.l.b16 %v1002
    %v1756 = vunpack.c.h.b16 %v1002
    %v1757 = vunpack.c.l.b16 %v1003
    %v1758 = vunpack.c.h.b16 %v1003
    %v1759 = vunpack.c.l.b16 %v1004
    %v1760 = vunpack.c.h.b16 %v1004
    %v1761 = vunpack.c.l.b16 %v1005
    %v1762 = vunpack.c.h.b16 %v1005
    %v1763 = vunpack.c.l.b16 %v1006
    %v1764 = vunpack.c.h.b16 %v1006
    %v1765 = vunpack.c.l.b16 %v1007
    %v1766 = vunpack.c.h.b16 %v1007
    %v1767 = vunpack.c.l.b16 %v1008
    %v1768 = vunpack.c.h.b16 %v1008
    %v1769 = vunpack.c.l.b16 %v1009
    %v1770 = vunpack.c.h.b16 %v1009
    %v1771 = vunpack.c.l.b16 %v1010
    %v1772 = vunpack.c.h.b16 %v1010
    %v1773 = vunpack.c.l.b16 %v1011
    %v1774 = vunpack.c.h.b16 %v1011
    %v1775 = vunpack.c.l.b16 %v1012
    %v1776 = vunpack.c.h.b16 %v1012
    %v1777 = vunpack.c.l.b16 %v1013
    %v1778 = vunpack.c.h.b16 %v1013
    %v1779 = vunpack.c.l.b16 %v1014
    %v1780 = vunpack.c.h.b16 %v1014
    %v1781 = vunpack.c.l.b16 %v1015
    %v1782 = vunpack.c.h.b16 %v1015
    %v1783 = vunpack.c.l.b16 %v1016
    %v1784 = vunpack.c.h.b16 %v1016
    %v1785 = vunpack.c.l.b16 %v1017
    %v1786 = vunpack.c.h.b16 %v1017
    %v1787 = vunpack.c.l.b16 %v1018
    %v1788 = vunpack.c.h.b16 %v1018
    %v1789 = vunpack.c.l.b16 %v1019
    %v1790 = vunpack.c.h.b16 %v1019
    %v1791 = vunpack.c.l.b16 %v1020
    %v1792 = vunpack.c.h.b16 %v1020
    %v1793 = vunpack.c.l.b16 %v1021
    %v1794 = vunpack.c.h.b16 %v1021
    %v1795 = vunpack.c.l.b16 %v1022
    %v1796 = vunpack.c.h.b16 %v1022
    %v1797 = vunpack.c.l.b16 %v1023
    %v1798 = vunpack.c.h.b16 %v1023
    %v1799 = vunpack.c.l.b16 %v1024
    %v1800 = vunpack.c.h.b16 %v1024
    %v1801 = vunpack.c.l.b16 %v1025
    %v1802 = vunpack.c.h.b16 %v1025
    %v1803 = vunpack.c.l.b16 %v1026
    %v1804 = vunpack.c.h.b16 %v1026
    %v1805 = vunpack.c.l.b16 %v1027
    %v1806 = vunpack.c.h.b16 %v1027
    %v1807 = vunpack.c.l.b16 %v1028
    %v1808 = vunpack.c.h.b16 %v1028
    %v1809 = vunpack.c.l.b16 %v1029
    %v1810 = vunpack.c.h.b16 %v1029
    %v1811 = vunpack.c.l.b16 %v1030
    %v1812 = vunpack.c.h.b16 %v1030
    %v1813 = vunpack.c.l.b16 %v1031
    %v1814 = vunpack.c.h.b16 %v1031
    %v1815 = vunpack.c.l.b16 %v1032
    %v1816 = vunpack.c.h.b16 %v1032
    %v1817 = vunpack.c.l.b16 %v1033
    %v1818 = vunpack.c.h.b16 %v1033
    %v1819 = vunpack.c.l.b16 %v1034
    %v1820 = vunpack.c.h.b16 %v1034
    %v1821 = vunpack.c.l.b16 %v1035
    %v1822 = vunpack.c.h.b16 %v1035
    %v1823 = vunpack.c.l.b16 %v1036
    %v1824 = vunpack.c.h.b16 %v1036
    %v1825 = vunpack.c.l.b16 %v1037
    %v1826 = vunpack.c.h.b16 %v1037
    %v1827 = vunpack.c.l.b16 %v1038
    %v1828 = vunpack.c.h.b16 %v1038
    %v1829 = vunpack.c.l.b16 %v1039
    %v1830 = vunpack.c.h.b16 %v1039
    %v1831 = vunpack.c.l.b16 %v1040
    %v1832 = vunpack.c.h.b16 %v1040
    %v1833 = vunpack.c.l.b16 %v1041
    %v1834 = vunpack.c.h.b16 %v1041
    %v1835 = vunpack.c.l.b16 %v1042
    %v1836 = vunpack.c.h.b16 %v1042
    %v1837 = vunpack.c.l.b16 %v1043
    %v1838 = vunpack.c.h.b16 %v1043
    %v1839 = vunpack.c.l.b16 %v1044
    %v1840 = vunpack.c.h.b16 %v1044
    %v1841 = vunpack.c.l.b16 %v1045
    %v1842 = vunpack.c.h.b16 %v1045
    %v1843 = vunpack.c.l.b16 %v1046
    %v1844 = vunpack.c.h.b16 %v1046
    %v1845 = vunpack.c.l.b16 %v1047
    %v1846 = vunpack.c.h.b16 %v1047
    %v1847 = vunpack.c.l.b16 %v1048
    %v1848 = vunpack.c.h.b16 %v1048
    %v1849 = vunpack.c.l.b16 %v1049
    %v1850 = vunpack.c.h.b16 %v1049
    %v1851 = vunpack.c.l.b16 %v1050
    %v1852 = vunpack.c.h.b16 %v1050
    %v1853 = vunpack.c.l.b16 %v1051
    %v1854 = vunpack.c.h.b16 %v1051
    %v1855 = vunpack.c.l.b16 %v1052
    %v1856 = vunpack.c.h.b16 %v1052
    %v1857 = vunpack.c.l.b16 %v1053
    %v1858 = vunpack.c.h.b16 %v1053
    %v1859 = vunpack.c.l.b16 %v1054
    %v1860 = vunpack.c.h.b16 %v1054
    %v1861 = vunpack.c.l.b16 %v1055
    %v1862 = vunpack.c.h.b16 %v1055
    %v1863 = vunpack.c.l.b16 %v1056
    %v1864 = vunpack.c.h.b16 %v1056
    %v1865 = vunpack.c.l.b16 %v1057
    %v1866 = vunpack.c.h.b16 %v1057
    %v1867 = vunpack.c.l.b16 %v1058
    %v1868 = vunpack.c.h.b16 %v1058
    %v1869 = vpack.c.b16 %v1365, %v1357
    %v1870 = vpack.c.b16 %v1366, %v1358
    %v1871 = vpack.c.b16 %v1367, %v1359
    %v1872 = vpack.c.b16 %v1368, %v1360
    %v1873 = vpack.c.b16 %v1369, %v1361
    %v1874 = vpack.c.b16 %v1370, %v1362
    %v1875 = vpack.c.b16 %v1371, %v1363
    %v1876 = vpack.c.b16 %v1372, %v1364
    %v1877 = vpack.c.b16 %v1381, %v1373
    %v1878 = vpack.c.b16 %v1382, %v1374
    %v1879 = vpack.c.b16 %v1383, %v1375
    %v1880 = vpack.c.b16 %v1384, %v1376
    %v1881 = vpack.c.b16 %v1385, %v1377
    %v1882 = vpack.c.b16 %v1386, %v1378
    %v1883 = vpack.c.b16 %v1387, %v1379
    %v1884 = vpack.c.b16 %v1388, %v1380
    %v1885 = vpack.c.b16 %v1397, %v1389
    %v1886 = vpack.c.b16 %v1398, %v1390
    %v1887 = vpack.c.b16 %v1399, %v1391
    %v1888 = vpack.c.b16 %v1400, %v1392
    %v1889 = vpack.c.b16 %v1401, %v1393
    %v1890 = vpack.c.b16 %v1402, %v1394
    %v1891 = vpack.c.b16 %v1403, %v1395
    %v1892 = vpack.c.b16 %v1404, %v1396
    %v1893 = vpack.c.b16 %v1413, %v1405
    %v1894 = vpack.c.b16 %v1414, %v1406
    %v1895 = vpack.c.b16 %v1415, %v1407
    %v1896 = vpack.c.b16 %v1416, %v1408
    %v1897 = vpack.c.b16 %v1417, %v1409
    %v1898 = vpack.c.b16 %v1418, %v1410
    %v1899 = vpack.c.b16 %v1419, %v1411
    %v1900 = vpack.c.b16 %v1420, %v1412
    %v1901 = vpack.c.b16 %v1429, %v1421
    %v1902 = vpack.c.b16 %v1430, %v1422
    %v1903 = vpack.c.b16 %v1431, %v1423
    %v1904 = vpack.c.b16 %v1432, %v1424
    %v1905 = vpack.c.b16 %v1433, %v1425
    %v1906 = vpack.c.b16 %v1434, %v1426
    %v1907 = vpack.c.b16 %v1435, %v1427
    %v1908 = vpack.c.b16 %v1436, %v1428
    %v1909 = vpack.c.b16 %v1445, %v1437
    %v1910 = vpack.c.b16 %v1446, %v1438
    %v1911 = vpack.c.b16 %v1447, %v1439
    %v1912 = vpack.c.b16 %v1448, %v1440
    %v1913 = vpack.c.b16 %v1449, %v1441
    %v1914 = vpack.c.b16 %v1450, %v1442
    %v1915 = vpack.c.b16 %v1451, %v1443
    %v1916 = vpack.c.b16 %v1452, %v1444
    %v1917 = vpack.c.b16 %v1461, %v1453
    %v1918 = vpack.c.b16 %v1462, %v1454
    %v1919 = vpack.c.b16 %v1463, %v1455
    %v1920 = vpack.c.b16 %v1464, %v1456
    %v1921 = vpack.c.b16 %v1465, %v1457
    %v1922 = vpack.c.b16 %v1466, %v1458
    %v1923 = vpack.c.b16 %v1467, %v1459
    %v1924 = vpack.c.b16 %v1468, %v1460
    %v1925 = vpack.c.b16 %v1477, %v1469
    %v1926 = vpack.c.b16 %v1478, %v1470
    %v1927 = vpack.c.b16 %v1479, %v1471
    %v1928 = vpack.c.b16 %v1480, %v1472
    %v1929 = vpack.c.b16 %v1481, %v1473
    %v1930 = vpack.c.b16 %v1482, %v1474
    %v1931 = vpack.c.b16 %v1483, %v1475
    %v1932 = vpack.c.b16 %v1484, %v1476
    %v1933 = vpack.c.b16 %v1493, %v1485
    %v1934 = vpack.c.b16 %v1494, %v1486
    %v1935 = vpack.c.b16 %v1495, %v1487
    %v1936 = vpack.c.b16 %v1496, %v1488
    %v1937 = vpack.c.b16 %v1497, %v1489
    %v1938 = vpack.c.b16 %v1498, %v1490
    %v1939 = vpack.c.b16 %v1499, %v1491
    %v1940 = vpack.c.b16 %v1500, %v1492
    %v1941 = vpack.c.b16 %v1509, %v1501
    %v1942 = vpack.c.b16 %v1510, %v1502
    %v1943 = vpack.c.b16 %v1511, %v1503
    %v1944 = vpack.c.b16 %v1512, %v1504
    %v1945 = vpack.c.b16 %v1513, %v1505
    %v1946 = vpack.c.b16 %v1514, %v1506
    %v1947 = vpack.c.b16 %v1515, %v1507
    %v1948 = vpack.c.b16 %v1516, %v1508
    %v1949 = vpack.c.b16 %v1525, %v1517
    %v1950 = vpack.c.b16 %v1526, %v1518
    %v1951 = vpack.c.b16 %v1527, %v1519
    %v1952 = vpack.c.b16 %v1528, %v1520
    %v1953 = vpack.c.b16 %v1529, %v1521
    %v1954 = vpack.c.b16 %v1530, %v1522
    %v1955 = vpack.c.b16 %v1531, %v1523
    %v1956 = vpack.c.b16 %v1532, %v1524
    %v1957 = vpack.c.b16 %v1541, %v1533
    %v1958 = vpack.c.b16 %v1542, %v1534
    %v1959 = vpack.c.b16 %v1543, %v1535
    %v1960 = vpack.c.b16 %v1544, %v1536
    %v1961 = vpack.c.b16 %v1545, %v1537
    %v1962 = vpack.c.b16 %v1546, %v1538
    %v1963 = vpack.c.b16 %v1547, %v1539
    %v1964 = vpack.c.b16 %v1548, %v1540
    %v1965 = vpack.c.b16 %v1557, %v1549
    %v1966 = vpack.c.b16 %v1558, %v1550
    %v1967 = vpack.c.b16 %v1559, %v1551
    %v1968 = vpack.c.b16 %v1560, %v1552
    %v1969 = vpack.c.b16 %v1561, %v1553
    %v1970 = vpack.c.b16 %v1562, %v1554
    %v1971 = vpack.c.b16 %v1563, %v1555
    %v1972 = vpack.c.b16 %v1564, %v1556
    %v1973 = vpack.c.b16 %v1573, %v1565
    %v1974 = vpack.c.b16 %v1574, %v1566
    %v1975 = vpack.c.b16 %v1575, %v1567
    %v1976 = vpack.c.b16 %v1576, %v1568
    %v1977 = vpack.c.b16 %v1577, %v1569
    %v1978 = vpack.c.b16 %v1578, %v1570
    %v1979 = vpack.c.b16 %v1579, %v1571
    %v1980 = vpack.c.b16 %v1580, %v1572
    %v1981 = vpack.c.b16 %v1589, %v1581
    %v1982 = vpack.c.b16 %v1590, %v1582
    %v1983 = vpack.c.b16 %v1591, %v1583
    %v1984 = vpack.c.b16 %v1592, %v1584
    %v1985 = vpack.c.b16 %v1593, %v1585
    %v1986 = vpack.c.b16 %v1594, %v1586
    %v1987 = vpack.c.b16 %v1595, %v1587
    %v1988 = vpack.c.b16 %v1596, %v1588
    %v1989 = vpack.c.b16 %v1605, %v1597
    %v1990 = vpack.c.b16 %v1606, %v1598
    %v1991 = vpack.c.b16 %v1607, %v1599
    %v1992 = vpack.c.b16 %v1608, %v1600
    %v1993 = vpack.c.b16 %v1609, %v1601
    %v1994 = vpack.c.b16 %v1610, %v1602
    %v1995 = vpack.c.b16 %v1611, %v1603
    %v1996 = vpack.c.b16 %v1612, %v1604
    %v1997 = vpack.c.b16 %v1621, %v1613
    %v1998 = vpack.c.b16 %v1622, %v1614
    %v1999 = vpack.c.b16 %v1623, %v1615
    %v2000 = vpack.c.b16 %v1624, %v1616
    %v2001 = vpack.c.b16 %v1625, %v1617
    %v2002 = vpack.c.b16 %v1626, %v1618
    %v2003 = vpack.c.b16 %v1627, %v1619
    %v2004 = vpack.c.b16 %v1628, %v1620
    %v2005 = vpack.c.b16 %v1637, %v1629
    %v2006 = vpack.c.b16 %v1638, %v1630
    %v2007 = vpack.c.b16 %v1639, %v1631
    %v2008 = vpack.c.b16 %v1640, %v1632
    %v2009 = vpack.c.b16 %v1641, %v1633
    %v2010 = vpack.c.b16 %v1642, %v1634
    %v2011 = vpack.c.b16 %v1643, %v1635
    %v2012 = vpack.c.b16 %v1644, %v1636
    %v2013 = vpack.c.b16 %v1653, %v1645
    %v2014 = vpack.c.b16 %v1654, %v1646
    %v2015 = vpack.c.b16 %v1655, %v1647
    %v2016 = vpack.c.b16 %v1656, %v1648
    %v2017 = vpack.c.b16 %v1657, %v1649
    %v2018 = vpack.c.b16 %v1658, %v1650
    %v2019 = vpack.c.b16 %v1659, %v1651
    %v2020 = vpack.c.b16 %v1660, %v1652
    %v2021 = vpack.c.b16 %v1669, %v1661
    %v2022 = vpack.c.b16 %v1670, %v1662
    %v2023 = vpack.c.b16 %v1671, %v1663
    %v2024 = vpack.c.b16 %v1672, %v1664
    %v2025 = vpack.c.b16 %v1673, %v1665
    %v2026 = vpack.c.b16 %v1674, %v1666
    %v2027 = vpack.c.b16 %v1675, %v1667
    %v2028 = vpack.c.b16 %v1676, %v1668
    %v2029 = vpack.c.b16 %v1685, %v1677
    %v2030 = vpack.c.b16 %v1686, %v1678
    %v2031 = vpack.c.b16 %v1687, %v1679
    %v2032 = vpack.c.b16 %v1688, %v1680
    %v2033 = vpack.c.b16 %v1689, %v1681
    %v2034 = vpack.c.b16 %v1690, %v1682
    %v2035 = vpack.c.b16 %v1691, %v1683
    %v2036 = vpack.c.b16 %v1692, %v1684
    %v2037 = vpack.c.b16 %v1701, %v1693
    %v2038 = vpack.c.b16 %v1702, %v1694
    %v2039 = vpack.c.b16 %v1703, %v1695
    %v2040 = vpack.c.b16 %v1704, %v1696
    %v2041 = vpack.c.b16 %v1705, %v1697
    %v2042 = vpack.c.b16 %v1706, %v1698
    %v2043 = vpack.c.b16 %v1707, %v1699
    %v2044 = vpack.c.b16 %v1708, %v1700
    %v2045 = vpack.c.b16 %v1717, %v1709
    %v2046 = vpack.c.b16 %v1718, %v1710
    %v2047 = vpack.c.b16 %v1719, %v1711
    %v2048 = vpack.c.b16 %v1720, %v1712
    %v2049 = vpack.c.b16 %v1721, %v1713
    %v2050 = vpack.c.b16 %v1722, %v1714
    %v2051 = vpack.c.b16 %v1723, %v1715
    %v2052 = vpack.c.b16 %v1724, %v1716
    %v2053 = vpack.c.b16 %v1733, %v1725
    %v2054 = vpack.c.b16 %v1734, %v1726
    %v2055 = vpack.c.b16 %v1735, %v1727
    %v2056 = vpack.c.b16 %v1736, %v1728
    %v2057 = vpack.c.b16 %v1737, %v1729
    %v2058 = vpack.c.b16 %v1738, %v1730
    %v2059 = vpack.c.b16 %v1739, %v1731
    %v2060 = vpack.c.b16 %v1740, %v1732
    %v2061 = vpack.c.b16 %v1749, %v1741
    %v2062 = vpack.c.b16 %v1750, %v1742
    %v2063 = vpack.c.b16 %v1751, %v1743
    %v2064 = vpack.c.b16 %v1752, %v1744
    %v2065 = vpack.c.b16 %v1753, %v1745
    %v2066 = vpack.c.b16 %v1754, %v1746
    %v2067 = vpack.c.b16 %v1755, %v1747
    %v2068 = vpack.c.b16 %v1756, %v1748
    %v2069 = vpack.c.b16 %v1765, %v1757
    %v2070 = vpack.c.b16 %v1766, %v1758
    %v2071 = vpack.c.b16 %v1767, %v1759
    %v2072 = vpack.c.b16 %v1768, %v1760
    %v2073 = vpack.c.b16 %v1769, %v1761
    %v2074 = vpack.c.b16 %v1770, %v1762
    %v2075 = vpack.c.b16 %v1771, %v1763
    %v2076 = vpack.c.b16 %v1772, %v1764
    %v2077 = vpack.c.b16 %v1781, %v1773
    %v2078 = vpack.c.b16 %v1782, %v1774
    %v2079 = vpack.c.b16 %v1783, %v1775
    %v2080 = vpack.c.b16 %v1784, %v1776
    %v2081 = vpack.c.b16 %v1785, %v1777
    %v2082 = vpack.c.b16 %v1786, %v1778
    %v2083 = vpack.c.b16 %v1787, %v1779
    %v2084 = vpack.c.b16 %v1788, %v1780
    %v2085 = vpack.c.b16 %v1797, %v1789
    %v2086 = vpack.c.b16 %v1798, %v1790
    %v2087 = vpack.c.b16 %v1799, %v1791
    %v2088 = vpack.c.b16 %v1800, %v1792
    %v2089 = vpack.c.b16 %v1801, %v1793
    %v2090 = vpack.c.b16 %v1802, %v1794
    %v2091 = vpack.c.b16 %v1803, %v1795
    %v2092 = vpack.c.b16 %v1804, %v1796
    %v2093 = vpack.c.b16 %v1813, %v1805
    %v2094 = vpack.c.b16 %v1814, %v1806
    %v2095 = vpack.c.b16 %v1815, %v1807
    %v2096 = vpack.c.b16 %v1816, %v1808
    %v2097 = vpack.c.b16 %v1817, %v1809
    %v2098 = vpack.c.b16 %v1818, %v1810
    %v2099 = vpack.c.b16 %v1819, %v1811
    %v2100 = vpack.c.b16 %v1820, %v1812
    %v2101 = vpack.c.b16 %v1829, %v1821
    %v2102 = vpack.c.b16 %v1830, %v1822
    %v2103 = vpack.c.b16 %v1831, %v1823
    %v2104 = vpack.c.b16 %v1832, %v1824
    %v2105 = vpack.c.b16 %v1833, %v1825
    %v2106 = vpack.c.b16 %v1834, %v1826
    %v2107 = vpack.c.b16 %v1835, %v1827
    %v2108 = vpack.c.b16 %v1836, %v1828
    %v2109 = vpack.c.b16 %v1845, %v1837
    %v2110 = vpack.c.b16 %v1846, %v1838
    %v2111 = vpack.c.b16 %v1847, %v1839
    %v2112 = vpack.c.b16 %v1848, %v1840
    %v2113 = vpack.c.b16 %v1849, %v1841
    %v2114 = vpack.c.b16 %v1850, %v1842
    %v2115 = vpack.c.b16 %v1851, %v1843
    %v2116 = vpack.c.b16 %v1852, %v1844
    %v2117 = vpack.c.b16 %v1861, %v1853
    %v2118 = vpack.c.b16 %v1862, %v1854
    %v2119 = vpack.c.b16 %v1863, %v1855
    %v2120 = vpack.c.b16 %v1864, %v1856
    %v2121 = vpack.c.b16 %v1865, %v1857
    %v2122 = vpack.c.b16 %v1866, %v1858
    %v2123 = vpack.c.b16 %v1867, %v1859
    %v2124 = vpack.c.b16 %v1868, %v1860
    %2381 = vmatprep.subr.bf16.mxu0 %v1870
    %2382 = vmatpush1.bf16.msra.mxu0 %v1869
    %2383 = vmatprep.subr.bf16.mxu0 %v1878
    %2384 = vmatpush1.bf16.msra.mxu0 %v1877
    %2385 = vmatprep.subr.bf16.mxu0 %v1886
    %2386 = vmatpush1.bf16.msra.mxu0 %v1885
    %2387 = vmatprep.subr.bf16.mxu0 %v1894
    %2388 = vmatpush1.bf16.msra.mxu0 %v1893
    %2389 = vmatprep.subr.bf16.mxu0 %v1902
    %2390 = vmatpush1.bf16.msra.mxu0 %v1901
    %2391 = vmatprep.subr.bf16.mxu0 %v1910
    %2392 = vmatpush1.bf16.msra.mxu0 %v1909
    %2393 = vmatprep.subr.bf16.mxu0 %v1918
    %2394 = vmatpush1.bf16.msra.mxu0 %v1917
    %2395 = vmatprep.subr.bf16.mxu0 %v1926
    %2396 = vmatpush1.bf16.msra.mxu0 %v1925
    %2397 = vmatprep.subr.bf16.mxu0 %v1934
    %2398 = vmatpush1.bf16.msra.mxu0 %v1933
    %2399 = vmatprep.subr.bf16.mxu0 %v1942
    %2400 = vmatpush1.bf16.msra.mxu0 %v1941
    %2401 = vmatprep.subr.bf16.mxu0 %v1950
    %2402 = vmatpush1.bf16.msra.mxu0 %v1949
    %2403 = vmatprep.subr.bf16.mxu0 %v1958
    %2404 = vmatpush1.bf16.msra.mxu0 %v1957
    %2405 = vmatprep.subr.bf16.mxu0 %v1966
    %2406 = vmatpush1.bf16.msra.mxu0 %v1965
    %2407 = vmatprep.subr.bf16.mxu0 %v1974
    %2408 = vmatpush1.bf16.msra.mxu0 %v1973
    %2409 = vmatprep.subr.bf16.mxu0 %v1982
    %2410 = vmatpush1.bf16.msra.mxu0 %v1981
    %2411 = vmatprep.subr.bf16.mxu0 %v1990
    %2412 = vmatpush1.bf16.msra.mxu0 %v1989
    %2413 = vmatprep.mubr.bf16.mxu0 %v800
    %2414 = vmatmul.mubr.bf16.gmra.mrb[0].mxu0 %v799
    %v2415 = vpop.f32.mrb[0].mxu0
    %v2416 = vadd.f32 %v1064, %v2415
    %v2417 = vpop.f32.mrb[0].mxu0
    %v2418 = vadd.f32 %v1068, %v2417
    %v2419 = vpop.f32.mrb[0].mxu0
    %v2420 = vadd.f32 %v1064, %v2419
    %v2421 = vpop.f32.mrb[0].mxu0
    %v2422 = vadd.f32 %v1068, %v2421
    %2423 = vdwg.mxu0
    %2424 = vmatprep.subr.bf16.mxu0 %v1998
    %2425 = vmatpush1.bf16.msra.mxu0 %v1997
    %2426 = vmatprep.subr.bf16.mxu0 %v2006
    %2427 = vmatpush1.bf16.msra.mxu0 %v2005
    %2428 = vmatprep.subr.bf16.mxu0 %v2014
    %2429 = vmatpush1.bf16.msra.mxu0 %v2013
    %2430 = vmatprep.subr.bf16.mxu0 %v2022
    %2431 = vmatpush1.bf16.msra.mxu0 %v2021
    %2432 = vmatprep.subr.bf16.mxu0 %v2030
    %2433 = vmatpush1.bf16.msra.mxu0 %v2029
    %2434 = vmatprep.subr.bf16.mxu0 %v2038
    %2435 = vmatpush1.bf16.msra.mxu0 %v2037
    %2436 = vmatprep.subr.bf16.mxu0 %v2046
    %2437 = vmatpush1.bf16.msra.mxu0 %v2045
    %2438 = vmatprep.subr.bf16.mxu0 %v2054
    %2439 = vmatpush1.bf16.msra.mxu0 %v2053
    %2440 = vmatprep.subr.bf16.mxu0 %v2062
    %2441 = vmatpush1.bf16.msra.mxu0 %v2061
    %2442 = vmatprep.subr.bf16.mxu0 %v2070
    %2443 = vmatpush1.bf16.msra.mxu0 %v2069
    %2444 = vmatprep.subr.bf16.mxu0 %v2078
    %2445 = vmatpush1.bf16.msra.mxu0 %v2077
    %2446 = vmatprep.subr.bf16.mxu0 %v2086
    %2447 = vmatpush1.bf16.msra.mxu0 %v2085
    %2448 = vmatprep.subr.bf16.mxu0 %v2094
    %2449 = vmatpush1.bf16.msra.mxu0 %v2093
    %2450 = vmatprep.subr.bf16.mxu0 %v2102
    %2451 = vmatpush1.bf16.msra.mxu0 %v2101
    %2452 = vmatprep.subr.bf16.mxu0 %v2110
    %2453 = vmatpush1.bf16.msra.mxu0 %v2109
    %2454 = vmatprep.subr.bf16.mxu0 %v2118
    %2455 = vmatpush1.bf16.msra.mxu0 %v2117
    %2456 = vmatprep.mubr.bf16.mxu0 %v802
    %2457 = vmatmul.mubr.bf16.gmra.mrb[0].mxu0 %v801
    %v2458 = vpop.f32.mrb[0].mxu0
    %v2459 = vadd.f32 %v2416, %v2458
    %v2460 = vpop.f32.mrb[0].mxu0
    %v2461 = vadd.f32 %v2418, %v2460
    %v2462 = vpop.f32.mrb[0].mxu0
    %v2463 = vadd.f32 %v2420, %v2462
    %v2464 = vpop.f32.mrb[0].mxu0
    %v2465 = vadd.f32 %v2422, %v2464
    %2466 = vdwg.mxu0
    %2467 = vmatprep.subr.bf16.mxu0 %v1872
    %2468 = vmatpush1.bf16.msra.mxu0 %v1871
    %2469 = vmatprep.subr.bf16.mxu0 %v1880
    %2470 = vmatpush1.bf16.msra.mxu0 %v1879
    %2471 = vmatprep.subr.bf16.mxu0 %v1888
    %2472 = vmatpush1.bf16.msra.mxu0 %v1887
    %2473 = vmatprep.subr.bf16.mxu0 %v1896
    %2474 = vmatpush1.bf16.msra.mxu0 %v1895
    %2475 = vmatprep.subr.bf16.mxu0 %v1904
    %2476 = vmatpush1.bf16.msra.mxu0 %v1903
    %2477 = vmatprep.subr.bf16.mxu0 %v1912
    %2478 = vmatpush1.bf16.msra.mxu0 %v1911
    %2479 = vmatprep.subr.bf16.mxu0 %v1920
    %2480 = vmatpush1.bf16.msra.mxu0 %v1919
    %2481 = vmatprep.subr.bf16.mxu0 %v1928
    %2482 = vmatpush1.bf16.msra.mxu0 %v1927
    %2483 = vmatprep.subr.bf16.mxu0 %v1936
    %2484 = vmatpush1.bf16.msra.mxu0 %v1935
    %2485 = vmatprep.subr.bf16.mxu0 %v1944
    %2486 = vmatpush1.bf16.msra.mxu0 %v1943
    %2487 = vmatprep.subr.bf16.mxu0 %v1952
    %2488 = vmatpush1.bf16.msra.mxu0 %v1951
    %2489 = vmatprep.subr.bf16.mxu0 %v1960
    %2490 = vmatpush1.bf16.msra.mxu0 %v1959
    %2491 = vmatprep.subr.bf16.mxu0 %v1968
    %2492 = vmatpush1.bf16.msra.mxu0 %v1967
    %2493 = vmatprep.subr.bf16.mxu0 %v1976
    %2494 = vmatpush1.bf16.msra.mxu0 %v1975
    %2495 = vmatprep.subr.bf16.mxu0 %v1984
    %2496 = vmatpush1.bf16.msra.mxu0 %v1983
    %2497 = vmatprep.subr.bf16.mxu0 %v1992
    %2498 = vmatpush1.bf16.msra.mxu0 %v1991
    %2499 = vmatprep.mubr.bf16.mxu0 %v800
    %2500 = vmatmul.mubr.bf16.gmra.mrb[0].mxu0 %v799
    %v2501 = vpop.f32.mrb[0].mxu0
    %v2502 = vadd.f32 %v1072, %v2501
    %v2503 = vpop.f32.mrb[0].mxu0
    %v2504 = vadd.f32 %v1076, %v2503
    %v2505 = vpop.f32.mrb[0].mxu0
    %v2506 = vadd.f32 %v1072, %v2505
    %v2507 = vpop.f32.mrb[0].mxu0
    %v2508 = vadd.f32 %v1076, %v2507
    %2509 = vdwg.mxu0
    %2510 = vmatprep.subr.bf16.mxu0 %v2000
    %2511 = vmatpush1.bf16.msra.mxu0 %v1999
    %2512 = vmatprep.subr.bf16.mxu0 %v2008
    %2513 = vmatpush1.bf16.msra.mxu0 %v2007
    %2514 = vmatprep.subr.bf16.mxu0 %v2016
    %2515 = vmatpush1.bf16.msra.mxu0 %v2015
    %2516 = vmatprep.subr.bf16.mxu0 %v2024
    %2517 = vmatpush1.bf16.msra.mxu0 %v2023
    %2518 = vmatprep.subr.bf16.mxu0 %v2032
    %2519 = vmatpush1.bf16.msra.mxu0 %v2031
    %2520 = vmatprep.subr.bf16.mxu0 %v2040
    %2521 = vmatpush1.bf16.msra.mxu0 %v2039
    %2522 = vmatprep.subr.bf16.mxu0 %v2048
    %2523 = vmatpush1.bf16.msra.mxu0 %v2047
    %2524 = vmatprep.subr.bf16.mxu0 %v2056
    %2525 = vmatpush1.bf16.msra.mxu0 %v2055
    %2526 = vmatprep.subr.bf16.mxu0 %v2064
    %2527 = vmatpush1.bf16.msra.mxu0 %v2063
    %2528 = vmatprep.subr.bf16.mxu0 %v2072
    %2529 = vmatpush1.bf16.msra.mxu0 %v2071
    %2530 = vmatprep.subr.bf16.mxu0 %v2080
    %2531 = vmatpush1.bf16.msra.mxu0 %v2079
    %2532 = vmatprep.subr.bf16.mxu0 %v2088
    %2533 = vmatpush1.bf16.msra.mxu0 %v2087
    %2534 = vmatprep.subr.bf16.mxu0 %v2096
    %2535 = vmatpush1.bf16.msra.mxu0 %v2095
    %2536 = vmatprep.subr.bf16.mxu0 %v2104
    %2537 = vmatpush1.bf16.msra.mxu0 %v2103
    %2538 = vmatprep.subr.bf16.mxu0 %v2112
    %2539 = vmatpush1.bf16.msra.mxu0 %v2111
    %2540 = vmatprep.subr.bf16.mxu0 %v2120
    %2541 = vmatpush1.bf16.msra.mxu0 %v2119
    %2542 = vmatprep.mubr.bf16.mxu0 %v802
    %2543 = vmatmul.mubr.bf16.gmra.mrb[0].mxu0 %v801
    %v2544 = vpop.f32.mrb[0].mxu0
    %v2545 = vadd.f32 %v2502, %v2544
    %v2546 = vpop.f32.mrb[0].mxu0
    %v2547 = vadd.f32 %v2504, %v2546
    %v2548 = vpop.f32.mrb[0].mxu0
    %v2549 = vadd.f32 %v2506, %v2548
    %v2550 = vpop.f32.mrb[0].mxu0
    %v2551 = vadd.f32 %v2508, %v2550
    %2552 = vdwg.mxu0
    %2553 = vmatprep.subr.bf16.mxu0 %v1874
    %2554 = vmatpush1.bf16.msra.mxu0 %v1873
    %2555 = vmatprep.subr.bf16.mxu0 %v1882
    %2556 = vmatpush1.bf16.msra.mxu0 %v1881
    %2557 = vmatprep.subr.bf16.mxu0 %v1890
    %2558 = vmatpush1.bf16.msra.mxu0 %v1889
    %2559 = vmatprep.subr.bf16.mxu0 %v1898
    %2560 = vmatpush1.bf16.msra.mxu0 %v1897
    %2561 = vmatprep.subr.bf16.mxu0 %v1906
    %2562 = vmatpush1.bf16.msra.mxu0 %v1905
    %2563 = vmatprep.subr.bf16.mxu0 %v1914
    %2564 = vmatpush1.bf16.msra.mxu0 %v1913
    %2565 = vmatprep.subr.bf16.mxu0 %v1922
    %2566 = vmatpush1.bf16.msra.mxu0 %v1921
    %2567 = vmatprep.subr.bf16.mxu0 %v1930
    %2568 = vmatpush1.bf16.msra.mxu0 %v1929
    %2569 = vmatprep.subr.bf16.mxu0 %v1938
    %2570 = vmatpush1.bf16.msra.mxu0 %v1937
    %2571 = vmatprep.subr.bf16.mxu0 %v1946
    %2572 = vmatpush1.bf16.msra.mxu0 %v1945
    %2573 = vmatprep.subr.bf16.mxu0 %v1954
    %2574 = vmatpush1.bf16.msra.mxu0 %v1953
    %2575 = vmatprep.subr.bf16.mxu0 %v1962
    %2576 = vmatpush1.bf16.msra.mxu0 %v1961
    %2577 = vmatprep.subr.bf16.mxu0 %v1970
    %2578 = vmatpush1.bf16.msra.mxu0 %v1969
    %2579 = vmatprep.subr.bf16.mxu0 %v1978
    %2580 = vmatpush1.bf16.msra.mxu0 %v1977
    %2581 = vmatprep.subr.bf16.mxu0 %v1986
    %2582 = vmatpush1.bf16.msra.mxu0 %v1985
    %2583 = vmatprep.subr.bf16.mxu0 %v1994
    %2584 = vmatpush1.bf16.msra.mxu0 %v1993
    %2585 = vmatprep.mubr.bf16.mxu0 %v800
    %2586 = vmatmul.mubr.bf16.gmra.mrb[0].mxu0 %v799
    %v2587 = vpop.f32.mrb[0].mxu0
    %v2588 = vadd.f32 %v1080, %v2587
    %v2589 = vpop.f32.mrb[0].mxu0
    %v2590 = vadd.f32 %v1084, %v2589
    %v2591 = vpop.f32.mrb[0].mxu0
    %v2592 = vadd.f32 %v1080, %v2591
    %v2593 = vpop.f32.mrb[0].mxu0
    %v2594 = vadd.f32 %v1084, %v2593
    %2595 = vdwg.mxu0
    %2596 = vmatprep.subr.bf16.mxu0 %v2002
    %2597 = vmatpush1.bf16.msra.mxu0 %v2001
    %2598 = vmatprep.subr.bf16.mxu0 %v2010
    %2599 = vmatpush1.bf16.msra.mxu0 %v2009
    %2600 = vmatprep.subr.bf16.mxu0 %v2018
    %2601 = vmatpush1.bf16.msra.mxu0 %v2017
    %2602 = vmatprep.subr.bf16.mxu0 %v2026
    %2603 = vmatpush1.bf16.msra.mxu0 %v2025
    %2604 = vmatprep.subr.bf16.mxu0 %v2034
    %2605 = vmatpush1.bf16.msra.mxu0 %v2033
    %2606 = vmatprep.subr.bf16.mxu0 %v2042
    %2607 = vmatpush1.bf16.msra.mxu0 %v2041
    %2608 = vmatprep.subr.bf16.mxu0 %v2050
    %2609 = vmatpush1.bf16.msra.mxu0 %v2049
    %2610 = vmatprep.subr.bf16.mxu0 %v2058
    %2611 = vmatpush1.bf16.msra.mxu0 %v2057
    %2612 = vmatprep.subr.bf16.mxu0 %v2066
    %2613 = vmatpush1.bf16.msra.mxu0 %v2065
    %2614 = vmatprep.subr.bf16.mxu0 %v2074
    %2615 = vmatpush1.bf16.msra.mxu0 %v2073
    %2616 = vmatprep.subr.bf16.mxu0 %v2082
    %2617 = vmatpush1.bf16.msra.mxu0 %v2081
    %2618 = vmatprep.subr.bf16.mxu0 %v2090
    %2619 = vmatpush1.bf16.msra.mxu0 %v2089
    %2620 = vmatprep.subr.bf16.mxu0 %v2098
    %2621 = vmatpush1.bf16.msra.mxu0 %v2097
    %2622 = vmatprep.subr.bf16.mxu0 %v2106
    %2623 = vmatpush1.bf16.msra.mxu0 %v2105
    %2624 = vmatprep.subr.bf16.mxu0 %v2114
    %2625 = vmatpush1.bf16.msra.mxu0 %v2113
    %2626 = vmatprep.subr.bf16.mxu0 %v2122
    %2627 = vmatpush1.bf16.msra.mxu0 %v2121
    %2628 = vmatprep.mubr.bf16.mxu0 %v802
    %2629 = vmatmul.mubr.bf16.gmra.mrb[0].mxu0 %v801
    %v2630 = vpop.f32.mrb[0].mxu0
    %v2631 = vadd.f32 %v2588, %v2630
    %v2632 = vpop.f32.mrb[0].mxu0
    %v2633 = vadd.f32 %v2590, %v2632
    %v2634 = vpop.f32.mrb[0].mxu0
    %v2635 = vadd.f32 %v2592, %v2634
    %v2636 = vpop.f32.mrb[0].mxu0
    %v2637 = vadd.f32 %v2594, %v2636
    %2638 = vdwg.mxu0
    %2639 = vmatprep.subr.bf16.mxu0 %v1876
    %2640 = vmatpush1.bf16.msra.mxu0 %v1875
    %2641 = vmatprep.subr.bf16.mxu0 %v1884
    %2642 = vmatpush1.bf16.msra.mxu0 %v1883
    %2643 = vmatprep.subr.bf16.mxu0 %v1892
    %2644 = vmatpush1.bf16.msra.mxu0 %v1891
    %2645 = vmatprep.subr.bf16.mxu0 %v1900
    %2646 = vmatpush1.bf16.msra.mxu0 %v1899
    %2647 = vmatprep.subr.bf16.mxu0 %v1908
    %2648 = vmatpush1.bf16.msra.mxu0 %v1907
    %2649 = vmatprep.subr.bf16.mxu0 %v1916
    %2650 = vmatpush1.bf16.msra.mxu0 %v1915
    %2651 = vmatprep.subr.bf16.mxu0 %v1924
    %2652 = vmatpush1.bf16.msra.mxu0 %v1923
    %2653 = vmatprep.subr.bf16.mxu0 %v1932
    %2654 = vmatpush1.bf16.msra.mxu0 %v1931
    %2655 = vmatprep.subr.bf16.mxu0 %v1940
    %2656 = vmatpush1.bf16.msra.mxu0 %v1939
    %2657 = vmatprep.subr.bf16.mxu0 %v1948
    %2658 = vmatpush1.bf16.msra.mxu0 %v1947
    %2659 = vmatprep.subr.bf16.mxu0 %v1956
    %2660 = vmatpush1.bf16.msra.mxu0 %v1955
    %2661 = vmatprep.subr.bf16.mxu0 %v1964
    %2662 = vmatpush1.bf16.msra.mxu0 %v1963
    %2663 = vmatprep.subr.bf16.mxu0 %v1972
    %2664 = vmatpush1.bf16.msra.mxu0 %v1971
    %2665 = vmatprep.subr.bf16.mxu0 %v1980
    %2666 = vmatpush1.bf16.msra.mxu0 %v1979
    %2667 = vmatprep.subr.bf16.mxu0 %v1988
    %2668 = vmatpush1.bf16.msra.mxu0 %v1987
    %2669 = vmatprep.subr.bf16.mxu0 %v1996
    %2670 = vmatpush1.bf16.msra.mxu0 %v1995
    %2671 = vmatprep.mubr.bf16.mxu0 %v800
    %2672 = vmatmul.mubr.bf16.gmra.mrb[0].mxu0 %v799
    %v2673 = vpop.f32.mrb[0].mxu0
    %v2674 = vadd.f32 %v1088, %v2673
    %v2675 = vpop.f32.mrb[0].mxu0
    %v2676 = vadd.f32 %v1092, %v2675
    %v2677 = vpop.f32.mrb[0].mxu0
    %v2678 = vadd.f32 %v1088, %v2677
    %v2679 = vpop.f32.mrb[0].mxu0
    %v2680 = vadd.f32 %v1092, %v2679
    %2681 = vdwg.mxu0
    %2682 = vmatprep.subr.bf16.mxu0 %v2004
    %2683 = vmatpush1.bf16.msra.mxu0 %v2003
    %2684 = vmatprep.subr.bf16.mxu0 %v2012
    %2685 = vmatpush1.bf16.msra.mxu0 %v2011
    %2686 = vmatprep.subr.bf16.mxu0 %v2020
    %2687 = vmatpush1.bf16.msra.mxu0 %v2019
    %2688 = vmatprep.subr.bf16.mxu0 %v2028
    %2689 = vmatpush1.bf16.msra.mxu0 %v2027
    %2690 = vmatprep.subr.bf16.mxu0 %v2036
    %2691 = vmatpush1.bf16.msra.mxu0 %v2035
    %2692 = vmatprep.subr.bf16.mxu0 %v2044
    %2693 = vmatpush1.bf16.msra.mxu0 %v2043
    %2694 = vmatprep.subr.bf16.mxu0 %v2052
    %2695 = vmatpush1.bf16.msra.mxu0 %v2051
    %2696 = vmatprep.subr.bf16.mxu0 %v2060
    %2697 = vmatpush1.bf16.msra.mxu0 %v2059
    %2698 = vmatprep.subr.bf16.mxu0 %v2068
    %2699 = vmatpush1.bf16.msra.mxu0 %v2067
    %2700 = vmatprep.subr.bf16.mxu0 %v2076
    %2701 = vmatpush1.bf16.msra.mxu0 %v2075
    %2702 = vmatprep.subr.bf16.mxu0 %v2084
    %2703 = vmatpush1.bf16.msra.mxu0 %v2083
    %2704 = vmatprep.subr.bf16.mxu0 %v2092
    %2705 = vmatpush1.bf16.msra.mxu0 %v2091
    %2706 = vmatprep.subr.bf16.mxu0 %v2100
    %2707 = vmatpush1.bf16.msra.mxu0 %v2099
    %2708 = vmatprep.subr.bf16.mxu0 %v2108
    %2709 = vmatpush1.bf16.msra.mxu0 %v2107
    %2710 = vmatprep.subr.bf16.mxu0 %v2116
    %2711 = vmatpush1.bf16.msra.mxu0 %v2115
    %2712 = vmatprep.subr.bf16.mxu0 %v2124
    %2713 = vmatpush1.bf16.msra.mxu0 %v2123
    %2714 = vmatprep.mubr.bf16.mxu0 %v802
    %2715 = vmatmul.mubr.bf16.gmra.mrb[0].mxu0 %v801
    %v2716 = vpop.f32.mrb[0].mxu0
    %v2717 = vadd.f32 %v2674, %v2716
    %v2718 = vpop.f32.mrb[0].mxu0
    %v2719 = vadd.f32 %v2676, %v2718
    %v2720 = vpop.f32.mrb[0].mxu0
    %v2721 = vadd.f32 %v2678, %v2720
    %v2722 = vpop.f32.mrb[0].mxu0
    %v2723 = vadd.f32 %v2680, %v2722
    %2724 = vdwg.mxu0
    %v2725 = vmax.f32 %v2459, 0.0
    %v2726 = vmax.f32 %v2461, 0.0
    %v2727 = vmax.f32 %v2545, 0.0
    %v2728 = vmax.f32 %v2547, 0.0
    %v2729 = vmax.f32 %v2631, 0.0
    %v2730 = vmax.f32 %v2633, 0.0
    %v2731 = vmax.f32 %v2717, 0.0
    %v2732 = vmax.f32 %v2719, 0.0
    %v2733 = vmax.f32 %v2463, 0.0
    %v2734 = vmax.f32 %v2465, 0.0
    %v2735 = vmax.f32 %v2549, 0.0
    %v2736 = vmax.f32 %v2551, 0.0
    %v2737 = vmax.f32 %v2635, 0.0
    %v2738 = vmax.f32 %v2637, 0.0
    %v2739 = vmax.f32 %v2721, 0.0
    %v2740 = vmax.f32 %v2723, 0.0
    %v2741 = vpack.c.bf16 %v2733, %v2725
    %v2742 = vpack.c.bf16 %v2734, %v2726
    %v2743 = vpack.c.bf16 %v2735, %v2727
    %v2744 = vpack.c.bf16 %v2736, %v2728
    %v2745 = vpack.c.bf16 %v2737, %v2729
    %v2746 = vpack.c.bf16 %v2738, %v2730
    %v2747 = vpack.c.bf16 %v2739, %v2731
    %v2748 = vpack.c.bf16 %v2740, %v2732
    %v2749 = vld [vmem:[#allocation12] sm:$0xff]
    %v2750 = vld [vmem:[#allocation12 + $0x8] sm:$0xff]
    %v2751 = vld [vmem:[#allocation12 + $0x10] sm:$0xff]
    %v2752 = vld [vmem:[#allocation12 + $0x18] sm:$0xf]
    %v2753 = vld [vmem:[#allocation12 + $0x1c] sm:$0xff]
    %v2754 = vld [vmem:[#allocation12 + $0x24] sm:$0xff]
    %v2755 = vld [vmem:[#allocation12 + $0x2c] sm:$0xff]
    %v2756 = vld [vmem:[#allocation12 + $0x34] sm:$0xf]
    %v2757 = vld [vmem:[#allocation12 + $0x38] sm:$0xff]
    %v2758 = vld [vmem:[#allocation12 + $0x40] sm:$0xff]
    %v2759 = vld [vmem:[#allocation12 + $0x48] sm:$0xff]
    %v2760 = vld [vmem:[#allocation12 + $0x50] sm:$0xf]
    %v2761 = vld [vmem:[#allocation12 + $0x54] sm:$0xff]
    %v2762 = vld [vmem:[#allocation12 + $0x5c] sm:$0xff]
    %v2763 = vld [vmem:[#allocation12 + $0x64] sm:$0xff]
    %v2764 = vld [vmem:[#allocation12 + $0x6c] sm:$0xf]
    %v2765 = vld [vmem:[#allocation12 + $0x70] sm:$0xff]
    %v2766 = vld [vmem:[#allocation12 + $0x78] sm:$0xff]
    %v2767 = vld [vmem:[#allocation12 + $0x80] sm:$0xff]
    %v2768 = vld [vmem:[#allocation12 + $0x88] sm:$0xf]
    %v2769 = vld [vmem:[#allocation12 + $0x8c] sm:$0xff]
    %v2770 = vld [vmem:[#allocation12 + $0x94] sm:$0xff]
    %v2771 = vld [vmem:[#allocation12 + $0x9c] sm:$0xff]
    %v2772 = vld [vmem:[#allocation12 + $0xa4] sm:$0xf]
    %v2773 = vld [vmem:[#allocation12 + $0xa8] sm:$0xff]
    %v2774 = vld [vmem:[#allocation12 + $0xb0] sm:$0xff]
    %v2775 = vld [vmem:[#allocation12 + $0xb8] sm:$0xff]
    %v2776 = vld [vmem:[#allocation12 + $0xc0] sm:$0xf]
    %v2777 = vld [vmem:[#allocation12 + $0xc4] sm:$0xff]
    %v2778 = vld [vmem:[#allocation12 + $0xcc] sm:$0xff]
    %v2779 = vld [vmem:[#allocation12 + $0xd4] sm:$0xff]
    %v2780 = vld [vmem:[#allocation12 + $0xdc] sm:$0xf]
    %v2781 = vld [vmem:[#allocation12 + $0xe0] sm:$0xff]
    %v2782 = vld [vmem:[#allocation12 + $0xe8] sm:$0xff]
    %v2783 = vld [vmem:[#allocation12 + $0xf0] sm:$0xff]
    %v2784 = vld [vmem:[#allocation12 + $0xf8] sm:$0xf]
    %v2785 = vld [vmem:[#allocation12 + $0xfc] sm:$0xff]
    %v2786 = vld [vmem:[#allocation12 + $0x104] sm:$0xff]
    %v2787 = vld [vmem:[#allocation12 + $0x10c] sm:$0xff]
    %v2788 = vld [vmem:[#allocation12 + $0x114] sm:$0xf]
    %v2789 = vld [vmem:[#allocation12 + $0x118] sm:$0xff]
    %v2790 = vld [vmem:[#allocation12 + $0x120] sm:$0xff]
    %v2791 = vld [vmem:[#allocation12 + $0x128] sm:$0xff]
    %v2792 = vld [vmem:[#allocation12 + $0x130] sm:$0xf]
    %v2793 = vld [vmem:[#allocation12 + $0x134] sm:$0xff]
    %v2794 = vld [vmem:[#allocation12 + $0x13c] sm:$0xff]
    %v2795 = vld [vmem:[#allocation12 + $0x144] sm:$0xff]
    %v2796 = vld [vmem:[#allocation12 + $0x14c] sm:$0xf]
    %v2797 = vld [vmem:[#allocation12 + $0x150] sm:$0xff]
    %v2798 = vld [vmem:[#allocation12 + $0x158] sm:$0xff]
    %v2799 = vld [vmem:[#allocation12 + $0x160] sm:$0xff]
    %v2800 = vld [vmem:[#allocation12 + $0x168] sm:$0xf]
    %v2801 = vld [vmem:[#allocation12 + $0x16c] sm:$0xff]
    %v2802 = vld [vmem:[#allocation12 + $0x174] sm:$0xff]
    %v2803 = vld [vmem:[#allocation12 + $0x17c] sm:$0xff]
    %v2804 = vld [vmem:[#allocation12 + $0x184] sm:$0xf]
    %v2805 = vld [vmem:[#allocation12 + $0x188] sm:$0xff]
    %v2806 = vld [vmem:[#allocation12 + $0x190] sm:$0xff]
    %v2807 = vld [vmem:[#allocation12 + $0x198] sm:$0xff]
    %v2808 = vld [vmem:[#allocation12 + $0x1a0] sm:$0xf]
    %v2809 = vld [vmem:[#allocation12 + $0x1a4] sm:$0xff]
    %v2810 = vld [vmem:[#allocation12 + $0x1ac] sm:$0xff]
    %v2811 = vld [vmem:[#allocation12 + $0x1b4] sm:$0xff]
    %v2812 = vld [vmem:[#allocation12 + $0x1bc] sm:$0xf]
    %v2813 = vld [vmem:[#allocation12 + $0x1c0] sm:$0xff]
    %v2814 = vld [vmem:[#allocation12 + $0x1c8] sm:$0xff]
    %v2815 = vld [vmem:[#allocation12 + $0x1d0] sm:$0xff]
    %v2816 = vld [vmem:[#allocation12 + $0x1d8] sm:$0xf]
    %v2817 = vld [vmem:[#allocation12 + $0x1dc] sm:$0xff]
    %v2818 = vld [vmem:[#allocation12 + $0x1e4] sm:$0xff]
    %v2819 = vld [vmem:[#allocation12 + $0x1ec] sm:$0xff]
    %v2820 = vld [vmem:[#allocation12 + $0x1f4] sm:$0xf]
    %v2821 = vld [vmem:[#allocation12 + $0x1f8] sm:$0xff]
    %v2822 = vld [vmem:[#allocation12 + $0x200] sm:$0xff]
    %v2823 = vld [vmem:[#allocation12 + $0x208] sm:$0xff]
    %v2824 = vld [vmem:[#allocation12 + $0x210] sm:$0xf]
    %v2825 = vld [vmem:[#allocation12 + $0x214] sm:$0xff]
    %v2826 = vld [vmem:[#allocation12 + $0x21c] sm:$0xff]
    %v2827 = vld [vmem:[#allocation12 + $0x224] sm:$0xff]
    %v2828 = vld [vmem:[#allocation12 + $0x22c] sm:$0xf]
    %v2829 = vld [vmem:[#allocation12 + $0x230] sm:$0xff]
    %v2830 = vld [vmem:[#allocation12 + $0x238] sm:$0xff]
    %v2831 = vld [vmem:[#allocation12 + $0x240] sm:$0xff]
    %v2832 = vld [vmem:[#allocation12 + $0x248] sm:$0xf]
    %v2833 = vld [vmem:[#allocation12 + $0x24c] sm:$0xff]
    %v2834 = vld [vmem:[#allocation12 + $0x254] sm:$0xff]
    %v2835 = vld [vmem:[#allocation12 + $0x25c] sm:$0xff]
    %v2836 = vld [vmem:[#allocation12 + $0x264] sm:$0xf]
    %v2837 = vld [vmem:[#allocation12 + $0x268] sm:$0xff]
    %v2838 = vld [vmem:[#allocation12 + $0x270] sm:$0xff]
    %v2839 = vld [vmem:[#allocation12 + $0x278] sm:$0xff]
    %v2840 = vld [vmem:[#allocation12 + $0x280] sm:$0xf]
    %v2841 = vld [vmem:[#allocation12 + $0x284] sm:$0xff]
    %v2842 = vld [vmem:[#allocation12 + $0x28c] sm:$0xff]
    %v2843 = vld [vmem:[#allocation12 + $0x294] sm:$0xff]
    %v2844 = vld [vmem:[#allocation12 + $0x29c] sm:$0xf]
    %v2845 = vld [vmem:[#allocation12 + $0x2a0] sm:$0xff]
    %v2846 = vld [vmem:[#allocation12 + $0x2a8] sm:$0xff]
    %v2847 = vld [vmem:[#allocation12 + $0x2b0] sm:$0xff]
    %v2848 = vld [vmem:[#allocation12 + $0x2b8] sm:$0xf]
    %v2849 = vld [vmem:[#allocation12 + $0x2bc] sm:$0xff]
    %v2850 = vld [vmem:[#allocation12 + $0x2c4] sm:$0xff]
    %v2851 = vld [vmem:[#allocation12 + $0x2cc] sm:$0xff]
    %v2852 = vld [vmem:[#allocation12 + $0x2d4] sm:$0xf]
    %v2853 = vld [vmem:[#allocation12 + $0x2d8] sm:$0xff]
    %v2854 = vld [vmem:[#allocation12 + $0x2e0] sm:$0xff]
    %v2855 = vld [vmem:[#allocation12 + $0x2e8] sm:$0xff]
    %v2856 = vld [vmem:[#allocation12 + $0x2f0] sm:$0xf]
    %v2857 = vld [vmem:[#allocation12 + $0x2f4] sm:$0xff]
    %v2858 = vld [vmem:[#allocation12 + $0x2fc] sm:$0xff]
    %v2859 = vld [vmem:[#allocation12 + $0x304] sm:$0xff]
    %v2860 = vld [vmem:[#allocation12 + $0x30c] sm:$0xf]
    %v2861 = vld [vmem:[#allocation12 + $0x310] sm:$0xff]
    %v2862 = vld [vmem:[#allocation12 + $0x318] sm:$0xff]
    %v2863 = vld [vmem:[#allocation12 + $0x320] sm:$0xff]
    %v2864 = vld [vmem:[#allocation12 + $0x328] sm:$0xf]
    %v2865 = vld [vmem:[#allocation12 + $0x32c] sm:$0xff]
    %v2866 = vld [vmem:[#allocation12 + $0x334] sm:$0xff]
    %v2867 = vld [vmem:[#allocation12 + $0x33c] sm:$0xff]
    %v2868 = vld [vmem:[#allocation12 + $0x344] sm:$0xf]
    %v2869 = vld [vmem:[#allocation12 + $0x348] sm:$0xff]
    %v2870 = vld [vmem:[#allocation12 + $0x350] sm:$0xff]
    %v2871 = vld [vmem:[#allocation12 + $0x358] sm:$0xff]
    %v2872 = vld [vmem:[#allocation12 + $0x360] sm:$0xf]
    %v2873 = vld [vmem:[#allocation12 + $0x364] sm:$0xff]
    %v2874 = vld [vmem:[#allocation12 + $0x36c] sm:$0xff]
    %v2875 = vld [vmem:[#allocation12 + $0x374] sm:$0xff]
    %v2876 = vld [vmem:[#allocation12 + $0x37c] sm:$0xf]
    %v2877 = vld [vmem:[#allocation12 + $0x380] sm:$0xff]
    %v2878 = vld [vmem:[#allocation12 + $0x388] sm:$0xff]
    %v2879 = vld [vmem:[#allocation12 + $0x390] sm:$0xff]
    %v2880 = vld [vmem:[#allocation12 + $0x398] sm:$0xf]
    %v2881 = vld [vmem:[#allocation12 + $0x39c] sm:$0xff]
    %v2882 = vld [vmem:[#allocation12 + $0x3a4] sm:$0xff]
    %v2883 = vld [vmem:[#allocation12 + $0x3ac] sm:$0xff]
    %v2884 = vld [vmem:[#allocation12 + $0x3b4] sm:$0xf]
    %v2885 = vld [vmem:[#allocation12 + $0x3b8] sm:$0xff]
    %v2886 = vld [vmem:[#allocation12 + $0x3c0] sm:$0xff]
    %v2887 = vld [vmem:[#allocation12 + $0x3c8] sm:$0xff]
    %v2888 = vld [vmem:[#allocation12 + $0x3d0] sm:$0xf]
    %v2889 = vld [vmem:[#allocation12 + $0x3d4] sm:$0xff]
    %v2890 = vld [vmem:[#allocation12 + $0x3dc] sm:$0xff]
    %v2891 = vld [vmem:[#allocation12 + $0x3e4] sm:$0xff]
    %v2892 = vld [vmem:[#allocation12 + $0x3ec] sm:$0xf]
    %v2893 = vld [vmem:[#allocation12 + $0x3f0] sm:$0xff]
    %v2894 = vld [vmem:[#allocation12 + $0x3f8] sm:$0xff]
    %v2895 = vld [vmem:[#allocation12 + $0x400] sm:$0xff]
    %v2896 = vld [vmem:[#allocation12 + $0x408] sm:$0xf]
    %v2897 = vld [vmem:[#allocation12 + $0x40c] sm:$0xff]
    %v2898 = vld [vmem:[#allocation12 + $0x414] sm:$0xff]
    %v2899 = vld [vmem:[#allocation12 + $0x41c] sm:$0xff]
    %v2900 = vld [vmem:[#allocation12 + $0x424] sm:$0xf]
    %v2901 = vld [vmem:[#allocation12 + $0x428] sm:$0xff]
    %v2902 = vld [vmem:[#allocation12 + $0x430] sm:$0xff]
    %v2903 = vld [vmem:[#allocation12 + $0x438] sm:$0xff]
    %v2904 = vld [vmem:[#allocation12 + $0x440] sm:$0xf]
    %v2905 = vld [vmem:[#allocation12 + $0x444] sm:$0xff]
    %v2906 = vld [vmem:[#allocation12 + $0x44c] sm:$0xff]
    %v2907 = vld [vmem:[#allocation12 + $0x454] sm:$0xff]
    %v2908 = vld [vmem:[#allocation12 + $0x45c] sm:$0xf]
    %v2909 = vld [vmem:[#allocation12 + $0x460] sm:$0xff]
    %v2910 = vld [vmem:[#allocation12 + $0x468] sm:$0xff]
    %v2911 = vld [vmem:[#allocation12 + $0x470] sm:$0xff]
    %v2912 = vld [vmem:[#allocation12 + $0x478] sm:$0xf]
    %v2913 = vld [vmem:[#allocation12 + $0x47c] sm:$0xff]
    %v2914 = vld [vmem:[#allocation12 + $0x484] sm:$0xff]
    %v2915 = vld [vmem:[#allocation12 + $0x48c] sm:$0xff]
    %v2916 = vld [vmem:[#allocation12 + $0x494] sm:$0xf]
    %v2917 = vld [vmem:[#allocation12 + $0x498] sm:$0xff]
    %v2918 = vld [vmem:[#allocation12 + $0x4a0] sm:$0xff]
    %v2919 = vld [vmem:[#allocation12 + $0x4a8] sm:$0xff]
    %v2920 = vld [vmem:[#allocation12 + $0x4b0] sm:$0xf]
    %v2921 = vld [vmem:[#allocation12 + $0x4b4] sm:$0xff]
    %v2922 = vld [vmem:[#allocation12 + $0x4bc] sm:$0xff]
    %v2923 = vld [vmem:[#allocation12 + $0x4c4] sm:$0xff]
    %v2924 = vld [vmem:[#allocation12 + $0x4cc] sm:$0xf]
    %v2925 = vld [vmem:[#allocation12 + $0x4d0] sm:$0xff]
    %v2926 = vld [vmem:[#allocation12 + $0x4d8] sm:$0xff]
    %v2927 = vld [vmem:[#allocation12 + $0x4e0] sm:$0xff]
    %v2928 = vld [vmem:[#allocation12 + $0x4e8] sm:$0xf]
    %v2929 = vld [vmem:[#allocation12 + $0x4ec] sm:$0xff]
    %v2930 = vld [vmem:[#allocation12 + $0x4f4] sm:$0xff]
    %v2931 = vld [vmem:[#allocation12 + $0x4fc] sm:$0xff]
    %v2932 = vld [vmem:[#allocation12 + $0x504] sm:$0xf]
    %v2933 = vld [vmem:[#allocation12 + $0x508] sm:$0xff]
    %v2934 = vld [vmem:[#allocation12 + $0x510] sm:$0xff]
    %v2935 = vld [vmem:[#allocation12 + $0x518] sm:$0xff]
    %v2936 = vld [vmem:[#allocation12 + $0x520] sm:$0xf]
    %v2937 = vld [vmem:[#allocation12 + $0x524] sm:$0xff]
    %v2938 = vld [vmem:[#allocation12 + $0x52c] sm:$0xff]
    %v2939 = vld [vmem:[#allocation12 + $0x534] sm:$0xff]
    %v2940 = vld [vmem:[#allocation12 + $0x53c] sm:$0xf]
    %v2941 = vld [vmem:[#allocation12 + $0x540] sm:$0xff]
    %v2942 = vld [vmem:[#allocation12 + $0x548] sm:$0xff]
    %v2943 = vld [vmem:[#allocation12 + $0x550] sm:$0xff]
    %v2944 = vld [vmem:[#allocation12 + $0x558] sm:$0xf]
    %v2945 = vld [vmem:[#allocation12 + $0x55c] sm:$0xff]
    %v2946 = vld [vmem:[#allocation12 + $0x564] sm:$0xff]
    %v2947 = vld [vmem:[#allocation12 + $0x56c] sm:$0xff]
    %v2948 = vld [vmem:[#allocation12 + $0x574] sm:$0xf]
    %v2949 = vld [vmem:[#allocation12 + $0x578] sm:$0xff]
    %v2950 = vld [vmem:[#allocation12 + $0x580] sm:$0xff]
    %v2951 = vld [vmem:[#allocation12 + $0x588] sm:$0xff]
    %v2952 = vld [vmem:[#allocation12 + $0x590] sm:$0xf]
    %v2953 = vld [vmem:[#allocation12 + $0x594] sm:$0xff]
    %v2954 = vld [vmem:[#allocation12 + $0x59c] sm:$0xff]
    %v2955 = vld [vmem:[#allocation12 + $0x5a4] sm:$0xff]
    %v2956 = vld [vmem:[#allocation12 + $0x5ac] sm:$0xf]
    %v2957 = vld [vmem:[#allocation12 + $0x5b0] sm:$0xff]
    %v2958 = vld [vmem:[#allocation12 + $0x5b8] sm:$0xff]
    %v2959 = vld [vmem:[#allocation12 + $0x5c0] sm:$0xff]
    %v2960 = vld [vmem:[#allocation12 + $0x5c8] sm:$0xf]
    %v2961 = vld [vmem:[#allocation12 + $0x5cc] sm:$0xff]
    %v2962 = vld [vmem:[#allocation12 + $0x5d4] sm:$0xff]
    %v2963 = vld [vmem:[#allocation12 + $0x5dc] sm:$0xff]
    %v2964 = vld [vmem:[#allocation12 + $0x5e4] sm:$0xf]
    %v2965 = vld [vmem:[#allocation12 + $0x5e8] sm:$0xff]
    %v2966 = vld [vmem:[#allocation12 + $0x5f0] sm:$0xff]
    %v2967 = vld [vmem:[#allocation12 + $0x5f8] sm:$0xff]
    %v2968 = vld [vmem:[#allocation12 + $0x600] sm:$0xf]
    %v2969 = vld [vmem:[#allocation12 + $0x604] sm:$0xff]
    %v2970 = vld [vmem:[#allocation12 + $0x60c] sm:$0xff]
    %v2971 = vld [vmem:[#allocation12 + $0x614] sm:$0xff]
    %v2972 = vld [vmem:[#allocation12 + $0x61c] sm:$0xf]
    %v2973 = vld [vmem:[#allocation12 + $0x620] sm:$0xff]
    %v2974 = vld [vmem:[#allocation12 + $0x628] sm:$0xff]
    %v2975 = vld [vmem:[#allocation12 + $0x630] sm:$0xff]
    %v2976 = vld [vmem:[#allocation12 + $0x638] sm:$0xf]
    %v2977 = vld [vmem:[#allocation12 + $0x63c] sm:$0xff]
    %v2978 = vld [vmem:[#allocation12 + $0x644] sm:$0xff]
    %v2979 = vld [vmem:[#allocation12 + $0x64c] sm:$0xff]
    %v2980 = vld [vmem:[#allocation12 + $0x654] sm:$0xf]
    %v2981 = vld [vmem:[#allocation12 + $0x658] sm:$0xff]
    %v2982 = vld [vmem:[#allocation12 + $0x660] sm:$0xff]
    %v2983 = vld [vmem:[#allocation12 + $0x668] sm:$0xff]
    %v2984 = vld [vmem:[#allocation12 + $0x670] sm:$0xf]
    %v2985 = vld [vmem:[#allocation12 + $0x674] sm:$0xff]
    %v2986 = vld [vmem:[#allocation12 + $0x67c] sm:$0xff]
    %v2987 = vld [vmem:[#allocation12 + $0x684] sm:$0xff]
    %v2988 = vld [vmem:[#allocation12 + $0x68c] sm:$0xf]
    %v2989 = vld [vmem:[#allocation12 + $0x690] sm:$0xff]
    %v2990 = vld [vmem:[#allocation12 + $0x698] sm:$0xff]
    %v2991 = vld [vmem:[#allocation12 + $0x6a0] sm:$0xff]
    %v2992 = vld [vmem:[#allocation12 + $0x6a8] sm:$0xf]
    %v2993 = vld [vmem:[#allocation12 + $0x6ac] sm:$0xff]
    %v2994 = vld [vmem:[#allocation12 + $0x6b4] sm:$0xff]
    %v2995 = vld [vmem:[#allocation12 + $0x6bc] sm:$0xff]
    %v2996 = vld [vmem:[#allocation12 + $0x6c4] sm:$0xf]
    %v2997 = vld [vmem:[#allocation12 + $0x6c8] sm:$0xff]
    %v2998 = vld [vmem:[#allocation12 + $0x6d0] sm:$0xff]
    %v2999 = vld [vmem:[#allocation12 + $0x6d8] sm:$0xff]
    %v3000 = vld [vmem:[#allocation12 + $0x6e0] sm:$0xf]
    %v3001 = vld [vmem:[#allocation12 + $0x6e4] sm:$0xff]
    %v3002 = vld [vmem:[#allocation12 + $0x6ec] sm:$0xff]
    %v3003 = vld [vmem:[#allocation12 + $0x6f4] sm:$0xff]
    %v3004 = vld [vmem:[#allocation12 + $0x6fc] sm:$0xf]
    %v3005 = vld [vmem:[#allocation12 + $0x700] sm:$0xff]
    %v3006 = vld [vmem:[#allocation12 + $0x708] sm:$0xff]
    %v3007 = vld [vmem:[#allocation12 + $0x710] sm:$0xff]
    %v3008 = vld [vmem:[#allocation12 + $0x718] sm:$0xf]
    %v3009 = vld [vmem:[#allocation12 + $0x71c] sm:$0xff]
    %v3010 = vld [vmem:[#allocation12 + $0x724] sm:$0xff]
    %v3011 = vld [vmem:[#allocation12 + $0x72c] sm:$0xff]
    %v3012 = vld [vmem:[#allocation12 + $0x734] sm:$0xf]
    %v3013 = vld [vmem:[#allocation12 + $0x738] sm:$0xff]
    %v3014 = vld [vmem:[#allocation12 + $0x740] sm:$0xff]
    %v3015 = vld [vmem:[#allocation12 + $0x748] sm:$0xff]
    %v3016 = vld [vmem:[#allocation12 + $0x750] sm:$0xf]
    %v3017 = vld [vmem:[#allocation12 + $0x754] sm:$0xff]
    %v3018 = vld [vmem:[#allocation12 + $0x75c] sm:$0xff]
    %v3019 = vld [vmem:[#allocation12 + $0x764] sm:$0xff]
    %v3020 = vld [vmem:[#allocation12 + $0x76c] sm:$0xf]
    %v3021 = vld [vmem:[#allocation12 + $0x770] sm:$0xff]
    %v3022 = vld [vmem:[#allocation12 + $0x778] sm:$0xff]
    %v3023 = vld [vmem:[#allocation12 + $0x780] sm:$0xff]
    %v3024 = vld [vmem:[#allocation12 + $0x788] sm:$0xf]
    %v3025 = vld [vmem:[#allocation12 + $0x78c] sm:$0xff]
    %v3026 = vld [vmem:[#allocation12 + $0x794] sm:$0xff]
    %v3027 = vld [vmem:[#allocation12 + $0x79c] sm:$0xff]
    %v3028 = vld [vmem:[#allocation12 + $0x7a4] sm:$0xf]
    %v3029 = vld [vmem:[#allocation12 + $0x7a8] sm:$0xff]
    %v3030 = vld [vmem:[#allocation12 + $0x7b0] sm:$0xff]
    %v3031 = vld [vmem:[#allocation12 + $0x7b8] sm:$0xff]
    %v3032 = vld [vmem:[#allocation12 + $0x7c0] sm:$0xf]
    %v3033 = vld [vmem:[#allocation12 + $0x7c4] sm:$0xff]
    %v3034 = vld [vmem:[#allocation12 + $0x7cc] sm:$0xff]
    %v3035 = vld [vmem:[#allocation12 + $0x7d4] sm:$0xff]
    %v3036 = vld [vmem:[#allocation12 + $0x7dc] sm:$0xf]
    %v3037 = vld [vmem:[#allocation12 + $0x7e0] sm:$0xff]
    %v3038 = vld [vmem:[#allocation12 + $0x7e8] sm:$0xff]
    %v3039 = vld [vmem:[#allocation12 + $0x7f0] sm:$0xff]
    %v3040 = vld [vmem:[#allocation12 + $0x7f8] sm:$0xf]
    %v3041 = vld [vmem:[#allocation12 + $0x7fc] sm:$0xff]
    %v3042 = vld [vmem:[#allocation12 + $0x804] sm:$0xff]
    %v3043 = vld [vmem:[#allocation12 + $0x80c] sm:$0xff]
    %v3044 = vld [vmem:[#allocation12 + $0x814] sm:$0xf]
    %v3045 = vld [vmem:[#allocation12 + $0x818] sm:$0xff]
    %v3046 = vld [vmem:[#allocation12 + $0x820] sm:$0xff]
    %v3047 = vld [vmem:[#allocation12 + $0x828] sm:$0xff]
    %v3048 = vld [vmem:[#allocation12 + $0x830] sm:$0xf]
    %v3049 = vld [vmem:[#allocation12 + $0x834] sm:$0xff]
    %v3050 = vld [vmem:[#allocation12 + $0x83c] sm:$0xff]
    %v3051 = vld [vmem:[#allocation12 + $0x844] sm:$0xff]
    %v3052 = vld [vmem:[#allocation12 + $0x84c] sm:$0xf]
    %v3053 = vld [vmem:[#allocation12 + $0x850] sm:$0xff]
    %v3054 = vld [vmem:[#allocation12 + $0x858] sm:$0xff]
    %v3055 = vld [vmem:[#allocation12 + $0x860] sm:$0xff]
    %v3056 = vld [vmem:[#allocation12 + $0x868] sm:$0xf]
    %v3057 = vld [vmem:[#allocation12 + $0x86c] sm:$0xff]
    %v3058 = vld [vmem:[#allocation12 + $0x874] sm:$0xff]
    %v3059 = vld [vmem:[#allocation12 + $0x87c] sm:$0xff]
    %v3060 = vld [vmem:[#allocation12 + $0x884] sm:$0xf]
    %v3061 = vld [vmem:[#allocation12 + $0x888] sm:$0xff]
    %v3062 = vld [vmem:[#allocation12 + $0x890] sm:$0xff]
    %v3063 = vld [vmem:[#allocation12 + $0x898] sm:$0xff]
    %v3064 = vld [vmem:[#allocation12 + $0x8a0] sm:$0xf]
    %v3065 = vld [vmem:[#allocation12 + $0x8a4] sm:$0xff]
    %v3066 = vld [vmem:[#allocation12 + $0x8ac] sm:$0xff]
    %v3067 = vld [vmem:[#allocation12 + $0x8b4] sm:$0xff]
    %v3068 = vld [vmem:[#allocation12 + $0x8bc] sm:$0xf]
    %v3069 = vld [vmem:[#allocation12 + $0x8c0] sm:$0xff]
    %v3070 = vld [vmem:[#allocation12 + $0x8c8] sm:$0xff]
    %v3071 = vld [vmem:[#allocation12 + $0x8d0] sm:$0xff]
    %v3072 = vld [vmem:[#allocation12 + $0x8d8] sm:$0xf]
    %v3073 = vld [vmem:[#allocation12 + $0x8dc] sm:$0xff]
    %v3074 = vld [vmem:[#allocation12 + $0x8e4] sm:$0xff]
    %v3075 = vld [vmem:[#allocation12 + $0x8ec] sm:$0xff]
    %v3076 = vld [vmem:[#allocation12 + $0x8f4] sm:$0xf]
    %v3077 = vld [vmem:[#allocation12 + $0x8f8] sm:$0xff]
    %v3078 = vld [vmem:[#allocation12 + $0x900] sm:$0xff]
    %v3079 = vld [vmem:[#allocation12 + $0x908] sm:$0xff]
    %v3080 = vld [vmem:[#allocation12 + $0x910] sm:$0xf]
    %v3081 = vld [vmem:[#allocation12 + $0x914] sm:$0xff]
    %v3082 = vld [vmem:[#allocation12 + $0x91c] sm:$0xff]
    %v3083 = vld [vmem:[#allocation12 + $0x924] sm:$0xff]
    %v3084 = vld [vmem:[#allocation12 + $0x92c] sm:$0xf]
    %v3085 = vld [vmem:[#allocation12 + $0x930] sm:$0xff]
    %v3086 = vld [vmem:[#allocation12 + $0x938] sm:$0xff]
    %v3087 = vld [vmem:[#allocation12 + $0x940] sm:$0xff]
    %v3088 = vld [vmem:[#allocation12 + $0x948] sm:$0xf]
    %v3089 = vld [vmem:[#allocation12 + $0x94c] sm:$0xff]
    %v3090 = vld [vmem:[#allocation12 + $0x954] sm:$0xff]
    %v3091 = vld [vmem:[#allocation12 + $0x95c] sm:$0xff]
    %v3092 = vld [vmem:[#allocation12 + $0x964] sm:$0xf]
    %v3093 = vld [vmem:[#allocation12 + $0x968] sm:$0xff]
    %v3094 = vld [vmem:[#allocation12 + $0x970] sm:$0xff]
    %v3095 = vld [vmem:[#allocation12 + $0x978] sm:$0xff]
    %v3096 = vld [vmem:[#allocation12 + $0x980] sm:$0xf]
    %v3097 = vld [vmem:[#allocation12 + $0x984] sm:$0xff]
    %v3098 = vld [vmem:[#allocation12 + $0x98c] sm:$0xff]
    %v3099 = vld [vmem:[#allocation12 + $0x994] sm:$0xff]
    %v3100 = vld [vmem:[#allocation12 + $0x99c] sm:$0xf]
    %v3101 = vld [vmem:[#allocation12 + $0x9a0] sm:$0xff]
    %v3102 = vld [vmem:[#allocation12 + $0x9a8] sm:$0xff]
    %v3103 = vld [vmem:[#allocation12 + $0x9b0] sm:$0xff]
    %v3104 = vld [vmem:[#allocation12 + $0x9b8] sm:$0xf]
    %v3105 = vld [vmem:[#allocation12 + $0x9bc] sm:$0xff]
    %v3106 = vld [vmem:[#allocation12 + $0x9c4] sm:$0xff]
    %v3107 = vld [vmem:[#allocation12 + $0x9cc] sm:$0xff]
    %v3108 = vld [vmem:[#allocation12 + $0x9d4] sm:$0xf]
    %v3109 = vld [vmem:[#allocation12 + $0x9d8] sm:$0xff]
    %v3110 = vld [vmem:[#allocation12 + $0x9e0] sm:$0xff]
    %v3111 = vld [vmem:[#allocation12 + $0x9e8] sm:$0xff]
    %v3112 = vld [vmem:[#allocation12 + $0x9f0] sm:$0xf]
    %v3113 = vld [vmem:[#allocation12 + $0x9f4] sm:$0xff]
    %v3114 = vld [vmem:[#allocation12 + $0x9fc] sm:$0xff]
    %v3115 = vld [vmem:[#allocation12 + $0xa04] sm:$0xff]
    %v3116 = vld [vmem:[#allocation12 + $0xa0c] sm:$0xf]
    %v3117 = vld [vmem:[#allocation12 + $0xa10] sm:$0xff]
    %v3118 = vld [vmem:[#allocation12 + $0xa18] sm:$0xff]
    %v3119 = vld [vmem:[#allocation12 + $0xa20] sm:$0xff]
    %v3120 = vld [vmem:[#allocation12 + $0xa28] sm:$0xf]
    %v3121 = vld [vmem:[#allocation12 + $0xa2c] sm:$0xff]
    %v3122 = vld [vmem:[#allocation12 + $0xa34] sm:$0xff]
    %v3123 = vld [vmem:[#allocation12 + $0xa3c] sm:$0xff]
    %v3124 = vld [vmem:[#allocation12 + $0xa44] sm:$0xf]
    %v3125 = vld [vmem:[#allocation12 + $0xa48] sm:$0xff]
    %v3126 = vld [vmem:[#allocation12 + $0xa50] sm:$0xff]
    %v3127 = vld [vmem:[#allocation12 + $0xa58] sm:$0xff]
    %v3128 = vld [vmem:[#allocation12 + $0xa60] sm:$0xf]
    %v3129 = vld [vmem:[#allocation12 + $0xa64] sm:$0xff]
    %v3130 = vld [vmem:[#allocation12 + $0xa6c] sm:$0xff]
    %v3131 = vld [vmem:[#allocation12 + $0xa74] sm:$0xff]
    %v3132 = vld [vmem:[#allocation12 + $0xa7c] sm:$0xf]
    %v3133 = vld [vmem:[#allocation12 + $0xa80] sm:$0xff]
    %v3134 = vld [vmem:[#allocation12 + $0xa88] sm:$0xff]
    %v3135 = vld [vmem:[#allocation12 + $0xa90] sm:$0xff]
    %v3136 = vld [vmem:[#allocation12 + $0xa98] sm:$0xf]
    %v3137 = vld [vmem:[#allocation12 + $0xa9c] sm:$0xff]
    %v3138 = vld [vmem:[#allocation12 + $0xaa4] sm:$0xff]
    %v3139 = vld [vmem:[#allocation12 + $0xaac] sm:$0xff]
    %v3140 = vld [vmem:[#allocation12 + $0xab4] sm:$0xf]
    %v3141 = vld [vmem:[#allocation12 + $0xab8] sm:$0xff]
    %v3142 = vld [vmem:[#allocation12 + $0xac0] sm:$0xff]
    %v3143 = vld [vmem:[#allocation12 + $0xac8] sm:$0xff]
    %v3144 = vld [vmem:[#allocation12 + $0xad0] sm:$0xf]
    %v3145 = vld [vmem:[#allocation12 + $0xad4] sm:$0xff]
    %v3146 = vld [vmem:[#allocation12 + $0xadc] sm:$0xff]
    %v3147 = vld [vmem:[#allocation12 + $0xae4] sm:$0xff]
    %v3148 = vld [vmem:[#allocation12 + $0xaec] sm:$0xf]
    %v3149 = vld [vmem:[#allocation12 + $0xaf0] sm:$0xff]
    %v3150 = vld [vmem:[#allocation12 + $0xaf8] sm:$0xff]
    %v3151 = vld [vmem:[#allocation12 + $0xb00] sm:$0xff]
    %v3152 = vld [vmem:[#allocation12 + $0xb08] sm:$0xf]
    %v3153 = vld [vmem:[#allocation12 + $0xb0c] sm:$0xff]
    %v3154 = vld [vmem:[#allocation12 + $0xb14] sm:$0xff]
    %v3155 = vld [vmem:[#allocation12 + $0xb1c] sm:$0xff]
    %v3156 = vld [vmem:[#allocation12 + $0xb24] sm:$0xf]
    %v3157 = vld [vmem:[#allocation12 + $0xb28] sm:$0xff]
    %v3158 = vld [vmem:[#allocation12 + $0xb30] sm:$0xff]
    %v3159 = vld [vmem:[#allocation12 + $0xb38] sm:$0xff]
    %v3160 = vld [vmem:[#allocation12 + $0xb40] sm:$0xf]
    %v3161 = vld [vmem:[#allocation12 + $0xb44] sm:$0xff]
    %v3162 = vld [vmem:[#allocation12 + $0xb4c] sm:$0xff]
    %v3163 = vld [vmem:[#allocation12 + $0xb54] sm:$0xff]
    %v3164 = vld [vmem:[#allocation12 + $0xb5c] sm:$0xf]
    %v3165 = vld [vmem:[#allocation12 + $0xb60] sm:$0xff]
    %v3166 = vld [vmem:[#allocation12 + $0xb68] sm:$0xff]
    %v3167 = vld [vmem:[#allocation12 + $0xb70] sm:$0xff]
    %v3168 = vld [vmem:[#allocation12 + $0xb78] sm:$0xf]
    %v3169 = vld [vmem:[#allocation12 + $0xb7c] sm:$0xff]
    %v3170 = vld [vmem:[#allocation12 + $0xb84] sm:$0xff]
    %v3171 = vld [vmem:[#allocation12 + $0xb8c] sm:$0xff]
    %v3172 = vld [vmem:[#allocation12 + $0xb94] sm:$0xf]
    %v3173 = vld [vmem:[#allocation12 + $0xb98] sm:$0xff]
    %v3174 = vld [vmem:[#allocation12 + $0xba0] sm:$0xff]
    %v3175 = vld [vmem:[#allocation12 + $0xba8] sm:$0xff]
    %v3176 = vld [vmem:[#allocation12 + $0xbb0] sm:$0xf]
    %v3177 = vld [vmem:[#allocation12 + $0xbb4] sm:$0xff]
    %v3178 = vld [vmem:[#allocation12 + $0xbbc] sm:$0xff]
    %v3179 = vld [vmem:[#allocation12 + $0xbc4] sm:$0xff]
    %v3180 = vld [vmem:[#allocation12 + $0xbcc] sm:$0xf]
    %v3181 = vld [vmem:[#allocation12 + $0xbd0] sm:$0xff]
    %v3182 = vld [vmem:[#allocation12 + $0xbd8] sm:$0xff]
    %v3183 = vld [vmem:[#allocation12 + $0xbe0] sm:$0xff]
    %v3184 = vld [vmem:[#allocation12 + $0xbe8] sm:$0xf]
    %v3185 = vld [vmem:[#allocation12 + $0xbec] sm:$0xff]
    %v3186 = vld [vmem:[#allocation12 + $0xbf4] sm:$0xff]
    %v3187 = vld [vmem:[#allocation12 + $0xbfc] sm:$0xff]
    %v3188 = vld [vmem:[#allocation12 + $0xc04] sm:$0xf]
    %v3189 = vld [vmem:[#allocation12 + $0xc08] sm:$0xff]
    %v3190 = vld [vmem:[#allocation12 + $0xc10] sm:$0xff]
    %v3191 = vld [vmem:[#allocation12 + $0xc18] sm:$0xff]
    %v3192 = vld [vmem:[#allocation12 + $0xc20] sm:$0xf]
    %v3193 = vld [vmem:[#allocation12 + $0xc24] sm:$0xff]
    %v3194 = vld [vmem:[#allocation12 + $0xc2c] sm:$0xff]
    %v3195 = vld [vmem:[#allocation12 + $0xc34] sm:$0xff]
    %v3196 = vld [vmem:[#allocation12 + $0xc3c] sm:$0xf]
    %v3197 = vld [vmem:[#allocation12 + $0xc40] sm:$0xff]
    %v3198 = vld [vmem:[#allocation12 + $0xc48] sm:$0xff]
    %v3199 = vld [vmem:[#allocation12 + $0xc50] sm:$0xff]
    %v3200 = vld [vmem:[#allocation12 + $0xc58] sm:$0xf]
    %v3201 = vld [vmem:[#allocation12 + $0xc5c] sm:$0xff]
    %v3202 = vld [vmem:[#allocation12 + $0xc64] sm:$0xff]
    %v3203 = vld [vmem:[#allocation12 + $0xc6c] sm:$0xff]
    %v3204 = vld [vmem:[#allocation12 + $0xc74] sm:$0xf]
    %v3205 = vld [vmem:[#allocation12 + $0xc78] sm:$0xff]
    %v3206 = vld [vmem:[#allocation12 + $0xc80] sm:$0xff]
    %v3207 = vld [vmem:[#allocation12 + $0xc88] sm:$0xff]
    %v3208 = vld [vmem:[#allocation12 + $0xc90] sm:$0xf]
    %v3209 = vld [vmem:[#allocation12 + $0xc94] sm:$0xff]
    %v3210 = vld [vmem:[#allocation12 + $0xc9c] sm:$0xff]
    %v3211 = vld [vmem:[#allocation12 + $0xca4] sm:$0xff]
    %v3212 = vld [vmem:[#allocation12 + $0xcac] sm:$0xf]
    %v3213 = vld [vmem:[#allocation12 + $0xcb0] sm:$0xff]
    %v3214 = vld [vmem:[#allocation12 + $0xcb8] sm:$0xff]
    %v3215 = vld [vmem:[#allocation12 + $0xcc0] sm:$0xff]
    %v3216 = vld [vmem:[#allocation12 + $0xcc8] sm:$0xf]
    %v3217 = vld [vmem:[#allocation12 + $0xccc] sm:$0xff]
    %v3218 = vld [vmem:[#allocation12 + $0xcd4] sm:$0xff]
    %v3219 = vld [vmem:[#allocation12 + $0xcdc] sm:$0xff]
    %v3220 = vld [vmem:[#allocation12 + $0xce4] sm:$0xf]
    %v3221 = vld [vmem:[#allocation12 + $0xce8] sm:$0xff]
    %v3222 = vld [vmem:[#allocation12 + $0xcf0] sm:$0xff]
    %v3223 = vld [vmem:[#allocation12 + $0xcf8] sm:$0xff]
    %v3224 = vld [vmem:[#allocation12 + $0xd00] sm:$0xf]
    %v3225 = vld [vmem:[#allocation12 + $0xd04] sm:$0xff]
    %v3226 = vld [vmem:[#allocation12 + $0xd0c] sm:$0xff]
    %v3227 = vld [vmem:[#allocation12 + $0xd14] sm:$0xff]
    %v3228 = vld [vmem:[#allocation12 + $0xd1c] sm:$0xf]
    %v3229 = vld [vmem:[#allocation12 + $0xd20] sm:$0xff]
    %v3230 = vld [vmem:[#allocation12 + $0xd28] sm:$0xff]
    %v3231 = vld [vmem:[#allocation12 + $0xd30] sm:$0xff]
    %v3232 = vld [vmem:[#allocation12 + $0xd38] sm:$0xf]
    %v3233 = vld [vmem:[#allocation12 + $0xd3c] sm:$0xff]
    %v3234 = vld [vmem:[#allocation12 + $0xd44] sm:$0xff]
    %v3235 = vld [vmem:[#allocation12 + $0xd4c] sm:$0xff]
    %v3236 = vld [vmem:[#allocation12 + $0xd54] sm:$0xf]
    %v3237 = vld [vmem:[#allocation12 + $0xd58] sm:$0xff]
    %v3238 = vld [vmem:[#allocation12 + $0xd60] sm:$0xff]
    %v3239 = vld [vmem:[#allocation12 + $0xd68] sm:$0xff]
    %v3240 = vld [vmem:[#allocation12 + $0xd70] sm:$0xf]
    %v3241 = vld [vmem:[#allocation12 + $0xd74] sm:$0xff]
    %v3242 = vld [vmem:[#allocation12 + $0xd7c] sm:$0xff]
    %v3243 = vld [vmem:[#allocation12 + $0xd84] sm:$0xff]
    %v3244 = vld [vmem:[#allocation12 + $0xd8c] sm:$0xf]
    %v3245 = vld [vmem:[#allocation12 + $0xd90] sm:$0xff]
    %v3246 = vld [vmem:[#allocation12 + $0xd98] sm:$0xff]
    %v3247 = vld [vmem:[#allocation12 + $0xda0] sm:$0xff]
    %v3248 = vld [vmem:[#allocation12 + $0xda8] sm:$0xf]
    %v3249 = vld [vmem:[#allocation12 + $0xdac] sm:$0xff]
    %v3250 = vld [vmem:[#allocation12 + $0xdb4] sm:$0xff]
    %v3251 = vld [vmem:[#allocation12 + $0xdbc] sm:$0xff]
    %v3252 = vld [vmem:[#allocation12 + $0xdc4] sm:$0xf]
    %v3253 = vld [vmem:[#allocation12 + $0xdc8] sm:$0xff]
    %v3254 = vld [vmem:[#allocation12 + $0xdd0] sm:$0xff]
    %v3255 = vld [vmem:[#allocation12 + $0xdd8] sm:$0xff]
    %v3256 = vld [vmem:[#allocation12 + $0xde0] sm:$0xf]
    %v3257 = vld [vmem:[#allocation12 + $0xde4] sm:$0xff]
    %v3258 = vld [vmem:[#allocation12 + $0xdec] sm:$0xff]
    %v3259 = vld [vmem:[#allocation12 + $0xdf4] sm:$0xff]
    %v3260 = vld [vmem:[#allocation12 + $0xdfc] sm:$0xf]
    %v3261 = vld [vmem:[#allocation13] sm:$0xff]
    %v3263 = vlaneseq
    %v3264 = vshrl.u32 %v3263, 7
    %v3265 = vsub.s32 0, %v3264
    %v3266 = vrot.slane %v3261, %v3265
    %v3267 = vlaneseq
    %v3268 = vshrl.u32 %v3267, 7
    %v3269 = vsub.s32 1, %v3268
    %v3270 = vrot.slane %v3261, %v3269
    %v3271 = vlaneseq
    %v3272 = vshrl.u32 %v3271, 7
    %v3273 = vsub.s32 2, %v3272
    %v3274 = vrot.slane %v3261, %v3273
    %v3275 = vlaneseq
    %v3276 = vshrl.u32 %v3275, 7
    %v3277 = vsub.s32 3, %v3276
    %v3278 = vrot.slane %v3261, %v3277
    %v3279 = vlaneseq
    %v3280 = vshrl.u32 %v3279, 7
    %v3281 = vsub.s32 4, %v3280
    %v3282 = vrot.slane %v3261, %v3281
    %v3283 = vlaneseq
    %v3284 = vshrl.u32 %v3283, 7
    %v3285 = vsub.s32 5, %v3284
    %v3286 = vrot.slane %v3261, %v3285
    %v3287 = vlaneseq
    %v3288 = vshrl.u32 %v3287, 7
    %v3289 = vsub.s32 6, %v3288
    %v3290 = vrot.slane %v3261, %v3289
    %v3810 = vunpack.c.l.b16 %v2749
    %v3811 = vunpack.c.h.b16 %v2749
    %v3812 = vunpack.c.l.b16 %v2750
    %v3813 = vunpack.c.h.b16 %v2750
    %v3814 = vunpack.c.l.b16 %v2751
    %v3815 = vunpack.c.h.b16 %v2751
    %v3816 = vunpack.c.l.b16 %v2752
    %v3817 = vunpack.c.l.b16 %v2753
    %v3818 = vunpack.c.h.b16 %v2753
    %v3819 = vunpack.c.l.b16 %v2754
    %v3820 = vunpack.c.h.b16 %v2754
    %v3821 = vunpack.c.l.b16 %v2755
    %v3822 = vunpack.c.h.b16 %v2755
    %v3823 = vunpack.c.l.b16 %v2756
    %v3824 = vunpack.c.l.b16 %v2757
    %v3825 = vunpack.c.h.b16 %v2757
    %v3826 = vunpack.c.l.b16 %v2758
    %v3827 = vunpack.c.h.b16 %v2758
    %v3828 = vunpack.c.l.b16 %v2759
    %v3829 = vunpack.c.h.b16 %v2759
    %v3830 = vunpack.c.l.b16 %v2760
    %v3831 = vunpack.c.l.b16 %v2761
    %v3832 = vunpack.c.h.b16 %v2761
    %v3833 = vunpack.c.l.b16 %v2762
    %v3834 = vunpack.c.h.b16 %v2762
    %v3835 = vunpack.c.l.b16 %v2763
    %v3836 = vunpack.c.h.b16 %v2763
    %v3837 = vunpack.c.l.b16 %v2764
    %v3838 = vunpack.c.l.b16 %v2765
    %v3839 = vunpack.c.h.b16 %v2765
    %v3840 = vunpack.c.l.b16 %v2766
    %v3841 = vunpack.c.h.b16 %v2766
    %v3842 = vunpack.c.l.b16 %v2767
    %v3843 = vunpack.c.h.b16 %v2767
    %v3844 = vunpack.c.l.b16 %v2768
    %v3845 = vunpack.c.l.b16 %v2769
    %v3846 = vunpack.c.h.b16 %v2769
    %v3847 = vunpack.c.l.b16 %v2770
    %v3848 = vunpack.c.h.b16 %v2770
    %v3849 = vunpack.c.l.b16 %v2771
    %v3850 = vunpack.c.h.b16 %v2771
    %v3851 = vunpack.c.l.b16 %v2772
    %v3852 = vunpack.c.l.b16 %v2773
    %v3853 = vunpack.c.h.b16 %v2773
    %v3854 = vunpack.c.l.b16 %v2774
    %v3855 = vunpack.c.h.b16 %v2774
    %v3856 = vunpack.c.l.b16 %v2775
    %v3857 = vunpack.c.h.b16 %v2775
    %v3858 = vunpack.c.l.b16 %v2776
    %v3859 = vunpack.c.l.b16 %v2777
    %v3860 = vunpack.c.h.b16 %v2777
    %v3861 = vunpack.c.l.b16 %v2778
    %v3862 = vunpack.c.h.b16 %v2778
    %v3863 = vunpack.c.l.b16 %v2779
    %v3864 = vunpack.c.h.b16 %v2779
    %v3865 = vunpack.c.l.b16 %v2780
    %v3866 = vunpack.c.l.b16 %v2781
    %v3867 = vunpack.c.h.b16 %v2781
    %v3868 = vunpack.c.l.b16 %v2782
    %v3869 = vunpack.c.h.b16 %v2782
    %v3870 = vunpack.c.l.b16 %v2783
    %v3871 = vunpack.c.h.b16 %v2783
    %v3872 = vunpack.c.l.b16 %v2784
    %v3873 = vunpack.c.l.b16 %v2785
    %v3874 = vunpack.c.h.b16 %v2785
    %v3875 = vunpack.c.l.b16 %v2786
    %v3876 = vunpack.c.h.b16 %v2786
    %v3877 = vunpack.c.l.b16 %v2787
    %v3878 = vunpack.c.h.b16 %v2787
    %v3879 = vunpack.c.l.b16 %v2788
    %v3880 = vunpack.c.l.b16 %v2789
    %v3881 = vunpack.c.h.b16 %v2789
    %v3882 = vunpack.c.l.b16 %v2790
    %v3883 = vunpack.c.h.b16 %v2790
    %v3884 = vunpack.c.l.b16 %v2791
    %v3885 = vunpack.c.h.b16 %v2791
    %v3886 = vunpack.c.l.b16 %v2792
    %v3887 = vunpack.c.l.b16 %v2793
    %v3888 = vunpack.c.h.b16 %v2793
    %v3889 = vunpack.c.l.b16 %v2794
    %v3890 = vunpack.c.h.b16 %v2794
    %v3891 = vunpack.c.l.b16 %v2795
    %v3892 = vunpack.c.h.b16 %v2795
    %v3893 = vunpack.c.l.b16 %v2796
    %v3894 = vunpack.c.l.b16 %v2797
    %v3895 = vunpack.c.h.b16 %v2797
    %v3896 = vunpack.c.l.b16 %v2798
    %v3897 = vunpack.c.h.b16 %v2798
    %v3898 = vunpack.c.l.b16 %v2799
    %v3899 = vunpack.c.h.b16 %v2799
    %v3900 = vunpack.c.l.b16 %v2800
    %v3901 = vunpack.c.l.b16 %v2801
    %v3902 = vunpack.c.h.b16 %v2801
    %v3903 = vunpack.c.l.b16 %v2802
    %v3904 = vunpack.c.h.b16 %v2802
    %v3905 = vunpack.c.l.b16 %v2803
    %v3906 = vunpack.c.h.b16 %v2803
    %v3907 = vunpack.c.l.b16 %v2804
    %v3908 = vunpack.c.l.b16 %v2805
    %v3909 = vunpack.c.h.b16 %v2805
    %v3910 = vunpack.c.l.b16 %v2806
    %v3911 = vunpack.c.h.b16 %v2806
    %v3912 = vunpack.c.l.b16 %v2807
    %v3913 = vunpack.c.h.b16 %v2807
    %v3914 = vunpack.c.l.b16 %v2808
    %v3915 = vunpack.c.l.b16 %v2809
    %v3916 = vunpack.c.h.b16 %v2809
    %v3917 = vunpack.c.l.b16 %v2810
    %v3918 = vunpack.c.h.b16 %v2810
    %v3919 = vunpack.c.l.b16 %v2811
    %v3920 = vunpack.c.h.b16 %v2811
    %v3921 = vunpack.c.l.b16 %v2812
    %v3922 = vunpack.c.l.b16 %v2813
    %v3923 = vunpack.c.h.b16 %v2813
    %v3924 = vunpack.c.l.b16 %v2814
    %v3925 = vunpack.c.h.b16 %v2814
    %v3926 = vunpack.c.l.b16 %v2815
    %v3927 = vunpack.c.h.b16 %v2815
    %v3928 = vunpack.c.l.b16 %v2816
    %v3929 = vunpack.c.l.b16 %v2817
    %v3930 = vunpack.c.h.b16 %v2817
    %v3931 = vunpack.c.l.b16 %v2818
    %v3932 = vunpack.c.h.b16 %v2818
    %v3933 = vunpack.c.l.b16 %v2819
    %v3934 = vunpack.c.h.b16 %v2819
    %v3935 = vunpack.c.l.b16 %v2820
    %v3936 = vunpack.c.l.b16 %v2821
    %v3937 = vunpack.c.h.b16 %v2821
    %v3938 = vunpack.c.l.b16 %v2822
    %v3939 = vunpack.c.h.b16 %v2822
    %v3940 = vunpack.c.l.b16 %v2823
    %v3941 = vunpack.c.h.b16 %v2823
    %v3942 = vunpack.c.l.b16 %v2824
    %v3943 = vunpack.c.l.b16 %v2825
    %v3944 = vunpack.c.h.b16 %v2825
    %v3945 = vunpack.c.l.b16 %v2826
    %v3946 = vunpack.c.h.b16 %v2826
    %v3947 = vunpack.c.l.b16 %v2827
    %v3948 = vunpack.c.h.b16 %v2827
    %v3949 = vunpack.c.l.b16 %v2828
    %v3950 = vunpack.c.l.b16 %v2829
    %v3951 = vunpack.c.h.b16 %v2829
    %v3952 = vunpack.c.l.b16 %v2830
    %v3953 = vunpack.c.h.b16 %v2830
    %v3954 = vunpack.c.l.b16 %v2831
    %v3955 = vunpack.c.h.b16 %v2831
    %v3956 = vunpack.c.l.b16 %v2832
    %v3957 = vunpack.c.l.b16 %v2833
    %v3958 = vunpack.c.h.b16 %v2833
    %v3959 = vunpack.c.l.b16 %v2834
    %v3960 = vunpack.c.h.b16 %v2834
    %v3961 = vunpack.c.l.b16 %v2835
    %v3962 = vunpack.c.h.b16 %v2835
    %v3963 = vunpack.c.l.b16 %v2836
    %v3964 = vunpack.c.l.b16 %v2837
    %v3965 = vunpack.c.h.b16 %v2837
    %v3966 = vunpack.c.l.b16 %v2838
    %v3967 = vunpack.c.h.b16 %v2838
    %v3968 = vunpack.c.l.b16 %v2839
    %v3969 = vunpack.c.h.b16 %v2839
    %v3970 = vunpack.c.l.b16 %v2840
    %v3971 = vunpack.c.l.b16 %v2841
    %v3972 = vunpack.c.h.b16 %v2841
    %v3973 = vunpack.c.l.b16 %v2842
    %v3974 = vunpack.c.h.b16 %v2842
    %v3975 = vunpack.c.l.b16 %v2843
    %v3976 = vunpack.c.h.b16 %v2843
    %v3977 = vunpack.c.l.b16 %v2844
    %v3978 = vunpack.c.l.b16 %v2845
    %v3979 = vunpack.c.h.b16 %v2845
    %v3980 = vunpack.c.l.b16 %v2846
    %v3981 = vunpack.c.h.b16 %v2846
    %v3982 = vunpack.c.l.b16 %v2847
    %v3983 = vunpack.c.h.b16 %v2847
    %v3984 = vunpack.c.l.b16 %v2848
    %v3985 = vunpack.c.l.b16 %v2849
    %v3986 = vunpack.c.h.b16 %v2849
    %v3987 = vunpack.c.l.b16 %v2850
    %v3988 = vunpack.c.h.b16 %v2850
    %v3989 = vunpack.c.l.b16 %v2851
    %v3990 = vunpack.c.h.b16 %v2851
    %v3991 = vunpack.c.l.b16 %v2852
    %v3992 = vunpack.c.l.b16 %v2853
    %v3993 = vunpack.c.h.b16 %v2853
    %v3994 = vunpack.c.l.b16 %v2854
    %v3995 = vunpack.c.h.b16 %v2854
    %v3996 = vunpack.c.l.b16 %v2855
    %v3997 = vunpack.c.h.b16 %v2855
    %v3998 = vunpack.c.l.b16 %v2856
    %v3999 = vunpack.c.l.b16 %v2857
    %v4000 = vunpack.c.h.b16 %v2857
    %v4001 = vunpack.c.l.b16 %v2858
    %v4002 = vunpack.c.h.b16 %v2858
    %v4003 = vunpack.c.l.b16 %v2859
    %v4004 = vunpack.c.h.b16 %v2859
    %v4005 = vunpack.c.l.b16 %v2860
    %v4006 = vunpack.c.l.b16 %v2861
    %v4007 = vunpack.c.h.b16 %v2861
    %v4008 = vunpack.c.l.b16 %v2862
    %v4009 = vunpack.c.h.b16 %v2862
    %v4010 = vunpack.c.l.b16 %v2863
    %v4011 = vunpack.c.h.b16 %v2863
    %v4012 = vunpack.c.l.b16 %v2864
    %v4013 = vunpack.c.l.b16 %v2865
    %v4014 = vunpack.c.h.b16 %v2865
    %v4015 = vunpack.c.l.b16 %v2866
    %v4016 = vunpack.c.h.b16 %v2866
    %v4017 = vunpack.c.l.b16 %v2867
    %v4018 = vunpack.c.h.b16 %v2867
    %v4019 = vunpack.c.l.b16 %v2868
    %v4020 = vunpack.c.l.b16 %v2869
    %v4021 = vunpack.c.h.b16 %v2869
    %v4022 = vunpack.c.l.b16 %v2870
    %v4023 = vunpack.c.h.b16 %v2870
    %v4024 = vunpack.c.l.b16 %v2871
    %v4025 = vunpack.c.h.b16 %v2871
    %v4026 = vunpack.c.l.b16 %v2872
    %v4027 = vunpack.c.l.b16 %v2873
    %v4028 = vunpack.c.h.b16 %v2873
    %v4029 = vunpack.c.l.b16 %v2874
    %v4030 = vunpack.c.h.b16 %v2874
    %v4031 = vunpack.c.l.b16 %v2875
    %v4032 = vunpack.c.h.b16 %v2875
    %v4033 = vunpack.c.l.b16 %v2876
    %v4034 = vunpack.c.l.b16 %v2877
    %v4035 = vunpack.c.h.b16 %v2877
    %v4036 = vunpack.c.l.b16 %v2878
    %v4037 = vunpack.c.h.b16 %v2878
    %v4038 = vunpack.c.l.b16 %v2879
    %v4039 = vunpack.c.h.b16 %v2879
    %v4040 = vunpack.c.l.b16 %v2880
    %v4041 = vunpack.c.l.b16 %v2881
    %v4042 = vunpack.c.h.b16 %v2881
    %v4043 = vunpack.c.l.b16 %v2882
    %v4044 = vunpack.c.h.b16 %v2882
    %v4045 = vunpack.c.l.b16 %v2883
    %v4046 = vunpack.c.h.b16 %v2883
    %v4047 = vunpack.c.l.b16 %v2884
    %v4048 = vunpack.c.l.b16 %v2885
    %v4049 = vunpack.c.h.b16 %v2885
    %v4050 = vunpack.c.l.b16 %v2886
    %v4051 = vunpack.c.h.b16 %v2886
    %v4052 = vunpack.c.l.b16 %v2887
    %v4053 = vunpack.c.h.b16 %v2887
    %v4054 = vunpack.c.l.b16 %v2888
    %v4055 = vunpack.c.l.b16 %v2889
    %v4056 = vunpack.c.h.b16 %v2889
    %v4057 = vunpack.c.l.b16 %v2890
    %v4058 = vunpack.c.h.b16 %v2890
    %v4059 = vunpack.c.l.b16 %v2891
    %v4060 = vunpack.c.h.b16 %v2891
    %v4061 = vunpack.c.l.b16 %v2892
    %v4062 = vunpack.c.l.b16 %v2893
    %v4063 = vunpack.c.h.b16 %v2893
    %v4064 = vunpack.c.l.b16 %v2894
    %v4065 = vunpack.c.h.b16 %v2894
    %v4066 = vunpack.c.l.b16 %v2895
    %v4067 = vunpack.c.h.b16 %v2895
    %v4068 = vunpack.c.l.b16 %v2896
    %v4069 = vunpack.c.l.b16 %v2897
    %v4070 = vunpack.c.h.b16 %v2897
    %v4071 = vunpack.c.l.b16 %v2898
    %v4072 = vunpack.c.h.b16 %v2898
    %v4073 = vunpack.c.l.b16 %v2899
    %v4074 = vunpack.c.h.b16 %v2899
    %v4075 = vunpack.c.l.b16 %v2900
    %v4076 = vunpack.c.l.b16 %v2901
    %v4077 = vunpack.c.h.b16 %v2901
    %v4078 = vunpack.c.l.b16 %v2902
    %v4079 = vunpack.c.h.b16 %v2902
    %v4080 = vunpack.c.l.b16 %v2903
    %v4081 = vunpack.c.h.b16 %v2903
    %v4082 = vunpack.c.l.b16 %v2904
    %v4083 = vunpack.c.l.b16 %v2905
    %v4084 = vunpack.c.h.b16 %v2905
    %v4085 = vunpack.c.l.b16 %v2906
    %v4086 = vunpack.c.h.b16 %v2906
    %v4087 = vunpack.c.l.b16 %v2907
    %v4088 = vunpack.c.h.b16 %v2907
    %v4089 = vunpack.c.l.b16 %v2908
    %v4090 = vunpack.c.l.b16 %v2909
    %v4091 = vunpack.c.h.b16 %v2909
    %v4092 = vunpack.c.l.b16 %v2910
    %v4093 = vunpack.c.h.b16 %v2910
    %v4094 = vunpack.c.l.b16 %v2911
    %v4095 = vunpack.c.h.b16 %v2911
    %v4096 = vunpack.c.l.b16 %v2912
    %v4097 = vunpack.c.l.b16 %v2913
    %v4098 = vunpack.c.h.b16 %v2913
    %v4099 = vunpack.c.l.b16 %v2914
    %v4100 = vunpack.c.h.b16 %v2914
    %v4101 = vunpack.c.l.b16 %v2915
    %v4102 = vunpack.c.h.b16 %v2915
    %v4103 = vunpack.c.l.b16 %v2916
    %v4104 = vunpack.c.l.b16 %v2917
    %v4105 = vunpack.c.h.b16 %v2917
    %v4106 = vunpack.c.l.b16 %v2918
    %v4107 = vunpack.c.h.b16 %v2918
    %v4108 = vunpack.c.l.b16 %v2919
    %v4109 = vunpack.c.h.b16 %v2919
    %v4110 = vunpack.c.l.b16 %v2920
    %v4111 = vunpack.c.l.b16 %v2921
    %v4112 = vunpack.c.h.b16 %v2921
    %v4113 = vunpack.c.l.b16 %v2922
    %v4114 = vunpack.c.h.b16 %v2922
    %v4115 = vunpack.c.l.b16 %v2923
    %v4116 = vunpack.c.h.b16 %v2923
    %v4117 = vunpack.c.l.b16 %v2924
    %v4118 = vunpack.c.l.b16 %v2925
    %v4119 = vunpack.c.h.b16 %v2925
    %v4120 = vunpack.c.l.b16 %v2926
    %v4121 = vunpack.c.h.b16 %v2926
    %v4122 = vunpack.c.l.b16 %v2927
    %v4123 = vunpack.c.h.b16 %v2927
    %v4124 = vunpack.c.l.b16 %v2928
    %v4125 = vunpack.c.l.b16 %v2929
    %v4126 = vunpack.c.h.b16 %v2929
    %v4127 = vunpack.c.l.b16 %v2930
    %v4128 = vunpack.c.h.b16 %v2930
    %v4129 = vunpack.c.l.b16 %v2931
    %v4130 = vunpack.c.h.b16 %v2931
    %v4131 = vunpack.c.l.b16 %v2932
    %v4132 = vunpack.c.l.b16 %v2933
    %v4133 = vunpack.c.h.b16 %v2933
    %v4134 = vunpack.c.l.b16 %v2934
    %v4135 = vunpack.c.h.b16 %v2934
    %v4136 = vunpack.c.l.b16 %v2935
    %v4137 = vunpack.c.h.b16 %v2935
    %v4138 = vunpack.c.l.b16 %v2936
    %v4139 = vunpack.c.l.b16 %v2937
    %v4140 = vunpack.c.h.b16 %v2937
    %v4141 = vunpack.c.l.b16 %v2938
    %v4142 = vunpack.c.h.b16 %v2938
    %v4143 = vunpack.c.l.b16 %v2939
    %v4144 = vunpack.c.h.b16 %v2939
    %v4145 = vunpack.c.l.b16 %v2940
    %v4146 = vunpack.c.l.b16 %v2941
    %v4147 = vunpack.c.h.b16 %v2941
    %v4148 = vunpack.c.l.b16 %v2942
    %v4149 = vunpack.c.h.b16 %v2942
    %v4150 = vunpack.c.l.b16 %v2943
    %v4151 = vunpack.c.h.b16 %v2943
    %v4152 = vunpack.c.l.b16 %v2944
    %v4153 = vunpack.c.l.b16 %v2945
    %v4154 = vunpack.c.h.b16 %v2945
    %v4155 = vunpack.c.l.b16 %v2946
    %v4156 = vunpack.c.h.b16 %v2946
    %v4157 = vunpack.c.l.b16 %v2947
    %v4158 = vunpack.c.h.b16 %v2947
    %v4159 = vunpack.c.l.b16 %v2948
    %v4160 = vunpack.c.l.b16 %v2949
    %v4161 = vunpack.c.h.b16 %v2949
    %v4162 = vunpack.c.l.b16 %v2950
    %v4163 = vunpack.c.h.b16 %v2950
    %v4164 = vunpack.c.l.b16 %v2951
    %v4165 = vunpack.c.h.b16 %v2951
    %v4166 = vunpack.c.l.b16 %v2952
    %v4167 = vunpack.c.l.b16 %v2953
    %v4168 = vunpack.c.h.b16 %v2953
    %v4169 = vunpack.c.l.b16 %v2954
    %v4170 = vunpack.c.h.b16 %v2954
    %v4171 = vunpack.c.l.b16 %v2955
    %v4172 = vunpack.c.h.b16 %v2955
    %v4173 = vunpack.c.l.b16 %v2956
    %v4174 = vunpack.c.l.b16 %v2957
    %v4175 = vunpack.c.h.b16 %v2957
    %v4176 = vunpack.c.l.b16 %v2958
    %v4177 = vunpack.c.h.b16 %v2958
    %v4178 = vunpack.c.l.b16 %v2959
    %v4179 = vunpack.c.h.b16 %v2959
    %v4180 = vunpack.c.l.b16 %v2960
    %v4181 = vunpack.c.l.b16 %v2961
    %v4182 = vunpack.c.h.b16 %v2961
    %v4183 = vunpack.c.l.b16 %v2962
    %v4184 = vunpack.c.h.b16 %v2962
    %v4185 = vunpack.c.l.b16 %v2963
    %v4186 = vunpack.c.h.b16 %v2963
    %v4187 = vunpack.c.l.b16 %v2964
    %v4188 = vunpack.c.l.b16 %v2965
    %v4189 = vunpack.c.h.b16 %v2965
    %v4190 = vunpack.c.l.b16 %v2966
    %v4191 = vunpack.c.h.b16 %v2966
    %v4192 = vunpack.c.l.b16 %v2967
    %v4193 = vunpack.c.h.b16 %v2967
    %v4194 = vunpack.c.l.b16 %v2968
    %v4195 = vunpack.c.l.b16 %v2969
    %v4196 = vunpack.c.h.b16 %v2969
    %v4197 = vunpack.c.l.b16 %v2970
    %v4198 = vunpack.c.h.b16 %v2970
    %v4199 = vunpack.c.l.b16 %v2971
    %v4200 = vunpack.c.h.b16 %v2971
    %v4201 = vunpack.c.l.b16 %v2972
    %v4202 = vunpack.c.l.b16 %v2973
    %v4203 = vunpack.c.h.b16 %v2973
    %v4204 = vunpack.c.l.b16 %v2974
    %v4205 = vunpack.c.h.b16 %v2974
    %v4206 = vunpack.c.l.b16 %v2975
    %v4207 = vunpack.c.h.b16 %v2975
    %v4208 = vunpack.c.l.b16 %v2976
    %v4209 = vunpack.c.l.b16 %v2977
    %v4210 = vunpack.c.h.b16 %v2977
    %v4211 = vunpack.c.l.b16 %v2978
    %v4212 = vunpack.c.h.b16 %v2978
    %v4213 = vunpack.c.l.b16 %v2979
    %v4214 = vunpack.c.h.b16 %v2979
    %v4215 = vunpack.c.l.b16 %v2980
    %v4216 = vunpack.c.l.b16 %v2981
    %v4217 = vunpack.c.h.b16 %v2981
    %v4218 = vunpack.c.l.b16 %v2982
    %v4219 = vunpack.c.h.b16 %v2982
    %v4220 = vunpack.c.l.b16 %v2983
    %v4221 = vunpack.c.h.b16 %v2983
    %v4222 = vunpack.c.l.b16 %v2984
    %v4223 = vunpack.c.l.b16 %v2985
    %v4224 = vunpack.c.h.b16 %v2985
    %v4225 = vunpack.c.l.b16 %v2986
    %v4226 = vunpack.c.h.b16 %v2986
    %v4227 = vunpack.c.l.b16 %v2987
    %v4228 = vunpack.c.h.b16 %v2987
    %v4229 = vunpack.c.l.b16 %v2988
    %v4230 = vunpack.c.l.b16 %v2989
    %v4231 = vunpack.c.h.b16 %v2989
    %v4232 = vunpack.c.l.b16 %v2990
    %v4233 = vunpack.c.h.b16 %v2990
    %v4234 = vunpack.c.l.b16 %v2991
    %v4235 = vunpack.c.h.b16 %v2991
    %v4236 = vunpack.c.l.b16 %v2992
    %v4237 = vunpack.c.l.b16 %v2993
    %v4238 = vunpack.c.h.b16 %v2993
    %v4239 = vunpack.c.l.b16 %v2994
    %v4240 = vunpack.c.h.b16 %v2994
    %v4241 = vunpack.c.l.b16 %v2995
    %v4242 = vunpack.c.h.b16 %v2995
    %v4243 = vunpack.c.l.b16 %v2996
    %v4244 = vunpack.c.l.b16 %v2997
    %v4245 = vunpack.c.h.b16 %v2997
    %v4246 = vunpack.c.l.b16 %v2998
    %v4247 = vunpack.c.h.b16 %v2998
    %v4248 = vunpack.c.l.b16 %v2999
    %v4249 = vunpack.c.h.b16 %v2999
    %v4250 = vunpack.c.l.b16 %v3000
    %v4251 = vunpack.c.l.b16 %v3001
    %v4252 = vunpack.c.h.b16 %v3001
    %v4253 = vunpack.c.l.b16 %v3002
    %v4254 = vunpack.c.h.b16 %v3002
    %v4255 = vunpack.c.l.b16 %v3003
    %v4256 = vunpack.c.h.b16 %v3003
    %v4257 = vunpack.c.l.b16 %v3004
    %v4258 = vunpack.c.l.b16 %v3005
    %v4259 = vunpack.c.h.b16 %v3005
    %v4260 = vunpack.c.l.b16 %v3006
    %v4261 = vunpack.c.h.b16 %v3006
    %v4262 = vunpack.c.l.b16 %v3007
    %v4263 = vunpack.c.h.b16 %v3007
    %v4264 = vunpack.c.l.b16 %v3008
    %v4265 = vunpack.c.l.b16 %v3009
    %v4266 = vunpack.c.h.b16 %v3009
    %v4267 = vunpack.c.l.b16 %v3010
    %v4268 = vunpack.c.h.b16 %v3010
    %v4269 = vunpack.c.l.b16 %v3011
    %v4270 = vunpack.c.h.b16 %v3011
    %v4271 = vunpack.c.l.b16 %v3012
    %v4272 = vunpack.c.l.b16 %v3013
    %v4273 = vunpack.c.h.b16 %v3013
    %v4274 = vunpack.c.l.b16 %v3014
    %v4275 = vunpack.c.h.b16 %v3014
    %v4276 = vunpack.c.l.b16 %v3015
    %v4277 = vunpack.c.h.b16 %v3015
    %v4278 = vunpack.c.l.b16 %v3016
    %v4279 = vunpack.c.l.b16 %v3017
    %v4280 = vunpack.c.h.b16 %v3017
    %v4281 = vunpack.c.l.b16 %v3018
    %v4282 = vunpack.c.h.b16 %v3018
    %v4283 = vunpack.c.l.b16 %v3019
    %v4284 = vunpack.c.h.b16 %v3019
    %v4285 = vunpack.c.l.b16 %v3020
    %v4286 = vunpack.c.l.b16 %v3021
    %v4287 = vunpack.c.h.b16 %v3021
    %v4288 = vunpack.c.l.b16 %v3022
    %v4289 = vunpack.c.h.b16 %v3022
    %v4290 = vunpack.c.l.b16 %v3023
    %v4291 = vunpack.c.h.b16 %v3023
    %v4292 = vunpack.c.l.b16 %v3024
    %v4293 = vunpack.c.l.b16 %v3025
    %v4294 = vunpack.c.h.b16 %v3025
    %v4295 = vunpack.c.l.b16 %v3026
    %v4296 = vunpack.c.h.b16 %v3026
    %v4297 = vunpack.c.l.b16 %v3027
    %v4298 = vunpack.c.h.b16 %v3027
    %v4299 = vunpack.c.l.b16 %v3028
    %v4300 = vunpack.c.l.b16 %v3029
    %v4301 = vunpack.c.h.b16 %v3029
    %v4302 = vunpack.c.l.b16 %v3030
    %v4303 = vunpack.c.h.b16 %v3030
    %v4304 = vunpack.c.l.b16 %v3031
    %v4305 = vunpack.c.h.b16 %v3031
    %v4306 = vunpack.c.l.b16 %v3032
    %v4307 = vunpack.c.l.b16 %v3033
    %v4308 = vunpack.c.h.b16 %v3033
    %v4309 = vunpack.c.l.b16 %v3034
    %v4310 = vunpack.c.h.b16 %v3034
    %v4311 = vunpack.c.l.b16 %v3035
    %v4312 = vunpack.c.h.b16 %v3035
    %v4313 = vunpack.c.l.b16 %v3036
    %v4314 = vunpack.c.l.b16 %v3037
    %v4315 = vunpack.c.h.b16 %v3037
    %v4316 = vunpack.c.l.b16 %v3038
    %v4317 = vunpack.c.h.b16 %v3038
    %v4318 = vunpack.c.l.b16 %v3039
    %v4319 = vunpack.c.h.b16 %v3039
    %v4320 = vunpack.c.l.b16 %v3040
    %v4321 = vunpack.c.l.b16 %v3041
    %v4322 = vunpack.c.h.b16 %v3041
    %v4323 = vunpack.c.l.b16 %v3042
    %v4324 = vunpack.c.h.b16 %v3042
    %v4325 = vunpack.c.l.b16 %v3043
    %v4326 = vunpack.c.h.b16 %v3043
    %v4327 = vunpack.c.l.b16 %v3044
    %v4328 = vunpack.c.l.b16 %v3045
    %v4329 = vunpack.c.h.b16 %v3045
    %v4330 = vunpack.c.l.b16 %v3046
    %v4331 = vunpack.c.h.b16 %v3046
    %v4332 = vunpack.c.l.b16 %v3047
    %v4333 = vunpack.c.h.b16 %v3047
    %v4334 = vunpack.c.l.b16 %v3048
    %v4335 = vunpack.c.l.b16 %v3049
    %v4336 = vunpack.c.h.b16 %v3049
    %v4337 = vunpack.c.l.b16 %v3050
    %v4338 = vunpack.c.h.b16 %v3050
    %v4339 = vunpack.c.l.b16 %v3051
    %v4340 = vunpack.c.h.b16 %v3051
    %v4341 = vunpack.c.l.b16 %v3052
    %v4342 = vunpack.c.l.b16 %v3053
    %v4343 = vunpack.c.h.b16 %v3053
    %v4344 = vunpack.c.l.b16 %v3054
    %v4345 = vunpack.c.h.b16 %v3054
    %v4346 = vunpack.c.l.b16 %v3055
    %v4347 = vunpack.c.h.b16 %v3055
    %v4348 = vunpack.c.l.b16 %v3056
    %v4349 = vunpack.c.l.b16 %v3057
    %v4350 = vunpack.c.h.b16 %v3057
    %v4351 = vunpack.c.l.b16 %v3058
    %v4352 = vunpack.c.h.b16 %v3058
    %v4353 = vunpack.c.l.b16 %v3059
    %v4354 = vunpack.c.h.b16 %v3059
    %v4355 = vunpack.c.l.b16 %v3060
    %v4356 = vunpack.c.l.b16 %v3061
    %v4357 = vunpack.c.h.b16 %v3061
    %v4358 = vunpack.c.l.b16 %v3062
    %v4359 = vunpack.c.h.b16 %v3062
    %v4360 = vunpack.c.l.b16 %v3063
    %v4361 = vunpack.c.h.b16 %v3063
    %v4362 = vunpack.c.l.b16 %v3064
    %v4363 = vunpack.c.l.b16 %v3065
    %v4364 = vunpack.c.h.b16 %v3065
    %v4365 = vunpack.c.l.b16 %v3066
    %v4366 = vunpack.c.h.b16 %v3066
    %v4367 = vunpack.c.l.b16 %v3067
    %v4368 = vunpack.c.h.b16 %v3067
    %v4369 = vunpack.c.l.b16 %v3068
    %v4370 = vunpack.c.l.b16 %v3069
    %v4371 = vunpack.c.h.b16 %v3069
    %v4372 = vunpack.c.l.b16 %v3070
    %v4373 = vunpack.c.h.b16 %v3070
    %v4374 = vunpack.c.l.b16 %v3071
    %v4375 = vunpack.c.h.b16 %v3071
    %v4376 = vunpack.c.l.b16 %v3072
    %v4377 = vunpack.c.l.b16 %v3073
    %v4378 = vunpack.c.h.b16 %v3073
    %v4379 = vunpack.c.l.b16 %v3074
    %v4380 = vunpack.c.h.b16 %v3074
    %v4381 = vunpack.c.l.b16 %v3075
    %v4382 = vunpack.c.h.b16 %v3075
    %v4383 = vunpack.c.l.b16 %v3076
    %v4384 = vunpack.c.l.b16 %v3077
    %v4385 = vunpack.c.h.b16 %v3077
    %v4386 = vunpack.c.l.b16 %v3078
    %v4387 = vunpack.c.h.b16 %v3078
    %v4388 = vunpack.c.l.b16 %v3079
    %v4389 = vunpack.c.h.b16 %v3079
    %v4390 = vunpack.c.l.b16 %v3080
    %v4391 = vunpack.c.l.b16 %v3081
    %v4392 = vunpack.c.h.b16 %v3081
    %v4393 = vunpack.c.l.b16 %v3082
    %v4394 = vunpack.c.h.b16 %v3082
    %v4395 = vunpack.c.l.b16 %v3083
    %v4396 = vunpack.c.h.b16 %v3083
    %v4397 = vunpack.c.l.b16 %v3084
    %v4398 = vunpack.c.l.b16 %v3085
    %v4399 = vunpack.c.h.b16 %v3085
    %v4400 = vunpack.c.l.b16 %v3086
    %v4401 = vunpack.c.h.b16 %v3086
    %v4402 = vunpack.c.l.b16 %v3087
    %v4403 = vunpack.c.h.b16 %v3087
    %v4404 = vunpack.c.l.b16 %v3088
    %v4405 = vunpack.c.l.b16 %v3089
    %v4406 = vunpack.c.h.b16 %v3089
    %v4407 = vunpack.c.l.b16 %v3090
    %v4408 = vunpack.c.h.b16 %v3090
    %v4409 = vunpack.c.l.b16 %v3091
    %v4410 = vunpack.c.h.b16 %v3091
    %v4411 = vunpack.c.l.b16 %v3092
    %v4412 = vunpack.c.l.b16 %v3093
    %v4413 = vunpack.c.h.b16 %v3093
    %v4414 = vunpack.c.l.b16 %v3094
    %v4415 = vunpack.c.h.b16 %v3094
    %v4416 = vunpack.c.l.b16 %v3095
    %v4417 = vunpack.c.h.b16 %v3095
    %v4418 = vunpack.c.l.b16 %v3096
    %v4419 = vunpack.c.l.b16 %v3097
    %v4420 = vunpack.c.h.b16 %v3097
    %v4421 = vunpack.c.l.b16 %v3098
    %v4422 = vunpack.c.h.b16 %v3098
    %v4423 = vunpack.c.l.b16 %v3099
    %v4424 = vunpack.c.h.b16 %v3099
    %v4425 = vunpack.c.l.b16 %v3100
    %v4426 = vunpack.c.l.b16 %v3101
    %v4427 = vunpack.c.h.b16 %v3101
    %v4428 = vunpack.c.l.b16 %v3102
    %v4429 = vunpack.c.h.b16 %v3102
    %v4430 = vunpack.c.l.b16 %v3103
    %v4431 = vunpack.c.h.b16 %v3103
    %v4432 = vunpack.c.l.b16 %v3104
    %v4433 = vunpack.c.l.b16 %v3105
    %v4434 = vunpack.c.h.b16 %v3105
    %v4435 = vunpack.c.l.b16 %v3106
    %v4436 = vunpack.c.h.b16 %v3106
    %v4437 = vunpack.c.l.b16 %v3107
    %v4438 = vunpack.c.h.b16 %v3107
    %v4439 = vunpack.c.l.b16 %v3108
    %v4440 = vunpack.c.l.b16 %v3109
    %v4441 = vunpack.c.h.b16 %v3109
    %v4442 = vunpack.c.l.b16 %v3110
    %v4443 = vunpack.c.h.b16 %v3110
    %v4444 = vunpack.c.l.b16 %v3111
    %v4445 = vunpack.c.h.b16 %v3111
    %v4446 = vunpack.c.l.b16 %v3112
    %v4447 = vunpack.c.l.b16 %v3113
    %v4448 = vunpack.c.h.b16 %v3113
    %v4449 = vunpack.c.l.b16 %v3114
    %v4450 = vunpack.c.h.b16 %v3114
    %v4451 = vunpack.c.l.b16 %v3115
    %v4452 = vunpack.c.h.b16 %v3115
    %v4453 = vunpack.c.l.b16 %v3116
    %v4454 = vunpack.c.l.b16 %v3117
    %v4455 = vunpack.c.h.b16 %v3117
    %v4456 = vunpack.c.l.b16 %v3118
    %v4457 = vunpack.c.h.b16 %v3118
    %v4458 = vunpack.c.l.b16 %v3119
    %v4459 = vunpack.c.h.b16 %v3119
    %v4460 = vunpack.c.l.b16 %v3120
    %v4461 = vunpack.c.l.b16 %v3121
    %v4462 = vunpack.c.h.b16 %v3121
    %v4463 = vunpack.c.l.b16 %v3122
    %v4464 = vunpack.c.h.b16 %v3122
    %v4465 = vunpack.c.l.b16 %v3123
    %v4466 = vunpack.c.h.b16 %v3123
    %v4467 = vunpack.c.l.b16 %v3124
    %v4468 = vunpack.c.l.b16 %v3125
    %v4469 = vunpack.c.h.b16 %v3125
    %v4470 = vunpack.c.l.b16 %v3126
    %v4471 = vunpack.c.h.b16 %v3126
    %v4472 = vunpack.c.l.b16 %v3127
    %v4473 = vunpack.c.h.b16 %v3127
    %v4474 = vunpack.c.l.b16 %v3128
    %v4475 = vunpack.c.l.b16 %v3129
    %v4476 = vunpack.c.h.b16 %v3129
    %v4477 = vunpack.c.l.b16 %v3130
    %v4478 = vunpack.c.h.b16 %v3130
    %v4479 = vunpack.c.l.b16 %v3131
    %v4480 = vunpack.c.h.b16 %v3131
    %v4481 = vunpack.c.l.b16 %v3132
    %v4482 = vunpack.c.l.b16 %v3133
    %v4483 = vunpack.c.h.b16 %v3133
    %v4484 = vunpack.c.l.b16 %v3134
    %v4485 = vunpack.c.h.b16 %v3134
    %v4486 = vunpack.c.l.b16 %v3135
    %v4487 = vunpack.c.h.b16 %v3135
    %v4488 = vunpack.c.l.b16 %v3136
    %v4489 = vunpack.c.l.b16 %v3137
    %v4490 = vunpack.c.h.b16 %v3137
    %v4491 = vunpack.c.l.b16 %v3138
    %v4492 = vunpack.c.h.b16 %v3138
    %v4493 = vunpack.c.l.b16 %v3139
    %v4494 = vunpack.c.h.b16 %v3139
    %v4495 = vunpack.c.l.b16 %v3140
    %v4496 = vunpack.c.l.b16 %v3141
    %v4497 = vunpack.c.h.b16 %v3141
    %v4498 = vunpack.c.l.b16 %v3142
    %v4499 = vunpack.c.h.b16 %v3142
    %v4500 = vunpack.c.l.b16 %v3143
    %v4501 = vunpack.c.h.b16 %v3143
    %v4502 = vunpack.c.l.b16 %v3144
    %v4503 = vunpack.c.l.b16 %v3145
    %v4504 = vunpack.c.h.b16 %v3145
    %v4505 = vunpack.c.l.b16 %v3146
    %v4506 = vunpack.c.h.b16 %v3146
    %v4507 = vunpack.c.l.b16 %v3147
    %v4508 = vunpack.c.h.b16 %v3147
    %v4509 = vunpack.c.l.b16 %v3148
    %v4510 = vunpack.c.l.b16 %v3149
    %v4511 = vunpack.c.h.b16 %v3149
    %v4512 = vunpack.c.l.b16 %v3150
    %v4513 = vunpack.c.h.b16 %v3150
    %v4514 = vunpack.c.l.b16 %v3151
    %v4515 = vunpack.c.h.b16 %v3151
    %v4516 = vunpack.c.l.b16 %v3152
    %v4517 = vunpack.c.l.b16 %v3153
    %v4518 = vunpack.c.h.b16 %v3153
    %v4519 = vunpack.c.l.b16 %v3154
    %v4520 = vunpack.c.h.b16 %v3154
    %v4521 = vunpack.c.l.b16 %v3155
    %v4522 = vunpack.c.h.b16 %v3155
    %v4523 = vunpack.c.l.b16 %v3156
    %v4524 = vunpack.c.l.b16 %v3157
    %v4525 = vunpack.c.h.b16 %v3157
    %v4526 = vunpack.c.l.b16 %v3158
    %v4527 = vunpack.c.h.b16 %v3158
    %v4528 = vunpack.c.l.b16 %v3159
    %v4529 = vunpack.c.h.b16 %v3159
    %v4530 = vunpack.c.l.b16 %v3160
    %v4531 = vunpack.c.l.b16 %v3161
    %v4532 = vunpack.c.h.b16 %v3161
    %v4533 = vunpack.c.l.b16 %v3162
    %v4534 = vunpack.c.h.b16 %v3162
    %v4535 = vunpack.c.l.b16 %v3163
    %v4536 = vunpack.c.h.b16 %v3163
    %v4537 = vunpack.c.l.b16 %v3164
    %v4538 = vunpack.c.l.b16 %v3165
    %v4539 = vunpack.c.h.b16 %v3165
    %v4540 = vunpack.c.l.b16 %v3166
    %v4541 = vunpack.c.h.b16 %v3166
    %v4542 = vunpack.c.l.b16 %v3167
    %v4543 = vunpack.c.h.b16 %v3167
    %v4544 = vunpack.c.l.b16 %v3168
    %v4545 = vunpack.c.l.b16 %v3169
    %v4546 = vunpack.c.h.b16 %v3169
    %v4547 = vunpack.c.l.b16 %v3170
    %v4548 = vunpack.c.h.b16 %v3170
    %v4549 = vunpack.c.l.b16 %v3171
    %v4550 = vunpack.c.h.b16 %v3171
    %v4551 = vunpack.c.l.b16 %v3172
    %v4552 = vunpack.c.l.b16 %v3173
    %v4553 = vunpack.c.h.b16 %v3173
    %v4554 = vunpack.c.l.b16 %v3174
    %v4555 = vunpack.c.h.b16 %v3174
    %v4556 = vunpack.c.l.b16 %v3175
    %v4557 = vunpack.c.h.b16 %v3175
    %v4558 = vunpack.c.l.b16 %v3176
    %v4559 = vunpack.c.l.b16 %v3177
    %v4560 = vunpack.c.h.b16 %v3177
    %v4561 = vunpack.c.l.b16 %v3178
    %v4562 = vunpack.c.h.b16 %v3178
    %v4563 = vunpack.c.l.b16 %v3179
    %v4564 = vunpack.c.h.b16 %v3179
    %v4565 = vunpack.c.l.b16 %v3180
    %v4566 = vunpack.c.l.b16 %v3181
    %v4567 = vunpack.c.h.b16 %v3181
    %v4568 = vunpack.c.l.b16 %v3182
    %v4569 = vunpack.c.h.b16 %v3182
    %v4570 = vunpack.c.l.b16 %v3183
    %v4571 = vunpack.c.h.b16 %v3183
    %v4572 = vunpack.c.l.b16 %v3184
    %v4573 = vunpack.c.l.b16 %v3185
    %v4574 = vunpack.c.h.b16 %v3185
    %v4575 = vunpack.c.l.b16 %v3186
    %v4576 = vunpack.c.h.b16 %v3186
    %v4577 = vunpack.c.l.b16 %v3187
    %v4578 = vunpack.c.h.b16 %v3187
    %v4579 = vunpack.c.l.b16 %v3188
    %v4580 = vunpack.c.l.b16 %v3189
    %v4581 = vunpack.c.h.b16 %v3189
    %v4582 = vunpack.c.l.b16 %v3190
    %v4583 = vunpack.c.h.b16 %v3190
    %v4584 = vunpack.c.l.b16 %v3191
    %v4585 = vunpack.c.h.b16 %v3191
    %v4586 = vunpack.c.l.b16 %v3192
    %v4587 = vunpack.c.l.b16 %v3193
    %v4588 = vunpack.c.h.b16 %v3193
    %v4589 = vunpack.c.l.b16 %v3194
    %v4590 = vunpack.c.h.b16 %v3194
    %v4591 = vunpack.c.l.b16 %v3195
    %v4592 = vunpack.c.h.b16 %v3195
    %v4593 = vunpack.c.l.b16 %v3196
    %v4594 = vunpack.c.l.b16 %v3197
    %v4595 = vunpack.c.h.b16 %v3197
    %v4596 = vunpack.c.l.b16 %v3198
    %v4597 = vunpack.c.h.b16 %v3198
    %v4598 = vunpack.c.l.b16 %v3199
    %v4599 = vunpack.c.h.b16 %v3199
    %v4600 = vunpack.c.l.b16 %v3200
    %v4601 = vunpack.c.l.b16 %v3201
    %v4602 = vunpack.c.h.b16 %v3201
    %v4603 = vunpack.c.l.b16 %v3202
    %v4604 = vunpack.c.h.b16 %v3202
    %v4605 = vunpack.c.l.b16 %v3203
    %v4606 = vunpack.c.h.b16 %v3203
    %v4607 = vunpack.c.l.b16 %v3204
    %v4608 = vunpack.c.l.b16 %v3205
    %v4609 = vunpack.c.h.b16 %v3205
    %v4610 = vunpack.c.l.b16 %v3206
    %v4611 = vunpack.c.h.b16 %v3206
    %v4612 = vunpack.c.l.b16 %v3207
    %v4613 = vunpack.c.h.b16 %v3207
    %v4614 = vunpack.c.l.b16 %v3208
    %v4615 = vunpack.c.l.b16 %v3209
    %v4616 = vunpack.c.h.b16 %v3209
    %v4617 = vunpack.c.l.b16 %v3210
    %v4618 = vunpack.c.h.b16 %v3210
    %v4619 = vunpack.c.l.b16 %v3211
    %v4620 = vunpack.c.h.b16 %v3211
    %v4621 = vunpack.c.l.b16 %v3212
    %v4622 = vunpack.c.l.b16 %v3213
    %v4623 = vunpack.c.h.b16 %v3213
    %v4624 = vunpack.c.l.b16 %v3214
    %v4625 = vunpack.c.h.b16 %v3214
    %v4626 = vunpack.c.l.b16 %v3215
    %v4627 = vunpack.c.h.b16 %v3215
    %v4628 = vunpack.c.l.b16 %v3216
    %v4629 = vunpack.c.l.b16 %v3217
    %v4630 = vunpack.c.h.b16 %v3217
    %v4631 = vunpack.c.l.b16 %v3218
    %v4632 = vunpack.c.h.b16 %v3218
    %v4633 = vunpack.c.l.b16 %v3219
    %v4634 = vunpack.c.h.b16 %v3219
    %v4635 = vunpack.c.l.b16 %v3220
    %v4636 = vunpack.c.l.b16 %v3221
    %v4637 = vunpack.c.h.b16 %v3221
    %v4638 = vunpack.c.l.b16 %v3222
    %v4639 = vunpack.c.h.b16 %v3222
    %v4640 = vunpack.c.l.b16 %v3223
    %v4641 = vunpack.c.h.b16 %v3223
    %v4642 = vunpack.c.l.b16 %v3224
    %v4643 = vunpack.c.l.b16 %v3225
    %v4644 = vunpack.c.h.b16 %v3225
    %v4645 = vunpack.c.l.b16 %v3226
    %v4646 = vunpack.c.h.b16 %v3226
    %v4647 = vunpack.c.l.b16 %v3227
    %v4648 = vunpack.c.h.b16 %v3227
    %v4649 = vunpack.c.l.b16 %v3228
    %v4650 = vunpack.c.l.b16 %v3229
    %v4651 = vunpack.c.h.b16 %v3229
    %v4652 = vunpack.c.l.b16 %v3230
    %v4653 = vunpack.c.h.b16 %v3230
    %v4654 = vunpack.c.l.b16 %v3231
    %v4655 = vunpack.c.h.b16 %v3231
    %v4656 = vunpack.c.l.b16 %v3232
    %v4657 = vunpack.c.l.b16 %v3233
    %v4658 = vunpack.c.h.b16 %v3233
    %v4659 = vunpack.c.l.b16 %v3234
    %v4660 = vunpack.c.h.b16 %v3234
    %v4661 = vunpack.c.l.b16 %v3235
    %v4662 = vunpack.c.h.b16 %v3235
    %v4663 = vunpack.c.l.b16 %v3236
    %v4664 = vunpack.c.l.b16 %v3237
    %v4665 = vunpack.c.h.b16 %v3237
    %v4666 = vunpack.c.l.b16 %v3238
    %v4667 = vunpack.c.h.b16 %v3238
    %v4668 = vunpack.c.l.b16 %v3239
    %v4669 = vunpack.c.h.b16 %v3239
    %v4670 = vunpack.c.l.b16 %v3240
    %v4671 = vunpack.c.l.b16 %v3241
    %v4672 = vunpack.c.h.b16 %v3241
    %v4673 = vunpack.c.l.b16 %v3242
    %v4674 = vunpack.c.h.b16 %v3242
    %v4675 = vunpack.c.l.b16 %v3243
    %v4676 = vunpack.c.h.b16 %v3243
    %v4677 = vunpack.c.l.b16 %v3244
    %v4678 = vunpack.c.l.b16 %v3245
    %v4679 = vunpack.c.h.b16 %v3245
    %v4680 = vunpack.c.l.b16 %v3246
    %v4681 = vunpack.c.h.b16 %v3246
    %v4682 = vunpack.c.l.b16 %v3247
    %v4683 = vunpack.c.h.b16 %v3247
    %v4684 = vunpack.c.l.b16 %v3248
    %v4685 = vunpack.c.l.b16 %v3249
    %v4686 = vunpack.c.h.b16 %v3249
    %v4687 = vunpack.c.l.b16 %v3250
    %v4688 = vunpack.c.h.b16 %v3250
    %v4689 = vunpack.c.l.b16 %v3251
    %v4690 = vunpack.c.h.b16 %v3251
    %v4691 = vunpack.c.l.b16 %v3252
    %v4692 = vunpack.c.l.b16 %v3253
    %v4693 = vunpack.c.h.b16 %v3253
    %v4694 = vunpack.c.l.b16 %v3254
    %v4695 = vunpack.c.h.b16 %v3254
    %v4696 = vunpack.c.l.b16 %v3255
    %v4697 = vunpack.c.h.b16 %v3255
    %v4698 = vunpack.c.l.b16 %v3256
    %v4699 = vunpack.c.l.b16 %v3257
    %v4700 = vunpack.c.h.b16 %v3257
    %v4701 = vunpack.c.l.b16 %v3258
    %v4702 = vunpack.c.h.b16 %v3258
    %v4703 = vunpack.c.l.b16 %v3259
    %v4704 = vunpack.c.h.b16 %v3259
    %v4705 = vunpack.c.l.b16 %v3260
    %v4706 = vpack.c.b16 %v3817, %v3810
    %v4707 = vpack.c.b16 %v3818, %v3811
    %v4708 = vpack.c.b16 %v3819, %v3812
    %v4709 = vpack.c.b16 %v3820, %v3813
    %v4710 = vpack.c.b16 %v3821, %v3814
    %v4711 = vpack.c.b16 %v3822, %v3815
    %v4712 = vpack.c.b16 %v3823, %v3816
    %v4713 = vpack.c.b16 %v3831, %v3824
    %v4714 = vpack.c.b16 %v3832, %v3825
    %v4715 = vpack.c.b16 %v3833, %v3826
    %v4716 = vpack.c.b16 %v3834, %v3827
    %v4717 = vpack.c.b16 %v3835, %v3828
    %v4718 = vpack.c.b16 %v3836, %v3829
    %v4719 = vpack.c.b16 %v3837, %v3830
    %v4720 = vpack.c.b16 %v3845, %v3838
    %v4721 = vpack.c.b16 %v3846, %v3839
    %v4722 = vpack.c.b16 %v3847, %v3840
    %v4723 = vpack.c.b16 %v3848, %v3841
    %v4724 = vpack.c.b16 %v3849, %v3842
    %v4725 = vpack.c.b16 %v3850, %v3843
    %v4726 = vpack.c.b16 %v3851, %v3844
    %v4727 = vpack.c.b16 %v3859, %v3852
    %v4728 = vpack.c.b16 %v3860, %v3853
    %v4729 = vpack.c.b16 %v3861, %v3854
    %v4730 = vpack.c.b16 %v3862, %v3855
    %v4731 = vpack.c.b16 %v3863, %v3856
    %v4732 = vpack.c.b16 %v3864, %v3857
    %v4733 = vpack.c.b16 %v3865, %v3858
    %v4734 = vpack.c.b16 %v3873, %v3866
    %v4735 = vpack.c.b16 %v3874, %v3867
    %v4736 = vpack.c.b16 %v3875, %v3868
    %v4737 = vpack.c.b16 %v3876, %v3869
    %v4738 = vpack.c.b16 %v3877, %v3870
    %v4739 = vpack.c.b16 %v3878, %v3871
    %v4740 = vpack.c.b16 %v3879, %v3872
    %v4741 = vpack.c.b16 %v3887, %v3880
    %v4742 = vpack.c.b16 %v3888, %v3881
    %v4743 = vpack.c.b16 %v3889, %v3882
    %v4744 = vpack.c.b16 %v3890, %v3883
    %v4745 = vpack.c.b16 %v3891, %v3884
    %v4746 = vpack.c.b16 %v3892, %v3885
    %v4747 = vpack.c.b16 %v3893, %v3886
    %v4748 = vpack.c.b16 %v3901, %v3894
    %v4749 = vpack.c.b16 %v3902, %v3895
    %v4750 = vpack.c.b16 %v3903, %v3896
    %v4751 = vpack.c.b16 %v3904, %v3897
    %v4752 = vpack.c.b16 %v3905, %v3898
    %v4753 = vpack.c.b16 %v3906, %v3899
    %v4754 = vpack.c.b16 %v3907, %v3900
    %v4755 = vpack.c.b16 %v3915, %v3908
    %v4756 = vpack.c.b16 %v3916, %v3909
    %v4757 = vpack.c.b16 %v3917, %v3910
    %v4758 = vpack.c.b16 %v3918, %v3911
    %v4759 = vpack.c.b16 %v3919, %v3912
    %v4760 = vpack.c.b16 %v3920, %v3913
    %v4761 = vpack.c.b16 %v3921, %v3914
    %v4762 = vpack.c.b16 %v3929, %v3922
    %v4763 = vpack.c.b16 %v3930, %v3923
    %v4764 = vpack.c.b16 %v3931, %v3924
    %v4765 = vpack.c.b16 %v3932, %v3925
    %v4766 = vpack.c.b16 %v3933, %v3926
    %v4767 = vpack.c.b16 %v3934, %v3927
    %v4768 = vpack.c.b16 %v3935, %v3928
    %v4769 = vpack.c.b16 %v3943, %v3936
    %v4770 = vpack.c.b16 %v3944, %v3937
    %v4771 = vpack.c.b16 %v3945, %v3938
    %v4772 = vpack.c.b16 %v3946, %v3939
    %v4773 = vpack.c.b16 %v3947, %v3940
    %v4774 = vpack.c.b16 %v3948, %v3941
    %v4775 = vpack.c.b16 %v3949, %v3942
    %v4776 = vpack.c.b16 %v3957, %v3950
    %v4777 = vpack.c.b16 %v3958, %v3951
    %v4778 = vpack.c.b16 %v3959, %v3952
    %v4779 = vpack.c.b16 %v3960, %v3953
    %v4780 = vpack.c.b16 %v3961, %v3954
    %v4781 = vpack.c.b16 %v3962, %v3955
    %v4782 = vpack.c.b16 %v3963, %v3956
    %v4783 = vpack.c.b16 %v3971, %v3964
    %v4784 = vpack.c.b16 %v3972, %v3965
    %v4785 = vpack.c.b16 %v3973, %v3966
    %v4786 = vpack.c.b16 %v3974, %v3967
    %v4787 = vpack.c.b16 %v3975, %v3968
    %v4788 = vpack.c.b16 %v3976, %v3969
    %v4789 = vpack.c.b16 %v3977, %v3970
    %v4790 = vpack.c.b16 %v3985, %v3978
    %v4791 = vpack.c.b16 %v3986, %v3979
    %v4792 = vpack.c.b16 %v3987, %v3980
    %v4793 = vpack.c.b16 %v3988, %v3981
    %v4794 = vpack.c.b16 %v3989, %v3982
    %v4795 = vpack.c.b16 %v3990, %v3983
    %v4796 = vpack.c.b16 %v3991, %v3984
    %v4797 = vpack.c.b16 %v3999, %v3992
    %v4798 = vpack.c.b16 %v4000, %v3993
    %v4799 = vpack.c.b16 %v4001, %v3994
    %v4800 = vpack.c.b16 %v4002, %v3995
    %v4801 = vpack.c.b16 %v4003, %v3996
    %v4802 = vpack.c.b16 %v4004, %v3997
    %v4803 = vpack.c.b16 %v4005, %v3998
    %v4804 = vpack.c.b16 %v4013, %v4006
    %v4805 = vpack.c.b16 %v4014, %v4007
    %v4806 = vpack.c.b16 %v4015, %v4008
    %v4807 = vpack.c.b16 %v4016, %v4009
    %v4808 = vpack.c.b16 %v4017, %v4010
    %v4809 = vpack.c.b16 %v4018, %v4011
    %v4810 = vpack.c.b16 %v4019, %v4012
    %v4811 = vpack.c.b16 %v4027, %v4020
    %v4812 = vpack.c.b16 %v4028, %v4021
    %v4813 = vpack.c.b16 %v4029, %v4022
    %v4814 = vpack.c.b16 %v4030, %v4023
    %v4815 = vpack.c.b16 %v4031, %v4024
    %v4816 = vpack.c.b16 %v4032, %v4025
    %v4817 = vpack.c.b16 %v4033, %v4026
    %v4818 = vpack.c.b16 %v4041, %v4034
    %v4819 = vpack.c.b16 %v4042, %v4035
    %v4820 = vpack.c.b16 %v4043, %v4036
    %v4821 = vpack.c.b16 %v4044, %v4037
    %v4822 = vpack.c.b16 %v4045, %v4038
    %v4823 = vpack.c.b16 %v4046, %v4039
    %v4824 = vpack.c.b16 %v4047, %v4040
    %v4825 = vpack.c.b16 %v4055, %v4048
    %v4826 = vpack.c.b16 %v4056, %v4049
    %v4827 = vpack.c.b16 %v4057, %v4050
    %v4828 = vpack.c.b16 %v4058, %v4051
    %v4829 = vpack.c.b16 %v4059, %v4052
    %v4830 = vpack.c.b16 %v4060, %v4053
    %v4831 = vpack.c.b16 %v4061, %v4054
    %v4832 = vpack.c.b16 %v4069, %v4062
    %v4833 = vpack.c.b16 %v4070, %v4063
    %v4834 = vpack.c.b16 %v4071, %v4064
    %v4835 = vpack.c.b16 %v4072, %v4065
    %v4836 = vpack.c.b16 %v4073, %v4066
    %v4837 = vpack.c.b16 %v4074, %v4067
    %v4838 = vpack.c.b16 %v4075, %v4068
    %v4839 = vpack.c.b16 %v4083, %v4076
    %v4840 = vpack.c.b16 %v4084, %v4077
    %v4841 = vpack.c.b16 %v4085, %v4078
    %v4842 = vpack.c.b16 %v4086, %v4079
    %v4843 = vpack.c.b16 %v4087, %v4080
    %v4844 = vpack.c.b16 %v4088, %v4081
    %v4845 = vpack.c.b16 %v4089, %v4082
    %v4846 = vpack.c.b16 %v4097, %v4090
    %v4847 = vpack.c.b16 %v4098, %v4091
    %v4848 = vpack.c.b16 %v4099, %v4092
    %v4849 = vpack.c.b16 %v4100, %v4093
    %v4850 = vpack.c.b16 %v4101, %v4094
    %v4851 = vpack.c.b16 %v4102, %v4095
    %v4852 = vpack.c.b16 %v4103, %v4096
    %v4853 = vpack.c.b16 %v4111, %v4104
    %v4854 = vpack.c.b16 %v4112, %v4105
    %v4855 = vpack.c.b16 %v4113, %v4106
    %v4856 = vpack.c.b16 %v4114, %v4107
    %v4857 = vpack.c.b16 %v4115, %v4108
    %v4858 = vpack.c.b16 %v4116, %v4109
    %v4859 = vpack.c.b16 %v4117, %v4110
    %v4860 = vpack.c.b16 %v4125, %v4118
    %v4861 = vpack.c.b16 %v4126, %v4119
    %v4862 = vpack.c.b16 %v4127, %v4120
    %v4863 = vpack.c.b16 %v4128, %v4121
    %v4864 = vpack.c.b16 %v4129, %v4122
    %v4865 = vpack.c.b16 %v4130, %v4123
    %v4866 = vpack.c.b16 %v4131, %v4124
    %v4867 = vpack.c.b16 %v4139, %v4132
    %v4868 = vpack.c.b16 %v4140, %v4133
    %v4869 = vpack.c.b16 %v4141, %v4134
    %v4870 = vpack.c.b16 %v4142, %v4135
    %v4871 = vpack.c.b16 %v4143, %v4136
    %v4872 = vpack.c.b16 %v4144, %v4137
    %v4873 = vpack.c.b16 %v4145, %v4138
    %v4874 = vpack.c.b16 %v4153, %v4146
    %v4875 = vpack.c.b16 %v4154, %v4147
    %v4876 = vpack.c.b16 %v4155, %v4148
    %v4877 = vpack.c.b16 %v4156, %v4149
    %v4878 = vpack.c.b16 %v4157, %v4150
    %v4879 = vpack.c.b16 %v4158, %v4151
    %v4880 = vpack.c.b16 %v4159, %v4152
    %v4881 = vpack.c.b16 %v4167, %v4160
    %v4882 = vpack.c.b16 %v4168, %v4161
    %v4883 = vpack.c.b16 %v4169, %v4162
    %v4884 = vpack.c.b16 %v4170, %v4163
    %v4885 = vpack.c.b16 %v4171, %v4164
    %v4886 = vpack.c.b16 %v4172, %v4165
    %v4887 = vpack.c.b16 %v4173, %v4166
    %v4888 = vpack.c.b16 %v4181, %v4174
    %v4889 = vpack.c.b16 %v4182, %v4175
    %v4890 = vpack.c.b16 %v4183, %v4176
    %v4891 = vpack.c.b16 %v4184, %v4177
    %v4892 = vpack.c.b16 %v4185, %v4178
    %v4893 = vpack.c.b16 %v4186, %v4179
    %v4894 = vpack.c.b16 %v4187, %v4180
    %v4895 = vpack.c.b16 %v4195, %v4188
    %v4896 = vpack.c.b16 %v4196, %v4189
    %v4897 = vpack.c.b16 %v4197, %v4190
    %v4898 = vpack.c.b16 %v4198, %v4191
    %v4899 = vpack.c.b16 %v4199, %v4192
    %v4900 = vpack.c.b16 %v4200, %v4193
    %v4901 = vpack.c.b16 %v4201, %v4194
    %v4902 = vpack.c.b16 %v4209, %v4202
    %v4903 = vpack.c.b16 %v4210, %v4203
    %v4904 = vpack.c.b16 %v4211, %v4204
    %v4905 = vpack.c.b16 %v4212, %v4205
    %v4906 = vpack.c.b16 %v4213, %v4206
    %v4907 = vpack.c.b16 %v4214, %v4207
    %v4908 = vpack.c.b16 %v4215, %v4208
    %v4909 = vpack.c.b16 %v4223, %v4216
    %v4910 = vpack.c.b16 %v4224, %v4217
    %v4911 = vpack.c.b16 %v4225, %v4218
    %v4912 = vpack.c.b16 %v4226, %v4219
    %v4913 = vpack.c.b16 %v4227, %v4220
    %v4914 = vpack.c.b16 %v4228, %v4221
    %v4915 = vpack.c.b16 %v4229, %v4222
    %v4916 = vpack.c.b16 %v4237, %v4230
    %v4917 = vpack.c.b16 %v4238, %v4231
    %v4918 = vpack.c.b16 %v4239, %v4232
    %v4919 = vpack.c.b16 %v4240, %v4233
    %v4920 = vpack.c.b16 %v4241, %v4234
    %v4921 = vpack.c.b16 %v4242, %v4235
    %v4922 = vpack.c.b16 %v4243, %v4236
    %v4923 = vpack.c.b16 %v4251, %v4244
    %v4924 = vpack.c.b16 %v4252, %v4245
    %v4925 = vpack.c.b16 %v4253, %v4246
    %v4926 = vpack.c.b16 %v4254, %v4247
    %v4927 = vpack.c.b16 %v4255, %v4248
    %v4928 = vpack.c.b16 %v4256, %v4249
    %v4929 = vpack.c.b16 %v4257, %v4250
    %v4930 = vpack.c.b16 %v4265, %v4258
    %v4931 = vpack.c.b16 %v4266, %v4259
    %v4932 = vpack.c.b16 %v4267, %v4260
    %v4933 = vpack.c.b16 %v4268, %v4261
    %v4934 = vpack.c.b16 %v4269, %v4262
    %v4935 = vpack.c.b16 %v4270, %v4263
    %v4936 = vpack.c.b16 %v4271, %v4264
    %v4937 = vpack.c.b16 %v4279, %v4272
    %v4938 = vpack.c.b16 %v4280, %v4273
    %v4939 = vpack.c.b16 %v4281, %v4274
    %v4940 = vpack.c.b16 %v4282, %v4275
    %v4941 = vpack.c.b16 %v4283, %v4276
    %v4942 = vpack.c.b16 %v4284, %v4277
    %v4943 = vpack.c.b16 %v4285, %v4278
    %v4944 = vpack.c.b16 %v4293, %v4286
    %v4945 = vpack.c.b16 %v4294, %v4287
    %v4946 = vpack.c.b16 %v4295, %v4288
    %v4947 = vpack.c.b16 %v4296, %v4289
    %v4948 = vpack.c.b16 %v4297, %v4290
    %v4949 = vpack.c.b16 %v4298, %v4291
    %v4950 = vpack.c.b16 %v4299, %v4292
    %v4951 = vpack.c.b16 %v4307, %v4300
    %v4952 = vpack.c.b16 %v4308, %v4301
    %v4953 = vpack.c.b16 %v4309, %v4302
    %v4954 = vpack.c.b16 %v4310, %v4303
    %v4955 = vpack.c.b16 %v4311, %v4304
    %v4956 = vpack.c.b16 %v4312, %v4305
    %v4957 = vpack.c.b16 %v4313, %v4306
    %v4958 = vpack.c.b16 %v4321, %v4314
    %v4959 = vpack.c.b16 %v4322, %v4315
    %v4960 = vpack.c.b16 %v4323, %v4316
    %v4961 = vpack.c.b16 %v4324, %v4317
    %v4962 = vpack.c.b16 %v4325, %v4318
    %v4963 = vpack.c.b16 %v4326, %v4319
    %v4964 = vpack.c.b16 %v4327, %v4320
    %v4965 = vpack.c.b16 %v4335, %v4328
    %v4966 = vpack.c.b16 %v4336, %v4329
    %v4967 = vpack.c.b16 %v4337, %v4330
    %v4968 = vpack.c.b16 %v4338, %v4331
    %v4969 = vpack.c.b16 %v4339, %v4332
    %v4970 = vpack.c.b16 %v4340, %v4333
    %v4971 = vpack.c.b16 %v4341, %v4334
    %v4972 = vpack.c.b16 %v4349, %v4342
    %v4973 = vpack.c.b16 %v4350, %v4343
    %v4974 = vpack.c.b16 %v4351, %v4344
    %v4975 = vpack.c.b16 %v4352, %v4345
    %v4976 = vpack.c.b16 %v4353, %v4346
    %v4977 = vpack.c.b16 %v4354, %v4347
    %v4978 = vpack.c.b16 %v4355, %v4348
    %v4979 = vpack.c.b16 %v4363, %v4356
    %v4980 = vpack.c.b16 %v4364, %v4357
    %v4981 = vpack.c.b16 %v4365, %v4358
    %v4982 = vpack.c.b16 %v4366, %v4359
    %v4983 = vpack.c.b16 %v4367, %v4360
    %v4984 = vpack.c.b16 %v4368, %v4361
    %v4985 = vpack.c.b16 %v4369, %v4362
    %v4986 = vpack.c.b16 %v4377, %v4370
    %v4987 = vpack.c.b16 %v4378, %v4371
    %v4988 = vpack.c.b16 %v4379, %v4372
    %v4989 = vpack.c.b16 %v4380, %v4373
    %v4990 = vpack.c.b16 %v4381, %v4374
    %v4991 = vpack.c.b16 %v4382, %v4375
    %v4992 = vpack.c.b16 %v4383, %v4376
    %v4993 = vpack.c.b16 %v4391, %v4384
    %v4994 = vpack.c.b16 %v4392, %v4385
    %v4995 = vpack.c.b16 %v4393, %v4386
    %v4996 = vpack.c.b16 %v4394, %v4387
    %v4997 = vpack.c.b16 %v4395, %v4388
    %v4998 = vpack.c.b16 %v4396, %v4389
    %v4999 = vpack.c.b16 %v4397, %v4390
    %v5000 = vpack.c.b16 %v4405, %v4398
    %v5001 = vpack.c.b16 %v4406, %v4399
    %v5002 = vpack.c.b16 %v4407, %v4400
    %v5003 = vpack.c.b16 %v4408, %v4401
    %v5004 = vpack.c.b16 %v4409, %v4402
    %v5005 = vpack.c.b16 %v4410, %v4403
    %v5006 = vpack.c.b16 %v4411, %v4404
    %v5007 = vpack.c.b16 %v4419, %v4412
    %v5008 = vpack.c.b16 %v4420, %v4413
    %v5009 = vpack.c.b16 %v4421, %v4414
    %v5010 = vpack.c.b16 %v4422, %v4415
    %v5011 = vpack.c.b16 %v4423, %v4416
    %v5012 = vpack.c.b16 %v4424, %v4417
    %v5013 = vpack.c.b16 %v4425, %v4418
    %v5014 = vpack.c.b16 %v4433, %v4426
    %v5015 = vpack.c.b16 %v4434, %v4427
    %v5016 = vpack.c.b16 %v4435, %v4428
    %v5017 = vpack.c.b16 %v4436, %v4429
    %v5018 = vpack.c.b16 %v4437, %v4430
    %v5019 = vpack.c.b16 %v4438, %v4431
    %v5020 = vpack.c.b16 %v4439, %v4432
    %v5021 = vpack.c.b16 %v4447, %v4440
    %v5022 = vpack.c.b16 %v4448, %v4441
    %v5023 = vpack.c.b16 %v4449, %v4442
    %v5024 = vpack.c.b16 %v4450, %v4443
    %v5025 = vpack.c.b16 %v4451, %v4444
    %v5026 = vpack.c.b16 %v4452, %v4445
    %v5027 = vpack.c.b16 %v4453, %v4446
    %v5028 = vpack.c.b16 %v4461, %v4454
    %v5029 = vpack.c.b16 %v4462, %v4455
    %v5030 = vpack.c.b16 %v4463, %v4456
    %v5031 = vpack.c.b16 %v4464, %v4457
    %v5032 = vpack.c.b16 %v4465, %v4458
    %v5033 = vpack.c.b16 %v4466, %v4459
    %v5034 = vpack.c.b16 %v4467, %v4460
    %v5035 = vpack.c.b16 %v4475, %v4468
    %v5036 = vpack.c.b16 %v4476, %v4469
    %v5037 = vpack.c.b16 %v4477, %v4470
    %v5038 = vpack.c.b16 %v4478, %v4471
    %v5039 = vpack.c.b16 %v4479, %v4472
    %v5040 = vpack.c.b16 %v4480, %v4473
    %v5041 = vpack.c.b16 %v4481, %v4474
    %v5042 = vpack.c.b16 %v4489, %v4482
    %v5043 = vpack.c.b16 %v4490, %v4483
    %v5044 = vpack.c.b16 %v4491, %v4484
    %v5045 = vpack.c.b16 %v4492, %v4485
    %v5046 = vpack.c.b16 %v4493, %v4486
    %v5047 = vpack.c.b16 %v4494, %v4487
    %v5048 = vpack.c.b16 %v4495, %v4488
    %v5049 = vpack.c.b16 %v4503, %v4496
    %v5050 = vpack.c.b16 %v4504, %v4497
    %v5051 = vpack.c.b16 %v4505, %v4498
    %v5052 = vpack.c.b16 %v4506, %v4499
    %v5053 = vpack.c.b16 %v4507, %v4500
    %v5054 = vpack.c.b16 %v4508, %v4501
    %v5055 = vpack.c.b16 %v4509, %v4502
    %v5056 = vpack.c.b16 %v4517, %v4510
    %v5057 = vpack.c.b16 %v4518, %v4511
    %v5058 = vpack.c.b16 %v4519, %v4512
    %v5059 = vpack.c.b16 %v4520, %v4513
    %v5060 = vpack.c.b16 %v4521, %v4514
    %v5061 = vpack.c.b16 %v4522, %v4515
    %v5062 = vpack.c.b16 %v4523, %v4516
    %v5063 = vpack.c.b16 %v4531, %v4524
    %v5064 = vpack.c.b16 %v4532, %v4525
    %v5065 = vpack.c.b16 %v4533, %v4526
    %v5066 = vpack.c.b16 %v4534, %v4527
    %v5067 = vpack.c.b16 %v4535, %v4528
    %v5068 = vpack.c.b16 %v4536, %v4529
    %v5069 = vpack.c.b16 %v4537, %v4530
    %v5070 = vpack.c.b16 %v4545, %v4538
    %v5071 = vpack.c.b16 %v4546, %v4539
    %v5072 = vpack.c.b16 %v4547, %v4540
    %v5073 = vpack.c.b16 %v4548, %v4541
    %v5074 = vpack.c.b16 %v4549, %v4542
    %v5075 = vpack.c.b16 %v4550, %v4543
    %v5076 = vpack.c.b16 %v4551, %v4544
    %v5077 = vpack.c.b16 %v4559, %v4552
    %v5078 = vpack.c.b16 %v4560, %v4553
    %v5079 = vpack.c.b16 %v4561, %v4554
    %v5080 = vpack.c.b16 %v4562, %v4555
    %v5081 = vpack.c.b16 %v4563, %v4556
    %v5082 = vpack.c.b16 %v4564, %v4557
    %v5083 = vpack.c.b16 %v4565, %v4558
    %v5084 = vpack.c.b16 %v4573, %v4566
    %v5085 = vpack.c.b16 %v4574, %v4567
    %v5086 = vpack.c.b16 %v4575, %v4568
    %v5087 = vpack.c.b16 %v4576, %v4569
    %v5088 = vpack.c.b16 %v4577, %v4570
    %v5089 = vpack.c.b16 %v4578, %v4571
    %v5090 = vpack.c.b16 %v4579, %v4572
    %v5091 = vpack.c.b16 %v4587, %v4580
    %v5092 = vpack.c.b16 %v4588, %v4581
    %v5093 = vpack.c.b16 %v4589, %v4582
    %v5094 = vpack.c.b16 %v4590, %v4583
    %v5095 = vpack.c.b16 %v4591, %v4584
    %v5096 = vpack.c.b16 %v4592, %v4585
    %v5097 = vpack.c.b16 %v4593, %v4586
    %v5098 = vpack.c.b16 %v4601, %v4594
    %v5099 = vpack.c.b16 %v4602, %v4595
    %v5100 = vpack.c.b16 %v4603, %v4596
    %v5101 = vpack.c.b16 %v4604, %v4597
    %v5102 = vpack.c.b16 %v4605, %v4598
    %v5103 = vpack.c.b16 %v4606, %v4599
    %v5104 = vpack.c.b16 %v4607, %v4600
    %v5105 = vpack.c.b16 %v4615, %v4608
    %v5106 = vpack.c.b16 %v4616, %v4609
    %v5107 = vpack.c.b16 %v4617, %v4610
    %v5108 = vpack.c.b16 %v4618, %v4611
    %v5109 = vpack.c.b16 %v4619, %v4612
    %v5110 = vpack.c.b16 %v4620, %v4613
    %v5111 = vpack.c.b16 %v4621, %v4614
    %v5112 = vpack.c.b16 %v4629, %v4622
    %v5113 = vpack.c.b16 %v4630, %v4623
    %v5114 = vpack.c.b16 %v4631, %v4624
    %v5115 = vpack.c.b16 %v4632, %v4625
    %v5116 = vpack.c.b16 %v4633, %v4626
    %v5117 = vpack.c.b16 %v4634, %v4627
    %v5118 = vpack.c.b16 %v4635, %v4628
    %v5119 = vpack.c.b16 %v4643, %v4636
    %v5120 = vpack.c.b16 %v4644, %v4637
    %v5121 = vpack.c.b16 %v4645, %v4638
    %v5122 = vpack.c.b16 %v4646, %v4639
    %v5123 = vpack.c.b16 %v4647, %v4640
    %v5124 = vpack.c.b16 %v4648, %v4641
    %v5125 = vpack.c.b16 %v4649, %v4642
    %v5126 = vpack.c.b16 %v4657, %v4650
    %v5127 = vpack.c.b16 %v4658, %v4651
    %v5128 = vpack.c.b16 %v4659, %v4652
    %v5129 = vpack.c.b16 %v4660, %v4653
    %v5130 = vpack.c.b16 %v4661, %v4654
    %v5131 = vpack.c.b16 %v4662, %v4655
    %v5132 = vpack.c.b16 %v4663, %v4656
    %v5133 = vpack.c.b16 %v4671, %v4664
    %v5134 = vpack.c.b16 %v4672, %v4665
    %v5135 = vpack.c.b16 %v4673, %v4666
    %v5136 = vpack.c.b16 %v4674, %v4667
    %v5137 = vpack.c.b16 %v4675, %v4668
    %v5138 = vpack.c.b16 %v4676, %v4669
    %v5139 = vpack.c.b16 %v4677, %v4670
    %v5140 = vpack.c.b16 %v4685, %v4678
    %v5141 = vpack.c.b16 %v4686, %v4679
    %v5142 = vpack.c.b16 %v4687, %v4680
    %v5143 = vpack.c.b16 %v4688, %v4681
    %v5144 = vpack.c.b16 %v4689, %v4682
    %v5145 = vpack.c.b16 %v4690, %v4683
    %v5146 = vpack.c.b16 %v4691, %v4684
    %v5147 = vpack.c.b16 %v4699, %v4692
    %v5148 = vpack.c.b16 %v4700, %v4693
    %v5149 = vpack.c.b16 %v4701, %v4694
    %v5150 = vpack.c.b16 %v4702, %v4695
    %v5151 = vpack.c.b16 %v4703, %v4696
    %v5152 = vpack.c.b16 %v4704, %v4697
    %v5153 = vpack.c.b16 %v4705, %v4698
    %5602 = vmatprep.subr.bf16.mxu0 %v4707
    %5603 = vmatpush1.bf16.msra.mxu0 %v4706
    %5604 = vmatprep.subr.bf16.mxu0 %v4714
    %5605 = vmatpush1.bf16.msra.mxu0 %v4713
    %5606 = vmatprep.subr.bf16.mxu0 %v4721
    %5607 = vmatpush1.bf16.msra.mxu0 %v4720
    %5608 = vmatprep.subr.bf16.mxu0 %v4728
    %5609 = vmatpush1.bf16.msra.mxu0 %v4727
    %5610 = vmatprep.subr.bf16.mxu0 %v4735
    %5611 = vmatpush1.bf16.msra.mxu0 %v4734
    %5612 = vmatprep.subr.bf16.mxu0 %v4742
    %5613 = vmatpush1.bf16.msra.mxu0 %v4741
    %5614 = vmatprep.subr.bf16.mxu0 %v4749
    %5615 = vmatpush1.bf16.msra.mxu0 %v4748
    %5616 = vmatprep.subr.bf16.mxu0 %v4756
    %5617 = vmatpush1.bf16.msra.mxu0 %v4755
    %5618 = vmatprep.subr.bf16.mxu0 %v4763
    %5619 = vmatpush1.bf16.msra.mxu0 %v4762
    %5620 = vmatprep.subr.bf16.mxu0 %v4770
    %5621 = vmatpush1.bf16.msra.mxu0 %v4769
    %5622 = vmatprep.subr.bf16.mxu0 %v4777
    %5623 = vmatpush1.bf16.msra.mxu0 %v4776
    %5624 = vmatprep.subr.bf16.mxu0 %v4784
    %5625 = vmatpush1.bf16.msra.mxu0 %v4783
    %5626 = vmatprep.subr.bf16.mxu0 %v4791
    %5627 = vmatpush1.bf16.msra.mxu0 %v4790
    %5628 = vmatprep.subr.bf16.mxu0 %v4798
    %5629 = vmatpush1.bf16.msra.mxu0 %v4797
    %5630 = vmatprep.subr.bf16.mxu0 %v4805
    %5631 = vmatpush1.bf16.msra.mxu0 %v4804
    %5632 = vmatprep.subr.bf16.mxu0 %v4812
    %5633 = vmatpush1.bf16.msra.mxu0 %v4811
    %5634 = vmatprep.mubr.bf16.mxu0 %v2742
    %5635 = vmatmul.mubr.bf16.gmra.mrb[0].mxu0 %v2741
    %v5636 = vpop.f32.mrb[0].mxu0
    %v5637 = vadd.f32 %v3266, %v5636
    %v5638 = vpop.f32.mrb[0].mxu0
    %v5639 = vadd.f32 %v3270, %v5638
    %v5640 = vpop.f32.mrb[0].mxu0
    %v5641 = vadd.f32 %v3266, %v5640
    %v5642 = vpop.f32.mrb[0].mxu0
    %v5643 = vadd.f32 %v3270, %v5642
    %5644 = vdwg.mxu0
    %5645 = vmatprep.subr.bf16.mxu0 %v4819
    %5646 = vmatpush1.bf16.msra.mxu0 %v4818
    %5647 = vmatprep.subr.bf16.mxu0 %v4826
    %5648 = vmatpush1.bf16.msra.mxu0 %v4825
    %5649 = vmatprep.subr.bf16.mxu0 %v4833
    %5650 = vmatpush1.bf16.msra.mxu0 %v4832
    %5651 = vmatprep.subr.bf16.mxu0 %v4840
    %5652 = vmatpush1.bf16.msra.mxu0 %v4839
    %5653 = vmatprep.subr.bf16.mxu0 %v4847
    %5654 = vmatpush1.bf16.msra.mxu0 %v4846
    %5655 = vmatprep.subr.bf16.mxu0 %v4854
    %5656 = vmatpush1.bf16.msra.mxu0 %v4853
    %5657 = vmatprep.subr.bf16.mxu0 %v4861
    %5658 = vmatpush1.bf16.msra.mxu0 %v4860
    %5659 = vmatprep.subr.bf16.mxu0 %v4868
    %5660 = vmatpush1.bf16.msra.mxu0 %v4867
    %5661 = vmatprep.subr.bf16.mxu0 %v4875
    %5662 = vmatpush1.bf16.msra.mxu0 %v4874
    %5663 = vmatprep.subr.bf16.mxu0 %v4882
    %5664 = vmatpush1.bf16.msra.mxu0 %v4881
    %5665 = vmatprep.subr.bf16.mxu0 %v4889
    %5666 = vmatpush1.bf16.msra.mxu0 %v4888
    %5667 = vmatprep.subr.bf16.mxu0 %v4896
    %5668 = vmatpush1.bf16.msra.mxu0 %v4895
    %5669 = vmatprep.subr.bf16.mxu0 %v4903
    %5670 = vmatpush1.bf16.msra.mxu0 %v4902
    %5671 = vmatprep.subr.bf16.mxu0 %v4910
    %5672 = vmatpush1.bf16.msra.mxu0 %v4909
    %5673 = vmatprep.subr.bf16.mxu0 %v4917
    %5674 = vmatpush1.bf16.msra.mxu0 %v4916
    %5675 = vmatprep.subr.bf16.mxu0 %v4924
    %5676 = vmatpush1.bf16.msra.mxu0 %v4923
    %5677 = vmatprep.mubr.bf16.mxu0 %v2744
    %5678 = vmatmul.mubr.bf16.gmra.mrb[0].mxu0 %v2743
    %v5679 = vpop.f32.mrb[0].mxu0
    %v5680 = vadd.f32 %v5637, %v5679
    %v5681 = vpop.f32.mrb[0].mxu0
    %v5682 = vadd.f32 %v5639, %v5681
    %v5683 = vpop.f32.mrb[0].mxu0
    %v5684 = vadd.f32 %v5641, %v5683
    %v5685 = vpop.f32.mrb[0].mxu0
    %v5686 = vadd.f32 %v5643, %v5685
    %5687 = vdwg.mxu0
    %5688 = vmatprep.subr.bf16.mxu0 %v4931
    %5689 = vmatpush1.bf16.msra.mxu0 %v4930
    %5690 = vmatprep.subr.bf16.mxu0 %v4938
    %5691 = vmatpush1.bf16.msra.mxu0 %v4937
    %5692 = vmatprep.subr.bf16.mxu0 %v4945
    %5693 = vmatpush1.bf16.msra.mxu0 %v4944
    %5694 = vmatprep.subr.bf16.mxu0 %v4952
    %5695 = vmatpush1.bf16.msra.mxu0 %v4951
    %5696 = vmatprep.subr.bf16.mxu0 %v4959
    %5697 = vmatpush1.bf16.msra.mxu0 %v4958
    %5698 = vmatprep.subr.bf16.mxu0 %v4966
    %5699 = vmatpush1.bf16.msra.mxu0 %v4965
    %5700 = vmatprep.subr.bf16.mxu0 %v4973
    %5701 = vmatpush1.bf16.msra.mxu0 %v4972
    %5702 = vmatprep.subr.bf16.mxu0 %v4980
    %5703 = vmatpush1.bf16.msra.mxu0 %v4979
    %5704 = vmatprep.subr.bf16.mxu0 %v4987
    %5705 = vmatpush1.bf16.msra.mxu0 %v4986
    %5706 = vmatprep.subr.bf16.mxu0 %v4994
    %5707 = vmatpush1.bf16.msra.mxu0 %v4993
    %5708 = vmatprep.subr.bf16.mxu0 %v5001
    %5709 = vmatpush1.bf16.msra.mxu0 %v5000
    %5710 = vmatprep.subr.bf16.mxu0 %v5008
    %5711 = vmatpush1.bf16.msra.mxu0 %v5007
    %5712 = vmatprep.subr.bf16.mxu0 %v5015
    %5713 = vmatpush1.bf16.msra.mxu0 %v5014
    %5714 = vmatprep.subr.bf16.mxu0 %v5022
    %5715 = vmatpush1.bf16.msra.mxu0 %v5021
    %5716 = vmatprep.subr.bf16.mxu0 %v5029
    %5717 = vmatpush1.bf16.msra.mxu0 %v5028
    %5718 = vmatprep.subr.bf16.mxu0 %v5036
    %5719 = vmatpush1.bf16.msra.mxu0 %v5035
    %5720 = vmatprep.mubr.bf16.mxu0 %v2746
    %5721 = vmatmul.mubr.bf16.gmra.mrb[0].mxu0 %v2745
    %v5722 = vpop.f32.mrb[0].mxu0
    %v5723 = vadd.f32 %v5680, %v5722
    %v5724 = vpop.f32.mrb[0].mxu0
    %v5725 = vadd.f32 %v5682, %v5724
    %v5726 = vpop.f32.mrb[0].mxu0
    %v5727 = vadd.f32 %v5684, %v5726
    %v5728 = vpop.f32.mrb[0].mxu0
    %v5729 = vadd.f32 %v5686, %v5728
    %5730 = vdwg.mxu0
    %5731 = vmatprep.subr.bf16.mxu0 %v5043
    %5732 = vmatpush1.bf16.msra.mxu0 %v5042
    %5733 = vmatprep.subr.bf16.mxu0 %v5050
    %5734 = vmatpush1.bf16.msra.mxu0 %v5049
    %5735 = vmatprep.subr.bf16.mxu0 %v5057
    %5736 = vmatpush1.bf16.msra.mxu0 %v5056
    %5737 = vmatprep.subr.bf16.mxu0 %v5064
    %5738 = vmatpush1.bf16.msra.mxu0 %v5063
    %5739 = vmatprep.subr.bf16.mxu0 %v5071
    %5740 = vmatpush1.bf16.msra.mxu0 %v5070
    %5741 = vmatprep.subr.bf16.mxu0 %v5078
    %5742 = vmatpush1.bf16.msra.mxu0 %v5077
    %5743 = vmatprep.subr.bf16.mxu0 %v5085
    %5744 = vmatpush1.bf16.msra.mxu0 %v5084
    %5745 = vmatprep.subr.bf16.mxu0 %v5092
    %5746 = vmatpush1.bf16.msra.mxu0 %v5091
    %5747 = vmatprep.subr.bf16.mxu0 %v5099
    %5748 = vmatpush1.bf16.msra.mxu0 %v5098
    %5749 = vmatprep.subr.bf16.mxu0 %v5106
    %5750 = vmatpush1.bf16.msra.mxu0 %v5105
    %5751 = vmatprep.subr.bf16.mxu0 %v5113
    %5752 = vmatpush1.bf16.msra.mxu0 %v5112
    %5753 = vmatprep.subr.bf16.mxu0 %v5120
    %5754 = vmatpush1.bf16.msra.mxu0 %v5119
    %5755 = vmatprep.subr.bf16.mxu0 %v5127
    %5756 = vmatpush1.bf16.msra.mxu0 %v5126
    %5757 = vmatprep.subr.bf16.mxu0 %v5134
    %5758 = vmatpush1.bf16.msra.mxu0 %v5133
    %5759 = vmatprep.subr.bf16.mxu0 %v5141
    %5760 = vmatpush1.bf16.msra.mxu0 %v5140
    %5761 = vmatprep.subr.bf16.mxu0 %v5148
    %5762 = vmatpush1.bf16.msra.mxu0 %v5147
    %5763 = vmatprep.mubr.bf16.mxu0 %v2748
    %5764 = vmatmul.mubr.bf16.gmra.mrb[0].mxu0 %v2747
    %v5765 = vpop.f32.mrb[0].mxu0
    %v5766 = vadd.f32 %v5723, %v5765
    %v5767 = vpop.f32.mrb[0].mxu0
    %v5768 = vadd.f32 %v5725, %v5767
    %v5769 = vpop.f32.mrb[0].mxu0
    %v5770 = vadd.f32 %v5727, %v5769
    %v5771 = vpop.f32.mrb[0].mxu0
    %v5772 = vadd.f32 %v5729, %v5771
    %5773 = vdwg.mxu0
    %5774 = vmatprep.subr.bf16.mxu0 %v4709
    %5775 = vmatpush1.bf16.msra.mxu0 %v4708
    %5776 = vmatprep.subr.bf16.mxu0 %v4716
    %5777 = vmatpush1.bf16.msra.mxu0 %v4715
    %5778 = vmatprep.subr.bf16.mxu0 %v4723
    %5779 = vmatpush1.bf16.msra.mxu0 %v4722
    %5780 = vmatprep.subr.bf16.mxu0 %v4730
    %5781 = vmatpush1.bf16.msra.mxu0 %v4729
    %5782 = vmatprep.subr.bf16.mxu0 %v4737
    %5783 = vmatpush1.bf16.msra.mxu0 %v4736
    %5784 = vmatprep.subr.bf16.mxu0 %v4744
    %5785 = vmatpush1.bf16.msra.mxu0 %v4743
    %5786 = vmatprep.subr.bf16.mxu0 %v4751
    %5787 = vmatpush1.bf16.msra.mxu0 %v4750
    %5788 = vmatprep.subr.bf16.mxu0 %v4758
    %5789 = vmatpush1.bf16.msra.mxu0 %v4757
    %5790 = vmatprep.subr.bf16.mxu0 %v4765
    %5791 = vmatpush1.bf16.msra.mxu0 %v4764
    %5792 = vmatprep.subr.bf16.mxu0 %v4772
    %5793 = vmatpush1.bf16.msra.mxu0 %v4771
    %5794 = vmatprep.subr.bf16.mxu0 %v4779
    %5795 = vmatpush1.bf16.msra.mxu0 %v4778
    %5796 = vmatprep.subr.bf16.mxu0 %v4786
    %5797 = vmatpush1.bf16.msra.mxu0 %v4785
    %5798 = vmatprep.subr.bf16.mxu0 %v4793
    %5799 = vmatpush1.bf16.msra.mxu0 %v4792
    %5800 = vmatprep.subr.bf16.mxu0 %v4800
    %5801 = vmatpush1.bf16.msra.mxu0 %v4799
    %5802 = vmatprep.subr.bf16.mxu0 %v4807
    %5803 = vmatpush1.bf16.msra.mxu0 %v4806
    %5804 = vmatprep.subr.bf16.mxu0 %v4814
    %5805 = vmatpush1.bf16.msra.mxu0 %v4813
    %5806 = vmatprep.mubr.bf16.mxu0 %v2742
    %5807 = vmatmul.mubr.bf16.gmra.mrb[0].mxu0 %v2741
    %v5808 = vpop.f32.mrb[0].mxu0
    %v5809 = vadd.f32 %v3274, %v5808
    %v5810 = vpop.f32.mrb[0].mxu0
    %v5811 = vadd.f32 %v3278, %v5810
    %v5812 = vpop.f32.mrb[0].mxu0
    %v5813 = vadd.f32 %v3274, %v5812
    %v5814 = vpop.f32.mrb[0].mxu0
    %v5815 = vadd.f32 %v3278, %v5814
    %5816 = vdwg.mxu0
    %5817 = vmatprep.subr.bf16.mxu0 %v4821
    %5818 = vmatpush1.bf16.msra.mxu0 %v4820
    %5819 = vmatprep.subr.bf16.mxu0 %v4828
    %5820 = vmatpush1.bf16.msra.mxu0 %v4827
    %5821 = vmatprep.subr.bf16.mxu0 %v4835
    %5822 = vmatpush1.bf16.msra.mxu0 %v4834
    %5823 = vmatprep.subr.bf16.mxu0 %v4842
    %5824 = vmatpush1.bf16.msra.mxu0 %v4841
    %5825 = vmatprep.subr.bf16.mxu0 %v4849
    %5826 = vmatpush1.bf16.msra.mxu0 %v4848
    %5827 = vmatprep.subr.bf16.mxu0 %v4856
    %5828 = vmatpush1.bf16.msra.mxu0 %v4855
    %5829 = vmatprep.subr.bf16.mxu0 %v4863
    %5830 = vmatpush1.bf16.msra.mxu0 %v4862
    %5831 = vmatprep.subr.bf16.mxu0 %v4870
    %5832 = vmatpush1.bf16.msra.mxu0 %v4869
    %5833 = vmatprep.subr.bf16.mxu0 %v4877
    %5834 = vmatpush1.bf16.msra.mxu0 %v4876
    %5835 = vmatprep.subr.bf16.mxu0 %v4884
    %5836 = vmatpush1.bf16.msra.mxu0 %v4883
    %5837 = vmatprep.subr.bf16.mxu0 %v4891
    %5838 = vmatpush1.bf16.msra.mxu0 %v4890
    %5839 = vmatprep.subr.bf16.mxu0 %v4898
    %5840 = vmatpush1.bf16.msra.mxu0 %v4897
    %5841 = vmatprep.subr.bf16.mxu0 %v4905
    %5842 = vmatpush1.bf16.msra.mxu0 %v4904
    %5843 = vmatprep.subr.bf16.mxu0 %v4912
    %5844 = vmatpush1.bf16.msra.mxu0 %v4911
    %5845 = vmatprep.subr.bf16.mxu0 %v4919
    %5846 = vmatpush1.bf16.msra.mxu0 %v4918
    %5847 = vmatprep.subr.bf16.mxu0 %v4926
    %5848 = vmatpush1.bf16.msra.mxu0 %v4925
    %5849 = vmatprep.mubr.bf16.mxu0 %v2744
    %5850 = vmatmul.mubr.bf16.gmra.mrb[0].mxu0 %v2743
    %v5851 = vpop.f32.mrb[0].mxu0
    %v5852 = vadd.f32 %v5809, %v5851
    %v5853 = vpop.f32.mrb[0].mxu0
    %v5854 = vadd.f32 %v5811, %v5853
    %v5855 = vpop.f32.mrb[0].mxu0
    %v5856 = vadd.f32 %v5813, %v5855
    %v5857 = vpop.f32.mrb[0].mxu0
    %v5858 = vadd.f32 %v5815, %v5857
    %5859 = vdwg.mxu0
    %5860 = vmatprep.subr.bf16.mxu0 %v4933
    %5861 = vmatpush1.bf16.msra.mxu0 %v4932
    %5862 = vmatprep.subr.bf16.mxu0 %v4940
    %5863 = vmatpush1.bf16.msra.mxu0 %v4939
    %5864 = vmatprep.subr.bf16.mxu0 %v4947
    %5865 = vmatpush1.bf16.msra.mxu0 %v4946
    %5866 = vmatprep.subr.bf16.mxu0 %v4954
    %5867 = vmatpush1.bf16.msra.mxu0 %v4953
    %5868 = vmatprep.subr.bf16.mxu0 %v4961
    %5869 = vmatpush1.bf16.msra.mxu0 %v4960
    %5870 = vmatprep.subr.bf16.mxu0 %v4968
    %5871 = vmatpush1.bf16.msra.mxu0 %v4967
    %5872 = vmatprep.subr.bf16.mxu0 %v4975
    %5873 = vmatpush1.bf16.msra.mxu0 %v4974
    %5874 = vmatprep.subr.bf16.mxu0 %v4982
    %5875 = vmatpush1.bf16.msra.mxu0 %v4981
    %5876 = vmatprep.subr.bf16.mxu0 %v4989
    %5877 = vmatpush1.bf16.msra.mxu0 %v4988
    %5878 = vmatprep.subr.bf16.mxu0 %v4996
    %5879 = vmatpush1.bf16.msra.mxu0 %v4995
    %5880 = vmatprep.subr.bf16.mxu0 %v5003
    %5881 = vmatpush1.bf16.msra.mxu0 %v5002
    %5882 = vmatprep.subr.bf16.mxu0 %v5010
    %5883 = vmatpush1.bf16.msra.mxu0 %v5009
    %5884 = vmatprep.subr.bf16.mxu0 %v5017
    %5885 = vmatpush1.bf16.msra.mxu0 %v5016
    %5886 = vmatprep.subr.bf16.mxu0 %v5024
    %5887 = vmatpush1.bf16.msra.mxu0 %v5023
    %5888 = vmatprep.subr.bf16.mxu0 %v5031
    %5889 = vmatpush1.bf16.msra.mxu0 %v5030
    %5890 = vmatprep.subr.bf16.mxu0 %v5038
    %5891 = vmatpush1.bf16.msra.mxu0 %v5037
    %5892 = vmatprep.mubr.bf16.mxu0 %v2746
    %5893 = vmatmul.mubr.bf16.gmra.mrb[0].mxu0 %v2745
    %v5894 = vpop.f32.mrb[0].mxu0
    %v5895 = vadd.f32 %v5852, %v5894
    %v5896 = vpop.f32.mrb[0].mxu0
    %v5897 = vadd.f32 %v5854, %v5896
    %v5898 = vpop.f32.mrb[0].mxu0
    %v5899 = vadd.f32 %v5856, %v5898
    %v5900 = vpop.f32.mrb[0].mxu0
    %v5901 = vadd.f32 %v5858, %v5900
    %5902 = vdwg.mxu0
    %5903 = vmatprep.subr.bf16.mxu0 %v5045
    %5904 = vmatpush1.bf16.msra.mxu0 %v5044
    %5905 = vmatprep.subr.bf16.mxu0 %v5052
    %5906 = vmatpush1.bf16.msra.mxu0 %v5051
    %5907 = vmatprep.subr.bf16.mxu0 %v5059
    %5908 = vmatpush1.bf16.msra.mxu0 %v5058
    %5909 = vmatprep.subr.bf16.mxu0 %v5066
    %5910 = vmatpush1.bf16.msra.mxu0 %v5065
    %5911 = vmatprep.subr.bf16.mxu0 %v5073
    %5912 = vmatpush1.bf16.msra.mxu0 %v5072
    %5913 = vmatprep.subr.bf16.mxu0 %v5080
    %5914 = vmatpush1.bf16.msra.mxu0 %v5079
    %5915 = vmatprep.subr.bf16.mxu0 %v5087
    %5916 = vmatpush1.bf16.msra.mxu0 %v5086
    %5917 = vmatprep.subr.bf16.mxu0 %v5094
    %5918 = vmatpush1.bf16.msra.mxu0 %v5093
    %5919 = vmatprep.subr.bf16.mxu0 %v5101
    %5920 = vmatpush1.bf16.msra.mxu0 %v5100
    %5921 = vmatprep.subr.bf16.mxu0 %v5108
    %5922 = vmatpush1.bf16.msra.mxu0 %v5107
    %5923 = vmatprep.subr.bf16.mxu0 %v5115
    %5924 = vmatpush1.bf16.msra.mxu0 %v5114
    %5925 = vmatprep.subr.bf16.mxu0 %v5122
    %5926 = vmatpush1.bf16.msra.mxu0 %v5121
    %5927 = vmatprep.subr.bf16.mxu0 %v5129
    %5928 = vmatpush1.bf16.msra.mxu0 %v5128
    %5929 = vmatprep.subr.bf16.mxu0 %v5136
    %5930 = vmatpush1.bf16.msra.mxu0 %v5135
    %5931 = vmatprep.subr.bf16.mxu0 %v5143
    %5932 = vmatpush1.bf16.msra.mxu0 %v5142
    %5933 = vmatprep.subr.bf16.mxu0 %v5150
    %5934 = vmatpush1.bf16.msra.mxu0 %v5149
    %5935 = vmatprep.mubr.bf16.mxu0 %v2748
    %5936 = vmatmul.mubr.bf16.gmra.mrb[0].mxu0 %v2747
    %v5937 = vpop.f32.mrb[0].mxu0
    %v5938 = vadd.f32 %v5895, %v5937
    %v5939 = vpop.f32.mrb[0].mxu0
    %v5940 = vadd.f32 %v5897, %v5939
    %v5941 = vpop.f32.mrb[0].mxu0
    %v5942 = vadd.f32 %v5899, %v5941
    %v5943 = vpop.f32.mrb[0].mxu0
    %v5944 = vadd.f32 %v5901, %v5943
    %5945 = vdwg.mxu0
    %5946 = vmatprep.subr.bf16.mxu0 %v4711
    %5947 = vmatpush1.bf16.msra.mxu0 %v4710
    %5948 = vmatprep.subr.bf16.mxu0 %v4718
    %5949 = vmatpush1.bf16.msra.mxu0 %v4717
    %5950 = vmatprep.subr.bf16.mxu0 %v4725
    %5951 = vmatpush1.bf16.msra.mxu0 %v4724
    %5952 = vmatprep.subr.bf16.mxu0 %v4732
    %5953 = vmatpush1.bf16.msra.mxu0 %v4731
    %5954 = vmatprep.subr.bf16.mxu0 %v4739
    %5955 = vmatpush1.bf16.msra.mxu0 %v4738
    %5956 = vmatprep.subr.bf16.mxu0 %v4746
    %5957 = vmatpush1.bf16.msra.mxu0 %v4745
    %5958 = vmatprep.subr.bf16.mxu0 %v4753
    %5959 = vmatpush1.bf16.msra.mxu0 %v4752
    %5960 = vmatprep.subr.bf16.mxu0 %v4760
    %5961 = vmatpush1.bf16.msra.mxu0 %v4759
    %5962 = vmatprep.subr.bf16.mxu0 %v4767
    %5963 = vmatpush1.bf16.msra.mxu0 %v4766
    %5964 = vmatprep.subr.bf16.mxu0 %v4774
    %5965 = vmatpush1.bf16.msra.mxu0 %v4773
    %5966 = vmatprep.subr.bf16.mxu0 %v4781
    %5967 = vmatpush1.bf16.msra.mxu0 %v4780
    %5968 = vmatprep.subr.bf16.mxu0 %v4788
    %5969 = vmatpush1.bf16.msra.mxu0 %v4787
    %5970 = vmatprep.subr.bf16.mxu0 %v4795
    %5971 = vmatpush1.bf16.msra.mxu0 %v4794
    %5972 = vmatprep.subr.bf16.mxu0 %v4802
    %5973 = vmatpush1.bf16.msra.mxu0 %v4801
    %5974 = vmatprep.subr.bf16.mxu0 %v4809
    %5975 = vmatpush1.bf16.msra.mxu0 %v4808
    %5976 = vmatprep.subr.bf16.mxu0 %v4816
    %5977 = vmatpush1.bf16.msra.mxu0 %v4815
    %5978 = vmatprep.mubr.bf16.mxu0 %v2742
    %5979 = vmatmul.mubr.bf16.gmra.mrb[0].mxu0 %v2741
    %v5980 = vpop.f32.mrb[0].mxu0
    %v5981 = vadd.f32 %v3282, %v5980
    %v5982 = vpop.f32.mrb[0].mxu0
    %v5983 = vadd.f32 %v3286, %v5982
    %v5984 = vpop.f32.mrb[0].mxu0
    %v5985 = vadd.f32 %v3282, %v5984
    %v5986 = vpop.f32.mrb[0].mxu0
    %v5987 = vadd.f32 %v3286, %v5986
    %5988 = vdwg.mxu0
    %5989 = vmatprep.subr.bf16.mxu0 %v4823
    %5990 = vmatpush1.bf16.msra.mxu0 %v4822
    %5991 = vmatprep.subr.bf16.mxu0 %v4830
    %5992 = vmatpush1.bf16.msra.mxu0 %v4829
    %5993 = vmatprep.subr.bf16.mxu0 %v4837
    %5994 = vmatpush1.bf16.msra.mxu0 %v4836
    %5995 = vmatprep.subr.bf16.mxu0 %v4844
    %5996 = vmatpush1.bf16.msra.mxu0 %v4843
    %5997 = vmatprep.subr.bf16.mxu0 %v4851
    %5998 = vmatpush1.bf16.msra.mxu0 %v4850
    %5999 = vmatprep.subr.bf16.mxu0 %v4858
    %6000 = vmatpush1.bf16.msra.mxu0 %v4857
    %6001 = vmatprep.subr.bf16.mxu0 %v4865
    %6002 = vmatpush1.bf16.msra.mxu0 %v4864
    %6003 = vmatprep.subr.bf16.mxu0 %v4872
    %6004 = vmatpush1.bf16.msra.mxu0 %v4871
    %6005 = vmatprep.subr.bf16.mxu0 %v4879
    %6006 = vmatpush1.bf16.msra.mxu0 %v4878
    %6007 = vmatprep.subr.bf16.mxu0 %v4886
    %6008 = vmatpush1.bf16.msra.mxu0 %v4885
    %6009 = vmatprep.subr.bf16.mxu0 %v4893
    %6010 = vmatpush1.bf16.msra.mxu0 %v4892
    %6011 = vmatprep.subr.bf16.mxu0 %v4900
    %6012 = vmatpush1.bf16.msra.mxu0 %v4899
    %6013 = vmatprep.subr.bf16.mxu0 %v4907
    %6014 = vmatpush1.bf16.msra.mxu0 %v4906
    %6015 = vmatprep.subr.bf16.mxu0 %v4914
    %6016 = vmatpush1.bf16.msra.mxu0 %v4913
    %6017 = vmatprep.subr.bf16.mxu0 %v4921
    %6018 = vmatpush1.bf16.msra.mxu0 %v4920
    %6019 = vmatprep.subr.bf16.mxu0 %v4928
    %6020 = vmatpush1.bf16.msra.mxu0 %v4927
    %6021 = vmatprep.mubr.bf16.mxu0 %v2744
    %6022 = vmatmul.mubr.bf16.gmra.mrb[0].mxu0 %v2743
    %v6023 = vpop.f32.mrb[0].mxu0
    %v6024 = vadd.f32 %v5981, %v6023
    %v6025 = vpop.f32.mrb[0].mxu0
    %v6026 = vadd.f32 %v5983, %v6025
    %v6027 = vpop.f32.mrb[0].mxu0
    %v6028 = vadd.f32 %v5985, %v6027
    %v6029 = vpop.f32.mrb[0].mxu0
    %v6030 = vadd.f32 %v5987, %v6029
    %6031 = vdwg.mxu0
    %6032 = vmatprep.subr.bf16.mxu0 %v4935
    %6033 = vmatpush1.bf16.msra.mxu0 %v4934
    %6034 = vmatprep.subr.bf16.mxu0 %v4942
    %6035 = vmatpush1.bf16.msra.mxu0 %v4941
    %6036 = vmatprep.subr.bf16.mxu0 %v4949
    %6037 = vmatpush1.bf16.msra.mxu0 %v4948
    %6038 = vmatprep.subr.bf16.mxu0 %v4956
    %6039 = vmatpush1.bf16.msra.mxu0 %v4955
    %6040 = vmatprep.subr.bf16.mxu0 %v4963
    %6041 = vmatpush1.bf16.msra.mxu0 %v4962
    %6042 = vmatprep.subr.bf16.mxu0 %v4970
    %6043 = vmatpush1.bf16.msra.mxu0 %v4969
    %6044 = vmatprep.subr.bf16.mxu0 %v4977
    %6045 = vmatpush1.bf16.msra.mxu0 %v4976
    %6046 = vmatprep.subr.bf16.mxu0 %v4984
    %6047 = vmatpush1.bf16.msra.mxu0 %v4983
    %6048 = vmatprep.subr.bf16.mxu0 %v4991
    %6049 = vmatpush1.bf16.msra.mxu0 %v4990
    %6050 = vmatprep.subr.bf16.mxu0 %v4998
    %6051 = vmatpush1.bf16.msra.mxu0 %v4997
    %6052 = vmatprep.subr.bf16.mxu0 %v5005
    %6053 = vmatpush1.bf16.msra.mxu0 %v5004
    %6054 = vmatprep.subr.bf16.mxu0 %v5012
    %6055 = vmatpush1.bf16.msra.mxu0 %v5011
    %6056 = vmatprep.subr.bf16.mxu0 %v5019
    %6057 = vmatpush1.bf16.msra.mxu0 %v5018
    %6058 = vmatprep.subr.bf16.mxu0 %v5026
    %6059 = vmatpush1.bf16.msra.mxu0 %v5025
    %6060 = vmatprep.subr.bf16.mxu0 %v5033
    %6061 = vmatpush1.bf16.msra.mxu0 %v5032
    %6062 = vmatprep.subr.bf16.mxu0 %v5040
    %6063 = vmatpush1.bf16.msra.mxu0 %v5039
    %6064 = vmatprep.mubr.bf16.mxu0 %v2746
    %6065 = vmatmul.mubr.bf16.gmra.mrb[0].mxu0 %v2745
    %v6066 = vpop.f32.mrb[0].mxu0
    %v6067 = vadd.f32 %v6024, %v6066
    %v6068 = vpop.f32.mrb[0].mxu0
    %v6069 = vadd.f32 %v6026, %v6068
    %v6070 = vpop.f32.mrb[0].mxu0
    %v6071 = vadd.f32 %v6028, %v6070
    %v6072 = vpop.f32.mrb[0].mxu0
    %v6073 = vadd.f32 %v6030, %v6072
    %6074 = vdwg.mxu0
    %6075 = vmatprep.subr.bf16.mxu0 %v5047
    %6076 = vmatpush1.bf16.msra.mxu0 %v5046
    %6077 = vmatprep.subr.bf16.mxu0 %v5054
    %6078 = vmatpush1.bf16.msra.mxu0 %v5053
    %6079 = vmatprep.subr.bf16.mxu0 %v5061
    %6080 = vmatpush1.bf16.msra.mxu0 %v5060
    %6081 = vmatprep.subr.bf16.mxu0 %v5068
    %6082 = vmatpush1.bf16.msra.mxu0 %v5067
    %6083 = vmatprep.subr.bf16.mxu0 %v5075
    %6084 = vmatpush1.bf16.msra.mxu0 %v5074
    %6085 = vmatprep.subr.bf16.mxu0 %v5082
    %6086 = vmatpush1.bf16.msra.mxu0 %v5081
    %6087 = vmatprep.subr.bf16.mxu0 %v5089
    %6088 = vmatpush1.bf16.msra.mxu0 %v5088
    %6089 = vmatprep.subr.bf16.mxu0 %v5096
    %6090 = vmatpush1.bf16.msra.mxu0 %v5095
    %6091 = vmatprep.subr.bf16.mxu0 %v5103
    %6092 = vmatpush1.bf16.msra.mxu0 %v5102
    %6093 = vmatprep.subr.bf16.mxu0 %v5110
    %6094 = vmatpush1.bf16.msra.mxu0 %v5109
    %6095 = vmatprep.subr.bf16.mxu0 %v5117
    %6096 = vmatpush1.bf16.msra.mxu0 %v5116
    %6097 = vmatprep.subr.bf16.mxu0 %v5124
    %6098 = vmatpush1.bf16.msra.mxu0 %v5123
    %6099 = vmatprep.subr.bf16.mxu0 %v5131
    %6100 = vmatpush1.bf16.msra.mxu0 %v5130
    %6101 = vmatprep.subr.bf16.mxu0 %v5138
    %6102 = vmatpush1.bf16.msra.mxu0 %v5137
    %6103 = vmatprep.subr.bf16.mxu0 %v5145
    %6104 = vmatpush1.bf16.msra.mxu0 %v5144
    %6105 = vmatprep.subr.bf16.mxu0 %v5152
    %6106 = vmatpush1.bf16.msra.mxu0 %v5151
    %6107 = vmatprep.mubr.bf16.mxu0 %v2748
    %6108 = vmatmul.mubr.bf16.gmra.mrb[0].mxu0 %v2747
    %v6109 = vpop.f32.mrb[0].mxu0
    %v6110 = vadd.f32 %v6067, %v6109
    %v6111 = vpop.f32.mrb[0].mxu0
    %v6112 = vadd.f32 %v6069, %v6111
    %v6113 = vpop.f32.mrb[0].mxu0
    %v6114 = vadd.f32 %v6071, %v6113
    %v6115 = vpop.f32.mrb[0].mxu0
    %v6116 = vadd.f32 %v6073, %v6115
    %6117 = vdwg.mxu0
    %6118 = vmatprep.subr.bf16.mxu0 0
    %6119 = vmatpush1.bf16.msra.mxu0 %v4712
    %6120 = vmatprep.subr.bf16.mxu0 0
    %6121 = vmatpush1.bf16.msra.mxu0 %v4719
    %6122 = vmatprep.subr.bf16.mxu0 0
    %6123 = vmatpush1.bf16.msra.mxu0 %v4726
    %6124 = vmatprep.subr.bf16.mxu0 0
    %6125 = vmatpush1.bf16.msra.mxu0 %v4733
    %6126 = vmatprep.subr.bf16.mxu0 0
    %6127 = vmatpush1.bf16.msra.mxu0 %v4740
    %6128 = vmatprep.subr.bf16.mxu0 0
    %6129 = vmatpush1.bf16.msra.mxu0 %v4747
    %6130 = vmatprep.subr.bf16.mxu0 0
    %6131 = vmatpush1.bf16.msra.mxu0 %v4754
    %6132 = vmatprep.subr.bf16.mxu0 0
    %6133 = vmatpush1.bf16.msra.mxu0 %v4761
    %6134 = vmatprep.subr.bf16.mxu0 0
    %6135 = vmatpush1.bf16.msra.mxu0 %v4768
    %6136 = vmatprep.subr.bf16.mxu0 0
    %6137 = vmatpush1.bf16.msra.mxu0 %v4775
    %6138 = vmatprep.subr.bf16.mxu0 0
    %6139 = vmatpush1.bf16.msra.mxu0 %v4782
    %6140 = vmatprep.subr.bf16.mxu0 0
    %6141 = vmatpush1.bf16.msra.mxu0 %v4789
    %6142 = vmatprep.subr.bf16.mxu0 0
    %6143 = vmatpush1.bf16.msra.mxu0 %v4796
    %6144 = vmatprep.subr.bf16.mxu0 0
    %6145 = vmatpush1.bf16.msra.mxu0 %v4803
    %6146 = vmatprep.subr.bf16.mxu0 0
    %6147 = vmatpush1.bf16.msra.mxu0 %v4810
    %6148 = vmatprep.subr.bf16.mxu0 0
    %6149 = vmatpush1.bf16.msra.mxu0 %v4817
    %6150 = vmatprep.mubr.bf16.mxu0 %v2742
    %6151 = vmatmul.mubr.bf16.gmra.mrb[0].mxu0 %v2741
    %v6152 = vpop.f32.mrb[0].mxu0
    %v6153 = vadd.f32 %v3290, %v6152
    %v6154 = vpop.f32.mrb[0].mxu0
    %v6155 = vpop.f32.mrb[0].mxu0
    %v6156 = vadd.f32 %v3290, %v6155
    %v6157 = vpop.f32.mrb[0].mxu0
    %6158 = vdwg.mxu0
    %6159 = vmatprep.subr.bf16.mxu0 0
    %6160 = vmatpush1.bf16.msra.mxu0 %v4824
    %6161 = vmatprep.subr.bf16.mxu0 0
    %6162 = vmatpush1.bf16.msra.mxu0 %v4831
    %6163 = vmatprep.subr.bf16.mxu0 0
    %6164 = vmatpush1.bf16.msra.mxu0 %v4838
    %6165 = vmatprep.subr.bf16.mxu0 0
    %6166 = vmatpush1.bf16.msra.mxu0 %v4845
    %6167 = vmatprep.subr.bf16.mxu0 0
    %6168 = vmatpush1.bf16.msra.mxu0 %v4852
    %6169 = vmatprep.subr.bf16.mxu0 0
    %6170 = vmatpush1.bf16.msra.mxu0 %v4859
    %6171 = vmatprep.subr.bf16.mxu0 0
    %6172 = vmatpush1.bf16.msra.mxu0 %v4866
    %6173 = vmatprep.subr.bf16.mxu0 0
    %6174 = vmatpush1.bf16.msra.mxu0 %v4873
    %6175 = vmatprep.subr.bf16.mxu0 0
    %6176 = vmatpush1.bf16.msra.mxu0 %v4880
    %6177 = vmatprep.subr.bf16.mxu0 0
    %6178 = vmatpush1.bf16.msra.mxu0 %v4887
    %6179 = vmatprep.subr.bf16.mxu0 0
    %6180 = vmatpush1.bf16.msra.mxu0 %v4894
    %6181 = vmatprep.subr.bf16.mxu0 0
    %6182 = vmatpush1.bf16.msra.mxu0 %v4901
    %6183 = vmatprep.subr.bf16.mxu0 0
    %6184 = vmatpush1.bf16.msra.mxu0 %v4908
    %6185 = vmatprep.subr.bf16.mxu0 0
    %6186 = vmatpush1.bf16.msra.mxu0 %v4915
    %6187 = vmatprep.subr.bf16.mxu0 0
    %6188 = vmatpush1.bf16.msra.mxu0 %v4922
    %6189 = vmatprep.subr.bf16.mxu0 0
    %6190 = vmatpush1.bf16.msra.mxu0 %v4929
    %6191 = vmatprep.mubr.bf16.mxu0 %v2744
    %6192 = vmatmul.mubr.bf16.gmra.mrb[0].mxu0 %v2743
    %v6193 = vpop.f32.mrb[0].mxu0
    %v6194 = vadd.f32 %v6153, %v6193
    %v6195 = vpop.f32.mrb[0].mxu0
    %v6196 = vpop.f32.mrb[0].mxu0
    %v6197 = vadd.f32 %v6156, %v6196
    %v6198 = vpop.f32.mrb[0].mxu0
    %6199 = vdwg.mxu0
    %6200 = vmatprep.subr.bf16.mxu0 0
    %6201 = vmatpush1.bf16.msra.mxu0 %v4936
    %6202 = vmatprep.subr.bf16.mxu0 0
    %6203 = vmatpush1.bf16.msra.mxu0 %v4943
    %6204 = vmatprep.subr.bf16.mxu0 0
    %6205 = vmatpush1.bf16.msra.mxu0 %v4950
    %6206 = vmatprep.subr.bf16.mxu0 0
    %6207 = vmatpush1.bf16.msra.mxu0 %v4957
    %6208 = vmatprep.subr.bf16.mxu0 0
    %6209 = vmatpush1.bf16.msra.mxu0 %v4964
    %6210 = vmatprep.subr.bf16.mxu0 0
    %6211 = vmatpush1.bf16.msra.mxu0 %v4971
    %6212 = vmatprep.subr.bf16.mxu0 0
    %6213 = vmatpush1.bf16.msra.mxu0 %v4978
    %6214 = vmatprep.subr.bf16.mxu0 0
    %6215 = vmatpush1.bf16.msra.mxu0 %v4985
    %6216 = vmatprep.subr.bf16.mxu0 0
    %6217 = vmatpush1.bf16.msra.mxu0 %v4992
    %6218 = vmatprep.subr.bf16.mxu0 0
    %6219 = vmatpush1.bf16.msra.mxu0 %v4999
    %6220 = vmatprep.subr.bf16.mxu0 0
    %6221 = vmatpush1.bf16.msra.mxu0 %v5006
    %6222 = vmatprep.subr.bf16.mxu0 0
    %6223 = vmatpush1.bf16.msra.mxu0 %v5013
    %6224 = vmatprep.subr.bf16.mxu0 0
    %6225 = vmatpush1.bf16.msra.mxu0 %v5020
    %6226 = vmatprep.subr.bf16.mxu0 0
    %6227 = vmatpush1.bf16.msra.mxu0 %v5027
    %6228 = vmatprep.subr.bf16.mxu0 0
    %6229 = vmatpush1.bf16.msra.mxu0 %v5034
    %6230 = vmatprep.subr.bf16.mxu0 0
    %6231 = vmatpush1.bf16.msra.mxu0 %v5041
    %6232 = vmatprep.mubr.bf16.mxu0 %v2746
    %6233 = vmatmul.mubr.bf16.gmra.mrb[0].mxu0 %v2745
    %v6234 = vpop.f32.mrb[0].mxu0
    %v6235 = vadd.f32 %v6194, %v6234
    %v6236 = vpop.f32.mrb[0].mxu0
    %v6237 = vpop.f32.mrb[0].mxu0
    %v6238 = vadd.f32 %v6197, %v6237
    %v6239 = vpop.f32.mrb[0].mxu0
    %6240 = vdwg.mxu0
    %6241 = vmatprep.subr.bf16.mxu0 0
    %6242 = vmatpush1.bf16.msra.mxu0 %v5048
    %6243 = vmatprep.subr.bf16.mxu0 0
    %6244 = vmatpush1.bf16.msra.mxu0 %v5055
    %6245 = vmatprep.subr.bf16.mxu0 0
    %6246 = vmatpush1.bf16.msra.mxu0 %v5062
    %6247 = vmatprep.subr.bf16.mxu0 0
    %6248 = vmatpush1.bf16.msra.mxu0 %v5069
    %6249 = vmatprep.subr.bf16.mxu0 0
    %6250 = vmatpush1.bf16.msra.mxu0 %v5076
    %6251 = vmatprep.subr.bf16.mxu0 0
    %6252 = vmatpush1.bf16.msra.mxu0 %v5083
    %6253 = vmatprep.subr.bf16.mxu0 0
    %6254 = vmatpush1.bf16.msra.mxu0 %v5090
    %6255 = vmatprep.subr.bf16.mxu0 0
    %6256 = vmatpush1.bf16.msra.mxu0 %v5097
    %6257 = vmatprep.subr.bf16.mxu0 0
    %6258 = vmatpush1.bf16.msra.mxu0 %v5104
    %6259 = vmatprep.subr.bf16.mxu0 0
    %6260 = vmatpush1.bf16.msra.mxu0 %v5111
    %6261 = vmatprep.subr.bf16.mxu0 0
    %6262 = vmatpush1.bf16.msra.mxu0 %v5118
    %6263 = vmatprep.subr.bf16.mxu0 0
    %6264 = vmatpush1.bf16.msra.mxu0 %v5125
    %6265 = vmatprep.subr.bf16.mxu0 0
    %6266 = vmatpush1.bf16.msra.mxu0 %v5132
    %6267 = vmatprep.subr.bf16.mxu0 0
    %6268 = vmatpush1.bf16.msra.mxu0 %v5139
    %6269 = vmatprep.subr.bf16.mxu0 0
    %6270 = vmatpush1.bf16.msra.mxu0 %v5146
    %6271 = vmatprep.subr.bf16.mxu0 0
    %6272 = vmatpush1.bf16.msra.mxu0 %v5153
    %6273 = vmatprep.mubr.bf16.mxu0 %v2748
    %6274 = vmatmul.mubr.bf16.gmra.mrb[0].mxu0 %v2747
    %v6275 = vpop.f32.mrb[0].mxu0
    %v6276 = vadd.f32 %v6235, %v6275
    %v6277 = vpop.f32.mrb[0].mxu0
    %v6278 = vpop.f32.mrb[0].mxu0
    %v6279 = vadd.f32 %v6238, %v6278
    %v6280 = vpop.f32.mrb[0].mxu0
    %6281 = vdwg.mxu0
    %v6282 = vtanh.pop %v5766
    %v6283 = vtanh.pop %v5768
    %v6284 = vtanh.pop %v5938
    %v6285 = vtanh.pop %v5940
    %v6286 = vtanh.pop %v6110
    %v6287 = vtanh.pop %v6112
    %v6288 = vtanh.pop %v6276
    %v6289 = vtanh.pop %v5770
    %v6290 = vtanh.pop %v5772
    %v6291 = vtanh.pop %v5942
    %v6292 = vtanh.pop %v5944
    %v6293 = vtanh.pop %v6114
    %v6294 = vtanh.pop %v6116
    %v6295 = vtanh.pop %v6279
    %v6296 = vpack.c.bf16 %v6289, %v6282
    %v6297 = vpack.c.bf16 %v6290, %v6283
    %v6298 = vpack.c.bf16 %v6291, %v6284
    %v6299 = vpack.c.bf16 %v6292, %v6285
    %v6300 = vpack.c.bf16 %v6293, %v6286
    %v6301 = vpack.c.bf16 %v6294, %v6287
    %v6302 = vpack.c.bf16 %v6295, %v6288
    %v6310 = vunpack.c.l.b16 %v6296
    %v6311 = vunpack.c.l.b16 %v6297
    %v6312 = vunpack.c.l.b16 %v6298
    %v6313 = vunpack.c.l.b16 %v6299
    %v6314 = vunpack.c.l.b16 %v6300
    %v6315 = vunpack.c.l.b16 %v6301
    %v6316 = vunpack.c.l.b16 %v6302
    %v6317 = vunpack.c.h.b16 %v6296
    %v6318 = vunpack.c.h.b16 %v6297
    %v6319 = vunpack.c.h.b16 %v6298
    %v6320 = vunpack.c.h.b16 %v6299
    %v6321 = vunpack.c.h.b16 %v6300
    %v6322 = vunpack.c.h.b16 %v6301
    %v6323 = vunpack.c.h.b16 %v6302
    %v6324 = vpack.c.b16 %v6311, %v6310
    %v6325 = vpack.c.b16 %v6313, %v6312
    %v6326 = vpack.c.b16 %v6315, %v6314
    %v6327 = vpack.c.b16 %v6316, %v6316
    %v6328 = vpack.c.b16 %v6318, %v6317
    %v6329 = vpack.c.b16 %v6320, %v6319
    %v6330 = vpack.c.b16 %v6322, %v6321
    %v6331 = vpack.c.b16 %v6323, %v6323
    %6340 = vst [vmem:[%s9] sm:$0xff] %v6324
    %6341 = vst [vmem:[%s9 + $0x8] sm:$0xff] %v6325
    %6342 = vst [vmem:[%s9 + $0x10] sm:$0xff] %v6326
    %6343 = vst [vmem:[%s9 + $0x18] sm:$0xf] %v6327
    %6344 = vst [vmem:[%s9 + $0x1c] sm:$0xff] %v6328
    %6345 = vst [vmem:[%s9 + $0x24] sm:$0xff] %v6329
    %6346 = vst [vmem:[%s9 + $0x2c] sm:$0xff] %v6330
    %6347 = vst [vmem:[%s9 + $0x34] sm:$0xf] %v6331
    // Predicated region
    $region70: #{generator_forward.1} parent=1 // pred_check
      _
    $region71: #{generator_forward.1} parent=1 // pred_check_branch
      %6349 = sbr.rel (0) target = $region73
    $region72: #{generator_forward.1} parent=1 // pred_region
      _
    $region73: #{generator_forward.1} parent=1 // pred_fallthru
      _
    // Predicated region
    $region74: #{generator_forward.1} parent=1 // pred_check
      _
    $region75: #{generator_forward.1} parent=1 // pred_check_branch
      %6351 = sbr.rel (0) target = $region77
    $region76: #{generator_forward.1} parent=1 // pred_region
      _
    $region77: #{generator_forward.1} parent=1 // pred_fallthru
      _
    %6352 = vsyncpa [#allocation3], 1
    %6353 = vsyncpa [#allocation5], 1
    %6354 = vsyncpa [#allocation8], 1
    %6355 = vsyncpa [#allocation11], 1
    %6356 = vsyncpa [#allocation14], 1

</llo_original>
